<compile_context>
chip_gen: v6e
topology: v6e:2x2x1
jax: 0.10.0
libtpu: 0.0.40
codegen_flags: <defaults>
</compile_context>

<pallas_src>
import functools
import math

import jax
import jax.numpy as jnp
from jax.experimental import pallas as pl
from jax.experimental.pallas import tpu as pltpu


# ----------------------------- fused kernel --------------------------------

def _layer_norm(h, gamma, beta, eps):
    # biased variance + eps inside rsqrt, like torch.nn.LayerNorm
    mean = jnp.mean(h, axis=-1, keepdims=True)
    var = jnp.mean((h - mean) ** 2, axis=-1, keepdims=True)
    return (h - mean) * jax.lax.rsqrt(var + eps) * gamma + beta


def fused_transformer_kernel(
    x_ref,                                   # (1, S, E) block: one batch element
    wq_ref, wk_ref, wv_ref,                  # (L, E, E) each, pre-transposed (In, Out)
    bq_ref, bk_ref, bv_ref,                  # (L, 1, E)
    wo_ref, bo_ref,                          # (L, E, E), (L, 1, E)
    ln1g_ref, ln1b_ref,                      # (L, 1, E)
    w1_ref, b1_ref,                          # (L, E, Hd), (L, 1, Hd)
    w2_ref, b2_ref,                          # (L, Hd, E), (L, 1, E)
    ln2g_ref, ln2b_ref,                      # (L, 1, E)
    fcw_ref, fcb_ref,                        # (E, O), (1, O)
    out_ref,                                 # (1, S, O) block
    *, num_layers, num_heads, eps,
):
    S, E = x_ref.shape[1], x_ref.shape[2]
    Dh = E // num_heads
    scale = 1.0 / math.sqrt(Dh)

    h = x_ref[0].astype(jnp.float32)                       # (S, E), VMEM-resident

    for l in range(num_layers):                            # static unroll (L=2)
        # ---- self-attention: fused-in-projection, per-head SDPA, out-proj ----
        q = jnp.dot(h, wq_ref[l], preferred_element_type=jnp.float32) + bq_ref[l]
        k = jnp.dot(h, wk_ref[l], preferred_element_type=jnp.float32) + bk_ref[l]
        v = jnp.dot(h, wv_ref[l], preferred_element_type=jnp.float32) + bv_ref[l]

        head_outs = []
        for hd in range(num_heads):                        # static unroll (H=3)
            lo, hi = hd * Dh, (hd + 1) * Dh
            qh = q[:, lo:hi] * scale                       # (S, Dh)
            kh = k[:, lo:hi]
            vh = v[:, lo:hi]
            s = jax.lax.dot_general(                       # q @ k^T  -> (S, S)
                qh, kh, (((1,), (1,)), ((), ())),
                preferred_element_type=jnp.float32)
            m = jnp.max(s, axis=-1, keepdims=True)
            p = jnp.exp(s - m)
            denom = jnp.sum(p, axis=-1, keepdims=True)
            a = p * pl.reciprocal(denom, approx=True)      # divide on EUP slot
            head_outs.append(
                jnp.dot(a, vh, preferred_element_type=jnp.float32))
        attn = jnp.concatenate(head_outs, axis=-1)         # (S, E), heads merged
        attn = jnp.dot(attn, wo_ref[l],
                       preferred_element_type=jnp.float32) + bo_ref[l]

        # TODO(synk): dropout(p=0.1) omitted (eval-mode identity)
        h = _layer_norm(h + attn, ln1g_ref[l], ln1b_ref[l], eps)

        # ---- feed-forward (ReLU) ----
        ff = jnp.dot(h, w1_ref[l], preferred_element_type=jnp.float32) + b1_ref[l]
        ff = jnp.maximum(ff, 0.0)
        ff = jnp.dot(ff, w2_ref[l], preferred_element_type=jnp.float32) + b2_ref[l]
        h = _layer_norm(h + ff, ln2g_ref[l], ln2b_ref[l], eps)

    # final Linear on this batch element's (S, E) slab
    out = jnp.dot(h, fcw_ref[...], preferred_element_type=jnp.float32) + fcb_ref[...]
    out_ref[0] = out.astype(out_ref.dtype)


# ----------------------------- wrapper --------------------------------------

def transformer_model(x_sne, params, num_heads, num_layers):
    """x_sne: (S, N, E) as in the PyTorch module (batch_first=False)."""
    S, N, E = x_sne.shape
    O = params["fcw"].shape[1]

    # single tiny transpose so each grid step owns one batch element
    x = jnp.transpose(x_sne, (1, 0, 2))                    # (N, S, E)

    ordered = [
        params["wq"], params["wk"], params["wv"],
        params["bq"], params["bk"], params["bv"],
        params["wo"], params["bo"],
        params["ln1g"], params["ln1b"],
        params["w1"], params["b1"], params["w2"], params["b2"],
        params["ln2g"], params["ln2b"],
        params["fcw"], params["fcb"],
    ]

    def const_spec(a):
        # full array, same block for every grid step -> stays VMEM-resident
        return pl.BlockSpec(a.shape, lambda n, _nd=a.ndim: (0,) * _nd)

    in_specs = [pl.BlockSpec((1, S, E), lambda n: (n, 0, 0))]
    in_specs += [const_spec(a) for a in ordered]
    out_spec = pl.BlockSpec((1, S, O), lambda n: (n, 0, 0))

    out_full = pl.pallas_call(
        functools.partial(fused_transformer_kernel,
                          num_layers=num_layers, num_heads=num_heads, eps=1e-5),
        grid=(N,),
        in_specs=in_specs,
        out_specs=out_spec,
        out_shape=jax.ShapeDtypeStruct((N, S, O), x.dtype),
        compiler_params=pltpu.CompilerParams(
            dimension_semantics=("parallel",)),            # 2 TCs on v7x split batches
    )(x, *ordered)

    # module does fc(x[:, -1, :]) -> last BATCH element's (S, E) slab
    return out_full[N - 1]                                 # (S, O)


# ----------------------------- param init ----------------------------------

def init_params(key, input_dim, hidden_dim, num_layers, output_dim):
    E, Hd, O, L = input_dim, hidden_dim, output_dim, num_layers

    def rand(k, shape, s=0.05):
        return jax.random.normal(k, shape, jnp.float32) * s

    keys = jax.random.split(key, 14)
    return dict(
        # weights stored pre-transposed (In, Out), stacked over layers
        wq=rand(keys[0], (L, E, E)),
        wk=rand(keys[1], (L, E, E)),
        wv=rand(keys[2], (L, E, E)),
        bq=rand(keys[3], (L, 1, E), 0.01),
        bk=rand(keys[4], (L, 1, E), 0.01),
        bv=rand(keys[5], (L, 1, E), 0.01),
        wo=rand(keys[6], (L, E, E)),
        bo=rand(keys[7], (L, 1, E), 0.01),
        ln1g=jnp.ones((L, 1, E), jnp.float32),
        ln1b=jnp.zeros((L, 1, E), jnp.float32),
        w1=rand(keys[8], (L, E, Hd)),
        b1=rand(keys[9], (L, 1, Hd), 0.01),
        w2=rand(keys[10], (L, Hd, E)),
        b2=rand(keys[11], (L, 1, E), 0.01),
        ln2g=jnp.ones((L, 1, E), jnp.float32),
        ln2b=jnp.zeros((L, 1, E), jnp.float32),
        fcw=rand(keys[12], (E, O)),
        fcb=rand(keys[13], (1, O), 0.01),
    )


# --------------------------------- main -------------------------------------

if __name__ == "__main__":
    # small shapes consistent with the module: num_heads=3 => embed dim % 3 == 0
    SEQ, BATCH = 8, 2
    INPUT_DIM, HIDDEN_DIM, OUTPUT_DIM = 24, 32, 4
    NUM_HEADS, NUM_LAYERS = 3, 2

    key = jax.random.PRNGKey(0)
    kx, kp = jax.random.split(key)
    x = jax.random.normal(kx, (SEQ, BATCH, INPUT_DIM), jnp.float32)   # (S, N, E)
    params = init_params(kp, INPUT_DIM, HIDDEN_DIM, NUM_LAYERS, OUTPUT_DIM)

    out = transformer_model(x, params, NUM_HEADS, NUM_LAYERS)
    out = jax.block_until_ready(out)
    assert out.shape == (SEQ, OUTPUT_DIM), out.shape
    print("KERNEL_OK")
</pallas_src>

<mosaic_0001>
module attributes {stable_mosaic.version = 11 : i64} {
  func.func @fused_transformer_kernel(%arg0: i32, %arg1: memref<1x8x24xf32, #tpu.memory_space<vmem>>, %arg2: memref<2x24x24xf32, #tpu.memory_space<vmem>>, %arg3: memref<2x24x24xf32, #tpu.memory_space<vmem>>, %arg4: memref<2x24x24xf32, #tpu.memory_space<vmem>>, %arg5: memref<2x1x24xf32, #tpu.memory_space<vmem>>, %arg6: memref<2x1x24xf32, #tpu.memory_space<vmem>>, %arg7: memref<2x1x24xf32, #tpu.memory_space<vmem>>, %arg8: memref<2x24x24xf32, #tpu.memory_space<vmem>>, %arg9: memref<2x1x24xf32, #tpu.memory_space<vmem>>, %arg10: memref<2x1x24xf32, #tpu.memory_space<vmem>>, %arg11: memref<2x1x24xf32, #tpu.memory_space<vmem>>, %arg12: memref<2x24x32xf32, #tpu.memory_space<vmem>>, %arg13: memref<2x1x32xf32, #tpu.memory_space<vmem>>, %arg14: memref<2x32x24xf32, #tpu.memory_space<vmem>>, %arg15: memref<2x1x24xf32, #tpu.memory_space<vmem>>, %arg16: memref<2x1x24xf32, #tpu.memory_space<vmem>>, %arg17: memref<2x1x24xf32, #tpu.memory_space<vmem>>, %arg18: memref<24x4xf32, #tpu.memory_space<vmem>>, %arg19: memref<1x4xf32, #tpu.memory_space<vmem>>, %arg20: memref<1x8x4xf32, #tpu.memory_space<vmem>>) attributes {dimension_semantics = [#tpu.dimension_semantics<parallel>], iteration_bounds = array<i64: 2>, scalar_prefetch = 0 : i64, scratch_operands = 0 : i64, tpu.core_type = #tpu.core_type<tc>, window_params = [{transform_indices = @transform_0, window_bounds = array<i64: 1, 8, 24>}, {pipeline_mode = #tpu.pipeline_mode<synchronous>, transform_indices = @transform_1, window_bounds = array<i64: 2, 24, 24>}, {pipeline_mode = #tpu.pipeline_mode<synchronous>, transform_indices = @transform_2, window_bounds = array<i64: 2, 24, 24>}, {pipeline_mode = #tpu.pipeline_mode<synchronous>, transform_indices = @transform_3, window_bounds = array<i64: 2, 24, 24>}, {pipeline_mode = #tpu.pipeline_mode<synchronous>, transform_indices = @transform_4, window_bounds = array<i64: 2, 1, 24>}, {pipeline_mode = #tpu.pipeline_mode<synchronous>, transform_indices = @transform_5, window_bounds = array<i64: 2, 1, 24>}, {pipeline_mode = #tpu.pipeline_mode<synchronous>, transform_indices = @transform_6, window_bounds = array<i64: 2, 1, 24>}, {pipeline_mode = #tpu.pipeline_mode<synchronous>, transform_indices = @transform_7, window_bounds = array<i64: 2, 24, 24>}, {pipeline_mode = #tpu.pipeline_mode<synchronous>, transform_indices = @transform_8, window_bounds = array<i64: 2, 1, 24>}, {pipeline_mode = #tpu.pipeline_mode<synchronous>, transform_indices = @transform_9, window_bounds = array<i64: 2, 1, 24>}, {pipeline_mode = #tpu.pipeline_mode<synchronous>, transform_indices = @transform_10, window_bounds = array<i64: 2, 1, 24>}, {pipeline_mode = #tpu.pipeline_mode<synchronous>, transform_indices = @transform_11, window_bounds = array<i64: 2, 24, 32>}, {pipeline_mode = #tpu.pipeline_mode<synchronous>, transform_indices = @transform_12, window_bounds = array<i64: 2, 1, 32>}, {pipeline_mode = #tpu.pipeline_mode<synchronous>, transform_indices = @transform_13, window_bounds = array<i64: 2, 32, 24>}, {pipeline_mode = #tpu.pipeline_mode<synchronous>, transform_indices = @transform_14, window_bounds = array<i64: 2, 1, 24>}, {pipeline_mode = #tpu.pipeline_mode<synchronous>, transform_indices = @transform_15, window_bounds = array<i64: 2, 1, 24>}, {pipeline_mode = #tpu.pipeline_mode<synchronous>, transform_indices = @transform_16, window_bounds = array<i64: 2, 1, 24>}, {pipeline_mode = #tpu.pipeline_mode<synchronous>, transform_indices = @transform_17, window_bounds = array<i64: 24, 4>}, {pipeline_mode = #tpu.pipeline_mode<synchronous>, transform_indices = @transform_18, window_bounds = array<i64: 1, 4>}, {transform_indices = @transform_19, window_bounds = array<i64: 1, 8, 4>}]} {
    %c0 = arith.constant 0 : index
    %c0_0 = arith.constant 0 : index
    %c0_1 = arith.constant 0 : index
    %0 = vector.load %arg1[%c0, %c0_0, %c0_1] : memref<1x8x24xf32, #tpu.memory_space<vmem>>, vector<1x8x24xf32>
    %1 = vector.shape_cast %0 : vector<1x8x24xf32> to vector<8x24xf32>
    %c0_2 = arith.constant 0 : index
    %c0_3 = arith.constant 0 : index
    %c0_4 = arith.constant 0 : index
    %2 = vector.load %arg2[%c0_2, %c0_3, %c0_4] : memref<2x24x24xf32, #tpu.memory_space<vmem>>, vector<1x24x24xf32>
    %3 = vector.shape_cast %2 : vector<1x24x24xf32> to vector<24x24xf32>
    %cst = arith.constant dense<0.000000e+00> : vector<8x24xf32>
    %4 = tpu.matmul %1, %3, %cst {dimension_numbers = #tpu.dot_dimension_numbers<[1], [0], [0], [1], [0, 0, 1, 1], [], []>} : vector<8x24xf32>, vector<24x24xf32>, vector<8x24xf32> -> vector<8x24xf32>
    %c0_5 = arith.constant 0 : index
    %c0_6 = arith.constant 0 : index
    %c0_7 = arith.constant 0 : index
    %5 = vector.load %arg5[%c0_5, %c0_6, %c0_7] : memref<2x1x24xf32, #tpu.memory_space<vmem>>, vector<1x1x24xf32>
    %6 = vector.shape_cast %5 : vector<1x1x24xf32> to vector<1x24xf32>
    %7 = vector.broadcast %6 : vector<1x24xf32> to vector<8x24xf32>
    %8 = arith.addf %4, %7 : vector<8x24xf32>
    %c0_8 = arith.constant 0 : index
    %c0_9 = arith.constant 0 : index
    %c0_10 = arith.constant 0 : index
    %9 = vector.load %arg3[%c0_8, %c0_9, %c0_10] : memref<2x24x24xf32, #tpu.memory_space<vmem>>, vector<1x24x24xf32>
    %10 = vector.shape_cast %9 : vector<1x24x24xf32> to vector<24x24xf32>
    %cst_11 = arith.constant dense<0.000000e+00> : vector<8x24xf32>
    %11 = tpu.matmul %1, %10, %cst_11 {dimension_numbers = #tpu.dot_dimension_numbers<[1], [0], [0], [1], [0, 0, 1, 1], [], []>} : vector<8x24xf32>, vector<24x24xf32>, vector<8x24xf32> -> vector<8x24xf32>
    %c0_12 = arith.constant 0 : index
    %c0_13 = arith.constant 0 : index
    %c0_14 = arith.constant 0 : index
    %12 = vector.load %arg6[%c0_12, %c0_13, %c0_14] : memref<2x1x24xf32, #tpu.memory_space<vmem>>, vector<1x1x24xf32>
    %13 = vector.shape_cast %12 : vector<1x1x24xf32> to vector<1x24xf32>
    %14 = vector.broadcast %13 : vector<1x24xf32> to vector<8x24xf32>
    %15 = arith.addf %11, %14 : vector<8x24xf32>
    %c0_15 = arith.constant 0 : index
    %c0_16 = arith.constant 0 : index
    %c0_17 = arith.constant 0 : index
    %16 = vector.load %arg4[%c0_15, %c0_16, %c0_17] : memref<2x24x24xf32, #tpu.memory_space<vmem>>, vector<1x24x24xf32>
    %17 = vector.shape_cast %16 : vector<1x24x24xf32> to vector<24x24xf32>
    %cst_18 = arith.constant dense<0.000000e+00> : vector<8x24xf32>
    %18 = tpu.matmul %1, %17, %cst_18 {dimension_numbers = #tpu.dot_dimension_numbers<[1], [0], [0], [1], [0, 0, 1, 1], [], []>} : vector<8x24xf32>, vector<24x24xf32>, vector<8x24xf32> -> vector<8x24xf32>
    %c0_19 = arith.constant 0 : index
    %c0_20 = arith.constant 0 : index
    %c0_21 = arith.constant 0 : index
    %19 = vector.load %arg7[%c0_19, %c0_20, %c0_21] : memref<2x1x24xf32, #tpu.memory_space<vmem>>, vector<1x1x24xf32>
    %20 = vector.shape_cast %19 : vector<1x1x24xf32> to vector<1x24xf32>
    %21 = vector.broadcast %20 : vector<1x24xf32> to vector<8x24xf32>
    %22 = arith.addf %18, %21 : vector<8x24xf32>
    %23 = vector.extract_strided_slice %8 {offsets = [0, 0], sizes = [8, 8], strides = [1, 1]} : vector<8x24xf32> to vector<8x8xf32>
    %cst_22 = arith.constant 0.353553385 : f32
    %24 = vector.broadcast %cst_22 : f32 to vector<8x8xf32>
    %25 = arith.mulf %23, %24 : vector<8x8xf32>
    %26 = vector.extract_strided_slice %15 {offsets = [0, 0], sizes = [8, 8], strides = [1, 1]} : vector<8x24xf32> to vector<8x8xf32>
    %27 = vector.extract_strided_slice %22 {offsets = [0, 0], sizes = [8, 8], strides = [1, 1]} : vector<8x24xf32> to vector<8x8xf32>
    %cst_23 = arith.constant dense<0.000000e+00> : vector<8x8xf32>
    %28 = tpu.matmul %25, %26, %cst_23 {dimension_numbers = #tpu.dot_dimension_numbers<[1], [1], [0], [0], [0, 0, 1, 0], [], []>} : vector<8x8xf32>, vector<8x8xf32>, vector<8x8xf32> -> vector<8x8xf32>
    %cst_24 = arith.constant dense<0xFF800000> : vector<8xf32>
    %29 = vector.multi_reduction <maximumf>, %28, %cst_24 [1] : vector<8x8xf32> to vector<8xf32>
    %30 = vector.shape_cast %29 : vector<8xf32> to vector<8x1xf32>
    %31 = vector.broadcast %30 : vector<8x1xf32> to vector<8x8xf32>
    %32 = arith.subf %28, %31 : vector<8x8xf32>
    %33 = math.exp %32 : vector<8x8xf32>
    %cst_25 = arith.constant dense<0.000000e+00> : vector<8xf32>
    %34 = vector.multi_reduction <add>, %33, %cst_25 [1] : vector<8x8xf32> to vector<8xf32>
    %35 = vector.shape_cast %34 : vector<8xf32> to vector<8x1xf32>
    %36 = tpu.reciprocal %35 {approx = true} : vector<8x1xf32> -> vector<8x1xf32>
    %37 = vector.broadcast %36 : vector<8x1xf32> to vector<8x8xf32>
    %38 = arith.mulf %33, %37 : vector<8x8xf32>
    %cst_26 = arith.constant dense<0.000000e+00> : vector<8x8xf32>
    %39 = tpu.matmul %38, %27, %cst_26 {dimension_numbers = #tpu.dot_dimension_numbers<[1], [0], [0], [1], [0, 0, 1, 1], [], []>} : vector<8x8xf32>, vector<8x8xf32>, vector<8x8xf32> -> vector<8x8xf32>
    %40 = vector.extract_strided_slice %8 {offsets = [0, 8], sizes = [8, 8], strides = [1, 1]} : vector<8x24xf32> to vector<8x8xf32>
    %cst_27 = arith.constant 0.353553385 : f32
    %41 = vector.broadcast %cst_27 : f32 to vector<8x8xf32>
    %42 = arith.mulf %40, %41 : vector<8x8xf32>
    %43 = vector.extract_strided_slice %15 {offsets = [0, 8], sizes = [8, 8], strides = [1, 1]} : vector<8x24xf32> to vector<8x8xf32>
    %44 = vector.extract_strided_slice %22 {offsets = [0, 8], sizes = [8, 8], strides = [1, 1]} : vector<8x24xf32> to vector<8x8xf32>
    %cst_28 = arith.constant dense<0.000000e+00> : vector<8x8xf32>
    %45 = tpu.matmul %42, %43, %cst_28 {dimension_numbers = #tpu.dot_dimension_numbers<[1], [1], [0], [0], [0, 0, 1, 0], [], []>} : vector<8x8xf32>, vector<8x8xf32>, vector<8x8xf32> -> vector<8x8xf32>
    %cst_29 = arith.constant dense<0xFF800000> : vector<8xf32>
    %46 = vector.multi_reduction <maximumf>, %45, %cst_29 [1] : vector<8x8xf32> to vector<8xf32>
    %47 = vector.shape_cast %46 : vector<8xf32> to vector<8x1xf32>
    %48 = vector.broadcast %47 : vector<8x1xf32> to vector<8x8xf32>
    %49 = arith.subf %45, %48 : vector<8x8xf32>
    %50 = math.exp %49 : vector<8x8xf32>
    %cst_30 = arith.constant dense<0.000000e+00> : vector<8xf32>
    %51 = vector.multi_reduction <add>, %50, %cst_30 [1] : vector<8x8xf32> to vector<8xf32>
    %52 = vector.shape_cast %51 : vector<8xf32> to vector<8x1xf32>
    %53 = tpu.reciprocal %52 {approx = true} : vector<8x1xf32> -> vector<8x1xf32>
    %54 = vector.broadcast %53 : vector<8x1xf32> to vector<8x8xf32>
    %55 = arith.mulf %50, %54 : vector<8x8xf32>
    %cst_31 = arith.constant dense<0.000000e+00> : vector<8x8xf32>
    %56 = tpu.matmul %55, %44, %cst_31 {dimension_numbers = #tpu.dot_dimension_numbers<[1], [0], [0], [1], [0, 0, 1, 1], [], []>} : vector<8x8xf32>, vector<8x8xf32>, vector<8x8xf32> -> vector<8x8xf32>
    %57 = vector.extract_strided_slice %8 {offsets = [0, 16], sizes = [8, 8], strides = [1, 1]} : vector<8x24xf32> to vector<8x8xf32>
    %cst_32 = arith.constant 0.353553385 : f32
    %58 = vector.broadcast %cst_32 : f32 to vector<8x8xf32>
    %59 = arith.mulf %57, %58 : vector<8x8xf32>
    %60 = vector.extract_strided_slice %15 {offsets = [0, 16], sizes = [8, 8], strides = [1, 1]} : vector<8x24xf32> to vector<8x8xf32>
    %61 = vector.extract_strided_slice %22 {offsets = [0, 16], sizes = [8, 8], strides = [1, 1]} : vector<8x24xf32> to vector<8x8xf32>
    %cst_33 = arith.constant dense<0.000000e+00> : vector<8x8xf32>
    %62 = tpu.matmul %59, %60, %cst_33 {dimension_numbers = #tpu.dot_dimension_numbers<[1], [1], [0], [0], [0, 0, 1, 0], [], []>} : vector<8x8xf32>, vector<8x8xf32>, vector<8x8xf32> -> vector<8x8xf32>
    %cst_34 = arith.constant dense<0xFF800000> : vector<8xf32>
    %63 = vector.multi_reduction <maximumf>, %62, %cst_34 [1] : vector<8x8xf32> to vector<8xf32>
    %64 = vector.shape_cast %63 : vector<8xf32> to vector<8x1xf32>
    %65 = vector.broadcast %64 : vector<8x1xf32> to vector<8x8xf32>
    %66 = arith.subf %62, %65 : vector<8x8xf32>
    %67 = math.exp %66 : vector<8x8xf32>
    %cst_35 = arith.constant dense<0.000000e+00> : vector<8xf32>
    %68 = vector.multi_reduction <add>, %67, %cst_35 [1] : vector<8x8xf32> to vector<8xf32>
    %69 = vector.shape_cast %68 : vector<8xf32> to vector<8x1xf32>
    %70 = tpu.reciprocal %69 {approx = true} : vector<8x1xf32> -> vector<8x1xf32>
    %71 = vector.broadcast %70 : vector<8x1xf32> to vector<8x8xf32>
    %72 = arith.mulf %67, %71 : vector<8x8xf32>
    %cst_36 = arith.constant dense<0.000000e+00> : vector<8x8xf32>
    %73 = tpu.matmul %72, %61, %cst_36 {dimension_numbers = #tpu.dot_dimension_numbers<[1], [0], [0], [1], [0, 0, 1, 1], [], []>} : vector<8x8xf32>, vector<8x8xf32>, vector<8x8xf32> -> vector<8x8xf32>
    %74 = tpu.concatenate %39, %56, %73 in 1 : vector<8x8xf32>, vector<8x8xf32>, vector<8x8xf32> -> vector<8x24xf32>
    %c0_37 = arith.constant 0 : index
    %c0_38 = arith.constant 0 : index
    %c0_39 = arith.constant 0 : index
    %75 = vector.load %arg8[%c0_37, %c0_38, %c0_39] : memref<2x24x24xf32, #tpu.memory_space<vmem>>, vector<1x24x24xf32>
    %76 = vector.shape_cast %75 : vector<1x24x24xf32> to vector<24x24xf32>
    %cst_40 = arith.constant dense<0.000000e+00> : vector<8x24xf32>
    %77 = tpu.matmul %74, %76, %cst_40 {dimension_numbers = #tpu.dot_dimension_numbers<[1], [0], [0], [1], [0, 0, 1, 1], [], []>} : vector<8x24xf32>, vector<24x24xf32>, vector<8x24xf32> -> vector<8x24xf32>
    %c0_41 = arith.constant 0 : index
    %c0_42 = arith.constant 0 : index
    %c0_43 = arith.constant 0 : index
    %78 = vector.load %arg9[%c0_41, %c0_42, %c0_43] : memref<2x1x24xf32, #tpu.memory_space<vmem>>, vector<1x1x24xf32>
    %79 = vector.shape_cast %78 : vector<1x1x24xf32> to vector<1x24xf32>
    %80 = vector.broadcast %79 : vector<1x24xf32> to vector<8x24xf32>
    %81 = arith.addf %77, %80 : vector<8x24xf32>
    %82 = arith.addf %1, %81 : vector<8x24xf32>
    %c0_44 = arith.constant 0 : index
    %c0_45 = arith.constant 0 : index
    %c0_46 = arith.constant 0 : index
    %83 = vector.load %arg10[%c0_44, %c0_45, %c0_46] : memref<2x1x24xf32, #tpu.memory_space<vmem>>, vector<1x1x24xf32>
    %84 = vector.shape_cast %83 : vector<1x1x24xf32> to vector<1x24xf32>
    %c0_47 = arith.constant 0 : index
    %c0_48 = arith.constant 0 : index
    %c0_49 = arith.constant 0 : index
    %85 = vector.load %arg11[%c0_47, %c0_48, %c0_49] : memref<2x1x24xf32, #tpu.memory_space<vmem>>, vector<1x1x24xf32>
    %86 = vector.shape_cast %85 : vector<1x1x24xf32> to vector<1x24xf32>
    %cst_50 = arith.constant dense<0.000000e+00> : vector<8xf32>
    %87 = vector.multi_reduction <add>, %82, %cst_50 [1] : vector<8x24xf32> to vector<8xf32>
    %88 = vector.shape_cast %87 : vector<8xf32> to vector<8x1xf32>
    %cst_51 = arith.constant 2.400000e+01 : f32
    %89 = vector.broadcast %cst_51 : f32 to vector<8x1xf32>
    %90 = arith.divf %88, %89 : vector<8x1xf32>
    %91 = vector.broadcast %90 : vector<8x1xf32> to vector<8x24xf32>
    %92 = arith.subf %82, %91 : vector<8x24xf32>
    %93 = arith.mulf %92, %92 : vector<8x24xf32>
    %cst_52 = arith.constant dense<0.000000e+00> : vector<8xf32>
    %94 = vector.multi_reduction <add>, %93, %cst_52 [1] : vector<8x24xf32> to vector<8xf32>
    %95 = vector.shape_cast %94 : vector<8xf32> to vector<8x1xf32>
    %cst_53 = arith.constant 2.400000e+01 : f32
    %96 = vector.broadcast %cst_53 : f32 to vector<8x1xf32>
    %97 = arith.divf %95, %96 : vector<8x1xf32>
    %98 = vector.broadcast %90 : vector<8x1xf32> to vector<8x24xf32>
    %99 = arith.subf %82, %98 : vector<8x24xf32>
    %cst_54 = arith.constant 9.99999974E-6 : f32
    %100 = vector.broadcast %cst_54 : f32 to vector<8x1xf32>
    %101 = arith.addf %97, %100 : vector<8x1xf32>
    %102 = math.rsqrt %101 : vector<8x1xf32>
    %103 = vector.broadcast %102 : vector<8x1xf32> to vector<8x24xf32>
    %104 = arith.mulf %99, %103 : vector<8x24xf32>
    %105 = vector.broadcast %84 : vector<1x24xf32> to vector<8x24xf32>
    %106 = arith.mulf %104, %105 : vector<8x24xf32>
    %107 = vector.broadcast %86 : vector<1x24xf32> to vector<8x24xf32>
    %108 = arith.addf %106, %107 : vector<8x24xf32>
    %c0_55 = arith.constant 0 : index
    %c0_56 = arith.constant 0 : index
    %c0_57 = arith.constant 0 : index
    %109 = vector.load %arg12[%c0_55, %c0_56, %c0_57] : memref<2x24x32xf32, #tpu.memory_space<vmem>>, vector<1x24x32xf32>
    %110 = vector.shape_cast %109 : vector<1x24x32xf32> to vector<24x32xf32>
    %cst_58 = arith.constant dense<0.000000e+00> : vector<8x32xf32>
    %111 = tpu.matmul %108, %110, %cst_58 {dimension_numbers = #tpu.dot_dimension_numbers<[1], [0], [0], [1], [0, 0, 1, 1], [], []>} : vector<8x24xf32>, vector<24x32xf32>, vector<8x32xf32> -> vector<8x32xf32>
    %c0_59 = arith.constant 0 : index
    %c0_60 = arith.constant 0 : index
    %c0_61 = arith.constant 0 : index
    %112 = vector.load %arg13[%c0_59, %c0_60, %c0_61] : memref<2x1x32xf32, #tpu.memory_space<vmem>>, vector<1x1x32xf32>
    %113 = vector.shape_cast %112 : vector<1x1x32xf32> to vector<1x32xf32>
    %114 = vector.broadcast %113 : vector<1x32xf32> to vector<8x32xf32>
    %115 = arith.addf %111, %114 : vector<8x32xf32>
    %cst_62 = arith.constant 0.000000e+00 : f32
    %116 = vector.broadcast %cst_62 : f32 to vector<8x32xf32>
    %117 = arith.maximumf %115, %116 : vector<8x32xf32>
    %c0_63 = arith.constant 0 : index
    %c0_64 = arith.constant 0 : index
    %c0_65 = arith.constant 0 : index
    %118 = vector.load %arg14[%c0_63, %c0_64, %c0_65] : memref<2x32x24xf32, #tpu.memory_space<vmem>>, vector<1x32x24xf32>
    %119 = vector.shape_cast %118 : vector<1x32x24xf32> to vector<32x24xf32>
    %cst_66 = arith.constant dense<0.000000e+00> : vector<8x24xf32>
    %120 = tpu.matmul %117, %119, %cst_66 {dimension_numbers = #tpu.dot_dimension_numbers<[1], [0], [0], [1], [0, 0, 1, 1], [], []>} : vector<8x32xf32>, vector<32x24xf32>, vector<8x24xf32> -> vector<8x24xf32>
    %c0_67 = arith.constant 0 : index
    %c0_68 = arith.constant 0 : index
    %c0_69 = arith.constant 0 : index
    %121 = vector.load %arg15[%c0_67, %c0_68, %c0_69] : memref<2x1x24xf32, #tpu.memory_space<vmem>>, vector<1x1x24xf32>
    %122 = vector.shape_cast %121 : vector<1x1x24xf32> to vector<1x24xf32>
    %123 = vector.broadcast %122 : vector<1x24xf32> to vector<8x24xf32>
    %124 = arith.addf %120, %123 : vector<8x24xf32>
    %125 = arith.addf %108, %124 : vector<8x24xf32>
    %c0_70 = arith.constant 0 : index
    %c0_71 = arith.constant 0 : index
    %c0_72 = arith.constant 0 : index
    %126 = vector.load %arg16[%c0_70, %c0_71, %c0_72] : memref<2x1x24xf32, #tpu.memory_space<vmem>>, vector<1x1x24xf32>
    %127 = vector.shape_cast %126 : vector<1x1x24xf32> to vector<1x24xf32>
    %c0_73 = arith.constant 0 : index
    %c0_74 = arith.constant 0 : index
    %c0_75 = arith.constant 0 : index
    %128 = vector.load %arg17[%c0_73, %c0_74, %c0_75] : memref<2x1x24xf32, #tpu.memory_space<vmem>>, vector<1x1x24xf32>
    %129 = vector.shape_cast %128 : vector<1x1x24xf32> to vector<1x24xf32>
    %cst_76 = arith.constant dense<0.000000e+00> : vector<8xf32>
    %130 = vector.multi_reduction <add>, %125, %cst_76 [1] : vector<8x24xf32> to vector<8xf32>
    %131 = vector.shape_cast %130 : vector<8xf32> to vector<8x1xf32>
    %cst_77 = arith.constant 2.400000e+01 : f32
    %132 = vector.broadcast %cst_77 : f32 to vector<8x1xf32>
    %133 = arith.divf %131, %132 : vector<8x1xf32>
    %134 = vector.broadcast %133 : vector<8x1xf32> to vector<8x24xf32>
    %135 = arith.subf %125, %134 : vector<8x24xf32>
    %136 = arith.mulf %135, %135 : vector<8x24xf32>
    %cst_78 = arith.constant dense<0.000000e+00> : vector<8xf32>
    %137 = vector.multi_reduction <add>, %136, %cst_78 [1] : vector<8x24xf32> to vector<8xf32>
    %138 = vector.shape_cast %137 : vector<8xf32> to vector<8x1xf32>
    %cst_79 = arith.constant 2.400000e+01 : f32
    %139 = vector.broadcast %cst_79 : f32 to vector<8x1xf32>
    %140 = arith.divf %138, %139 : vector<8x1xf32>
    %141 = vector.broadcast %133 : vector<8x1xf32> to vector<8x24xf32>
    %142 = arith.subf %125, %141 : vector<8x24xf32>
    %cst_80 = arith.constant 9.99999974E-6 : f32
    %143 = vector.broadcast %cst_80 : f32 to vector<8x1xf32>
    %144 = arith.addf %140, %143 : vector<8x1xf32>
    %145 = math.rsqrt %144 : vector<8x1xf32>
    %146 = vector.broadcast %145 : vector<8x1xf32> to vector<8x24xf32>
    %147 = arith.mulf %142, %146 : vector<8x24xf32>
    %148 = vector.broadcast %127 : vector<1x24xf32> to vector<8x24xf32>
    %149 = arith.mulf %147, %148 : vector<8x24xf32>
    %150 = vector.broadcast %129 : vector<1x24xf32> to vector<8x24xf32>
    %151 = arith.addf %149, %150 : vector<8x24xf32>
    %c1 = arith.constant 1 : index
    %c0_81 = arith.constant 0 : index
    %c0_82 = arith.constant 0 : index
    %152 = vector.load %arg2[%c1, %c0_81, %c0_82] : memref<2x24x24xf32, #tpu.memory_space<vmem>>, vector<1x24x24xf32>
    %153 = vector.shape_cast %152 : vector<1x24x24xf32> to vector<24x24xf32>
    %cst_83 = arith.constant dense<0.000000e+00> : vector<8x24xf32>
    %154 = tpu.matmul %151, %153, %cst_83 {dimension_numbers = #tpu.dot_dimension_numbers<[1], [0], [0], [1], [0, 0, 1, 1], [], []>} : vector<8x24xf32>, vector<24x24xf32>, vector<8x24xf32> -> vector<8x24xf32>
    %c1_84 = arith.constant 1 : index
    %c0_85 = arith.constant 0 : index
    %c0_86 = arith.constant 0 : index
    %155 = vector.load %arg5[%c1_84, %c0_85, %c0_86] : memref<2x1x24xf32, #tpu.memory_space<vmem>>, vector<1x1x24xf32>
    %156 = vector.shape_cast %155 : vector<1x1x24xf32> to vector<1x24xf32>
    %157 = vector.broadcast %156 : vector<1x24xf32> to vector<8x24xf32>
    %158 = arith.addf %154, %157 : vector<8x24xf32>
    %c1_87 = arith.constant 1 : index
    %c0_88 = arith.constant 0 : index
    %c0_89 = arith.constant 0 : index
    %159 = vector.load %arg3[%c1_87, %c0_88, %c0_89] : memref<2x24x24xf32, #tpu.memory_space<vmem>>, vector<1x24x24xf32>
    %160 = vector.shape_cast %159 : vector<1x24x24xf32> to vector<24x24xf32>
    %cst_90 = arith.constant dense<0.000000e+00> : vector<8x24xf32>
    %161 = tpu.matmul %151, %160, %cst_90 {dimension_numbers = #tpu.dot_dimension_numbers<[1], [0], [0], [1], [0, 0, 1, 1], [], []>} : vector<8x24xf32>, vector<24x24xf32>, vector<8x24xf32> -> vector<8x24xf32>
    %c1_91 = arith.constant 1 : index
    %c0_92 = arith.constant 0 : index
    %c0_93 = arith.constant 0 : index
    %162 = vector.load %arg6[%c1_91, %c0_92, %c0_93] : memref<2x1x24xf32, #tpu.memory_space<vmem>>, vector<1x1x24xf32>
    %163 = vector.shape_cast %162 : vector<1x1x24xf32> to vector<1x24xf32>
    %164 = vector.broadcast %163 : vector<1x24xf32> to vector<8x24xf32>
    %165 = arith.addf %161, %164 : vector<8x24xf32>
    %c1_94 = arith.constant 1 : index
    %c0_95 = arith.constant 0 : index
    %c0_96 = arith.constant 0 : index
    %166 = vector.load %arg4[%c1_94, %c0_95, %c0_96] : memref<2x24x24xf32, #tpu.memory_space<vmem>>, vector<1x24x24xf32>
    %167 = vector.shape_cast %166 : vector<1x24x24xf32> to vector<24x24xf32>
    %cst_97 = arith.constant dense<0.000000e+00> : vector<8x24xf32>
    %168 = tpu.matmul %151, %167, %cst_97 {dimension_numbers = #tpu.dot_dimension_numbers<[1], [0], [0], [1], [0, 0, 1, 1], [], []>} : vector<8x24xf32>, vector<24x24xf32>, vector<8x24xf32> -> vector<8x24xf32>
    %c1_98 = arith.constant 1 : index
    %c0_99 = arith.constant 0 : index
    %c0_100 = arith.constant 0 : index
    %169 = vector.load %arg7[%c1_98, %c0_99, %c0_100] : memref<2x1x24xf32, #tpu.memory_space<vmem>>, vector<1x1x24xf32>
    %170 = vector.shape_cast %169 : vector<1x1x24xf32> to vector<1x24xf32>
    %171 = vector.broadcast %170 : vector<1x24xf32> to vector<8x24xf32>
    %172 = arith.addf %168, %171 : vector<8x24xf32>
    %173 = vector.extract_strided_slice %158 {offsets = [0, 0], sizes = [8, 8], strides = [1, 1]} : vector<8x24xf32> to vector<8x8xf32>
    %cst_101 = arith.constant 0.353553385 : f32
    %174 = vector.broadcast %cst_101 : f32 to vector<8x8xf32>
    %175 = arith.mulf %173, %174 : vector<8x8xf32>
    %176 = vector.extract_strided_slice %165 {offsets = [0, 0], sizes = [8, 8], strides = [1, 1]} : vector<8x24xf32> to vector<8x8xf32>
    %177 = vector.extract_strided_slice %172 {offsets = [0, 0], sizes = [8, 8], strides = [1, 1]} : vector<8x24xf32> to vector<8x8xf32>
    %cst_102 = arith.constant dense<0.000000e+00> : vector<8x8xf32>
    %178 = tpu.matmul %175, %176, %cst_102 {dimension_numbers = #tpu.dot_dimension_numbers<[1], [1], [0], [0], [0, 0, 1, 0], [], []>} : vector<8x8xf32>, vector<8x8xf32>, vector<8x8xf32> -> vector<8x8xf32>
    %cst_103 = arith.constant dense<0xFF800000> : vector<8xf32>
    %179 = vector.multi_reduction <maximumf>, %178, %cst_103 [1] : vector<8x8xf32> to vector<8xf32>
    %180 = vector.shape_cast %179 : vector<8xf32> to vector<8x1xf32>
    %181 = vector.broadcast %180 : vector<8x1xf32> to vector<8x8xf32>
    %182 = arith.subf %178, %181 : vector<8x8xf32>
    %183 = math.exp %182 : vector<8x8xf32>
    %cst_104 = arith.constant dense<0.000000e+00> : vector<8xf32>
    %184 = vector.multi_reduction <add>, %183, %cst_104 [1] : vector<8x8xf32> to vector<8xf32>
    %185 = vector.shape_cast %184 : vector<8xf32> to vector<8x1xf32>
    %186 = tpu.reciprocal %185 {approx = true} : vector<8x1xf32> -> vector<8x1xf32>
    %187 = vector.broadcast %186 : vector<8x1xf32> to vector<8x8xf32>
    %188 = arith.mulf %183, %187 : vector<8x8xf32>
    %cst_105 = arith.constant dense<0.000000e+00> : vector<8x8xf32>
    %189 = tpu.matmul %188, %177, %cst_105 {dimension_numbers = #tpu.dot_dimension_numbers<[1], [0], [0], [1], [0, 0, 1, 1], [], []>} : vector<8x8xf32>, vector<8x8xf32>, vector<8x8xf32> -> vector<8x8xf32>
    %190 = vector.extract_strided_slice %158 {offsets = [0, 8], sizes = [8, 8], strides = [1, 1]} : vector<8x24xf32> to vector<8x8xf32>
    %cst_106 = arith.constant 0.353553385 : f32
    %191 = vector.broadcast %cst_106 : f32 to vector<8x8xf32>
    %192 = arith.mulf %190, %191 : vector<8x8xf32>
    %193 = vector.extract_strided_slice %165 {offsets = [0, 8], sizes = [8, 8], strides = [1, 1]} : vector<8x24xf32> to vector<8x8xf32>
    %194 = vector.extract_strided_slice %172 {offsets = [0, 8], sizes = [8, 8], strides = [1, 1]} : vector<8x24xf32> to vector<8x8xf32>
    %cst_107 = arith.constant dense<0.000000e+00> : vector<8x8xf32>
    %195 = tpu.matmul %192, %193, %cst_107 {dimension_numbers = #tpu.dot_dimension_numbers<[1], [1], [0], [0], [0, 0, 1, 0], [], []>} : vector<8x8xf32>, vector<8x8xf32>, vector<8x8xf32> -> vector<8x8xf32>
    %cst_108 = arith.constant dense<0xFF800000> : vector<8xf32>
    %196 = vector.multi_reduction <maximumf>, %195, %cst_108 [1] : vector<8x8xf32> to vector<8xf32>
    %197 = vector.shape_cast %196 : vector<8xf32> to vector<8x1xf32>
    %198 = vector.broadcast %197 : vector<8x1xf32> to vector<8x8xf32>
    %199 = arith.subf %195, %198 : vector<8x8xf32>
    %200 = math.exp %199 : vector<8x8xf32>
    %cst_109 = arith.constant dense<0.000000e+00> : vector<8xf32>
    %201 = vector.multi_reduction <add>, %200, %cst_109 [1] : vector<8x8xf32> to vector<8xf32>
    %202 = vector.shape_cast %201 : vector<8xf32> to vector<8x1xf32>
    %203 = tpu.reciprocal %202 {approx = true} : vector<8x1xf32> -> vector<8x1xf32>
    %204 = vector.broadcast %203 : vector<8x1xf32> to vector<8x8xf32>
    %205 = arith.mulf %200, %204 : vector<8x8xf32>
    %cst_110 = arith.constant dense<0.000000e+00> : vector<8x8xf32>
    %206 = tpu.matmul %205, %194, %cst_110 {dimension_numbers = #tpu.dot_dimension_numbers<[1], [0], [0], [1], [0, 0, 1, 1], [], []>} : vector<8x8xf32>, vector<8x8xf32>, vector<8x8xf32> -> vector<8x8xf32>
    %207 = vector.extract_strided_slice %158 {offsets = [0, 16], sizes = [8, 8], strides = [1, 1]} : vector<8x24xf32> to vector<8x8xf32>
    %cst_111 = arith.constant 0.353553385 : f32
    %208 = vector.broadcast %cst_111 : f32 to vector<8x8xf32>
    %209 = arith.mulf %207, %208 : vector<8x8xf32>
    %210 = vector.extract_strided_slice %165 {offsets = [0, 16], sizes = [8, 8], strides = [1, 1]} : vector<8x24xf32> to vector<8x8xf32>
    %211 = vector.extract_strided_slice %172 {offsets = [0, 16], sizes = [8, 8], strides = [1, 1]} : vector<8x24xf32> to vector<8x8xf32>
    %cst_112 = arith.constant dense<0.000000e+00> : vector<8x8xf32>
    %212 = tpu.matmul %209, %210, %cst_112 {dimension_numbers = #tpu.dot_dimension_numbers<[1], [1], [0], [0], [0, 0, 1, 0], [], []>} : vector<8x8xf32>, vector<8x8xf32>, vector<8x8xf32> -> vector<8x8xf32>
    %cst_113 = arith.constant dense<0xFF800000> : vector<8xf32>
    %213 = vector.multi_reduction <maximumf>, %212, %cst_113 [1] : vector<8x8xf32> to vector<8xf32>
    %214 = vector.shape_cast %213 : vector<8xf32> to vector<8x1xf32>
    %215 = vector.broadcast %214 : vector<8x1xf32> to vector<8x8xf32>
    %216 = arith.subf %212, %215 : vector<8x8xf32>
    %217 = math.exp %216 : vector<8x8xf32>
    %cst_114 = arith.constant dense<0.000000e+00> : vector<8xf32>
    %218 = vector.multi_reduction <add>, %217, %cst_114 [1] : vector<8x8xf32> to vector<8xf32>
    %219 = vector.shape_cast %218 : vector<8xf32> to vector<8x1xf32>
    %220 = tpu.reciprocal %219 {approx = true} : vector<8x1xf32> -> vector<8x1xf32>
    %221 = vector.broadcast %220 : vector<8x1xf32> to vector<8x8xf32>
    %222 = arith.mulf %217, %221 : vector<8x8xf32>
    %cst_115 = arith.constant dense<0.000000e+00> : vector<8x8xf32>
    %223 = tpu.matmul %222, %211, %cst_115 {dimension_numbers = #tpu.dot_dimension_numbers<[1], [0], [0], [1], [0, 0, 1, 1], [], []>} : vector<8x8xf32>, vector<8x8xf32>, vector<8x8xf32> -> vector<8x8xf32>
    %224 = tpu.concatenate %189, %206, %223 in 1 : vector<8x8xf32>, vector<8x8xf32>, vector<8x8xf32> -> vector<8x24xf32>
    %c1_116 = arith.constant 1 : index
    %c0_117 = arith.constant 0 : index
    %c0_118 = arith.constant 0 : index
    %225 = vector.load %arg8[%c1_116, %c0_117, %c0_118] : memref<2x24x24xf32, #tpu.memory_space<vmem>>, vector<1x24x24xf32>
    %226 = vector.shape_cast %225 : vector<1x24x24xf32> to vector<24x24xf32>
    %cst_119 = arith.constant dense<0.000000e+00> : vector<8x24xf32>
    %227 = tpu.matmul %224, %226, %cst_119 {dimension_numbers = #tpu.dot_dimension_numbers<[1], [0], [0], [1], [0, 0, 1, 1], [], []>} : vector<8x24xf32>, vector<24x24xf32>, vector<8x24xf32> -> vector<8x24xf32>
    %c1_120 = arith.constant 1 : index
    %c0_121 = arith.constant 0 : index
    %c0_122 = arith.constant 0 : index
    %228 = vector.load %arg9[%c1_120, %c0_121, %c0_122] : memref<2x1x24xf32, #tpu.memory_space<vmem>>, vector<1x1x24xf32>
    %229 = vector.shape_cast %228 : vector<1x1x24xf32> to vector<1x24xf32>
    %230 = vector.broadcast %229 : vector<1x24xf32> to vector<8x24xf32>
    %231 = arith.addf %227, %230 : vector<8x24xf32>
    %232 = arith.addf %151, %231 : vector<8x24xf32>
    %c1_123 = arith.constant 1 : index
    %c0_124 = arith.constant 0 : index
    %c0_125 = arith.constant 0 : index
    %233 = vector.load %arg10[%c1_123, %c0_124, %c0_125] : memref<2x1x24xf32, #tpu.memory_space<vmem>>, vector<1x1x24xf32>
    %234 = vector.shape_cast %233 : vector<1x1x24xf32> to vector<1x24xf32>
    %c1_126 = arith.constant 1 : index
    %c0_127 = arith.constant 0 : index
    %c0_128 = arith.constant 0 : index
    %235 = vector.load %arg11[%c1_126, %c0_127, %c0_128] : memref<2x1x24xf32, #tpu.memory_space<vmem>>, vector<1x1x24xf32>
    %236 = vector.shape_cast %235 : vector<1x1x24xf32> to vector<1x24xf32>
    %cst_129 = arith.constant dense<0.000000e+00> : vector<8xf32>
    %237 = vector.multi_reduction <add>, %232, %cst_129 [1] : vector<8x24xf32> to vector<8xf32>
    %238 = vector.shape_cast %237 : vector<8xf32> to vector<8x1xf32>
    %cst_130 = arith.constant 2.400000e+01 : f32
    %239 = vector.broadcast %cst_130 : f32 to vector<8x1xf32>
    %240 = arith.divf %238, %239 : vector<8x1xf32>
    %241 = vector.broadcast %240 : vector<8x1xf32> to vector<8x24xf32>
    %242 = arith.subf %232, %241 : vector<8x24xf32>
    %243 = arith.mulf %242, %242 : vector<8x24xf32>
    %cst_131 = arith.constant dense<0.000000e+00> : vector<8xf32>
    %244 = vector.multi_reduction <add>, %243, %cst_131 [1] : vector<8x24xf32> to vector<8xf32>
    %245 = vector.shape_cast %244 : vector<8xf32> to vector<8x1xf32>
    %cst_132 = arith.constant 2.400000e+01 : f32
    %246 = vector.broadcast %cst_132 : f32 to vector<8x1xf32>
    %247 = arith.divf %245, %246 : vector<8x1xf32>
    %248 = vector.broadcast %240 : vector<8x1xf32> to vector<8x24xf32>
    %249 = arith.subf %232, %248 : vector<8x24xf32>
    %cst_133 = arith.constant 9.99999974E-6 : f32
    %250 = vector.broadcast %cst_133 : f32 to vector<8x1xf32>
    %251 = arith.addf %247, %250 : vector<8x1xf32>
    %252 = math.rsqrt %251 : vector<8x1xf32>
    %253 = vector.broadcast %252 : vector<8x1xf32> to vector<8x24xf32>
    %254 = arith.mulf %249, %253 : vector<8x24xf32>
    %255 = vector.broadcast %234 : vector<1x24xf32> to vector<8x24xf32>
    %256 = arith.mulf %254, %255 : vector<8x24xf32>
    %257 = vector.broadcast %236 : vector<1x24xf32> to vector<8x24xf32>
    %258 = arith.addf %256, %257 : vector<8x24xf32>
    %c1_134 = arith.constant 1 : index
    %c0_135 = arith.constant 0 : index
    %c0_136 = arith.constant 0 : index
    %259 = vector.load %arg12[%c1_134, %c0_135, %c0_136] : memref<2x24x32xf32, #tpu.memory_space<vmem>>, vector<1x24x32xf32>
    %260 = vector.shape_cast %259 : vector<1x24x32xf32> to vector<24x32xf32>
    %cst_137 = arith.constant dense<0.000000e+00> : vector<8x32xf32>
    %261 = tpu.matmul %258, %260, %cst_137 {dimension_numbers = #tpu.dot_dimension_numbers<[1], [0], [0], [1], [0, 0, 1, 1], [], []>} : vector<8x24xf32>, vector<24x32xf32>, vector<8x32xf32> -> vector<8x32xf32>
    %c1_138 = arith.constant 1 : index
    %c0_139 = arith.constant 0 : index
    %c0_140 = arith.constant 0 : index
    %262 = vector.load %arg13[%c1_138, %c0_139, %c0_140] : memref<2x1x32xf32, #tpu.memory_space<vmem>>, vector<1x1x32xf32>
    %263 = vector.shape_cast %262 : vector<1x1x32xf32> to vector<1x32xf32>
    %264 = vector.broadcast %263 : vector<1x32xf32> to vector<8x32xf32>
    %265 = arith.addf %261, %264 : vector<8x32xf32>
    %cst_141 = arith.constant 0.000000e+00 : f32
    %266 = vector.broadcast %cst_141 : f32 to vector<8x32xf32>
    %267 = arith.maximumf %265, %266 : vector<8x32xf32>
    %c1_142 = arith.constant 1 : index
    %c0_143 = arith.constant 0 : index
    %c0_144 = arith.constant 0 : index
    %268 = vector.load %arg14[%c1_142, %c0_143, %c0_144] : memref<2x32x24xf32, #tpu.memory_space<vmem>>, vector<1x32x24xf32>
    %269 = vector.shape_cast %268 : vector<1x32x24xf32> to vector<32x24xf32>
    %cst_145 = arith.constant dense<0.000000e+00> : vector<8x24xf32>
    %270 = tpu.matmul %267, %269, %cst_145 {dimension_numbers = #tpu.dot_dimension_numbers<[1], [0], [0], [1], [0, 0, 1, 1], [], []>} : vector<8x32xf32>, vector<32x24xf32>, vector<8x24xf32> -> vector<8x24xf32>
    %c1_146 = arith.constant 1 : index
    %c0_147 = arith.constant 0 : index
    %c0_148 = arith.constant 0 : index
    %271 = vector.load %arg15[%c1_146, %c0_147, %c0_148] : memref<2x1x24xf32, #tpu.memory_space<vmem>>, vector<1x1x24xf32>
    %272 = vector.shape_cast %271 : vector<1x1x24xf32> to vector<1x24xf32>
    %273 = vector.broadcast %272 : vector<1x24xf32> to vector<8x24xf32>
    %274 = arith.addf %270, %273 : vector<8x24xf32>
    %275 = arith.addf %258, %274 : vector<8x24xf32>
    %c1_149 = arith.constant 1 : index
    %c0_150 = arith.constant 0 : index
    %c0_151 = arith.constant 0 : index
    %276 = vector.load %arg16[%c1_149, %c0_150, %c0_151] : memref<2x1x24xf32, #tpu.memory_space<vmem>>, vector<1x1x24xf32>
    %277 = vector.shape_cast %276 : vector<1x1x24xf32> to vector<1x24xf32>
    %c1_152 = arith.constant 1 : index
    %c0_153 = arith.constant 0 : index
    %c0_154 = arith.constant 0 : index
    %278 = vector.load %arg17[%c1_152, %c0_153, %c0_154] : memref<2x1x24xf32, #tpu.memory_space<vmem>>, vector<1x1x24xf32>
    %279 = vector.shape_cast %278 : vector<1x1x24xf32> to vector<1x24xf32>
    %cst_155 = arith.constant dense<0.000000e+00> : vector<8xf32>
    %280 = vector.multi_reduction <add>, %275, %cst_155 [1] : vector<8x24xf32> to vector<8xf32>
    %281 = vector.shape_cast %280 : vector<8xf32> to vector<8x1xf32>
    %cst_156 = arith.constant 2.400000e+01 : f32
    %282 = vector.broadcast %cst_156 : f32 to vector<8x1xf32>
    %283 = arith.divf %281, %282 : vector<8x1xf32>
    %284 = vector.broadcast %283 : vector<8x1xf32> to vector<8x24xf32>
    %285 = arith.subf %275, %284 : vector<8x24xf32>
    %286 = arith.mulf %285, %285 : vector<8x24xf32>
    %cst_157 = arith.constant dense<0.000000e+00> : vector<8xf32>
    %287 = vector.multi_reduction <add>, %286, %cst_157 [1] : vector<8x24xf32> to vector<8xf32>
    %288 = vector.shape_cast %287 : vector<8xf32> to vector<8x1xf32>
    %cst_158 = arith.constant 2.400000e+01 : f32
    %289 = vector.broadcast %cst_158 : f32 to vector<8x1xf32>
    %290 = arith.divf %288, %289 : vector<8x1xf32>
    %291 = vector.broadcast %283 : vector<8x1xf32> to vector<8x24xf32>
    %292 = arith.subf %275, %291 : vector<8x24xf32>
    %cst_159 = arith.constant 9.99999974E-6 : f32
    %293 = vector.broadcast %cst_159 : f32 to vector<8x1xf32>
    %294 = arith.addf %290, %293 : vector<8x1xf32>
    %295 = math.rsqrt %294 : vector<8x1xf32>
    %296 = vector.broadcast %295 : vector<8x1xf32> to vector<8x24xf32>
    %297 = arith.mulf %292, %296 : vector<8x24xf32>
    %298 = vector.broadcast %277 : vector<1x24xf32> to vector<8x24xf32>
    %299 = arith.mulf %297, %298 : vector<8x24xf32>
    %300 = vector.broadcast %279 : vector<1x24xf32> to vector<8x24xf32>
    %301 = arith.addf %299, %300 : vector<8x24xf32>
    %c0_160 = arith.constant 0 : index
    %c0_161 = arith.constant 0 : index
    %302 = vector.load %arg18[%c0_160, %c0_161] : memref<24x4xf32, #tpu.memory_space<vmem>>, vector<24x4xf32>
    %cst_162 = arith.constant dense<0.000000e+00> : vector<8x4xf32>
    %303 = tpu.matmul %301, %302, %cst_162 {dimension_numbers = #tpu.dot_dimension_numbers<[1], [0], [0], [1], [0, 0, 1, 1], [], []>} : vector<8x24xf32>, vector<24x4xf32>, vector<8x4xf32> -> vector<8x4xf32>
    %c0_163 = arith.constant 0 : index
    %c0_164 = arith.constant 0 : index
    %304 = vector.load %arg19[%c0_163, %c0_164] : memref<1x4xf32, #tpu.memory_space<vmem>>, vector<1x4xf32>
    %305 = vector.broadcast %304 : vector<1x4xf32> to vector<8x4xf32>
    %306 = arith.addf %303, %305 : vector<8x4xf32>
    %c0_165 = arith.constant 0 : index
    %c0_166 = arith.constant 0 : index
    %c0_167 = arith.constant 0 : index
    %307 = vector.load %arg20[%c0_165, %c0_166, %c0_167] : memref<1x8x4xf32, #tpu.memory_space<vmem>>, vector<1x8x4xf32>
    %308 = vector.shape_cast %307 : vector<1x8x4xf32> to vector<8x4xf32>
    %309 = vector.shape_cast %306 : vector<8x4xf32> to vector<1x8x4xf32>
    tpu.vector_store %arg20[%c0_165, %c0_166, %c0_167], %309 {strides = array<i32>} : memref<1x8x4xf32, #tpu.memory_space<vmem>>, vector<1x8x4xf32>,
    return
  }
  func.func @transform_0(%arg0: i32) -> (i32, i32, i32) {
    %c0_i32 = arith.constant 0 : i32
    %c0_i32_0 = arith.constant 0 : i32
    %c0_i32_1 = arith.constant 0 : i32
    return %arg0, %c0_i32, %c0_i32_0 : i32, i32, i32
  }
  func.func @transform_1(%arg0: i32) -> (i32, i32, i32) {
    %c0_i32 = arith.constant 0 : i32
    %c0_i32_0 = arith.constant 0 : i32
    %c0_i32_1 = arith.constant 0 : i32
    %c0_i32_2 = arith.constant 0 : i32
    return %c0_i32, %c0_i32_0, %c0_i32_1 : i32, i32, i32
  }
  func.func @transform_2(%arg0: i32) -> (i32, i32, i32) {
    %c0_i32 = arith.constant 0 : i32
    %c0_i32_0 = arith.constant 0 : i32
    %c0_i32_1 = arith.constant 0 : i32
    %c0_i32_2 = arith.constant 0 : i32
    return %c0_i32, %c0_i32_0, %c0_i32_1 : i32, i32, i32
  }
  func.func @transform_3(%arg0: i32) -> (i32, i32, i32) {
    %c0_i32 = arith.constant 0 : i32
    %c0_i32_0 = arith.constant 0 : i32
    %c0_i32_1 = arith.constant 0 : i32
    %c0_i32_2 = arith.constant 0 : i32
    return %c0_i32, %c0_i32_0, %c0_i32_1 : i32, i32, i32
  }
  func.func @transform_4(%arg0: i32) -> (i32, i32, i32) {
    %c0_i32 = arith.constant 0 : i32
    %c0_i32_0 = arith.constant 0 : i32
    %c0_i32_1 = arith.constant 0 : i32
    %c0_i32_2 = arith.constant 0 : i32
    return %c0_i32, %c0_i32_0, %c0_i32_1 : i32, i32, i32
  }
  func.func @transform_5(%arg0: i32) -> (i32, i32, i32) {
    %c0_i32 = arith.constant 0 : i32
    %c0_i32_0 = arith.constant 0 : i32
    %c0_i32_1 = arith.constant 0 : i32
    %c0_i32_2 = arith.constant 0 : i32
    return %c0_i32, %c0_i32_0, %c0_i32_1 : i32, i32, i32
  }
  func.func @transform_6(%arg0: i32) -> (i32, i32, i32) {
    %c0_i32 = arith.constant 0 : i32
    %c0_i32_0 = arith.constant 0 : i32
    %c0_i32_1 = arith.constant 0 : i32
    %c0_i32_2 = arith.constant 0 : i32
    return %c0_i32, %c0_i32_0, %c0_i32_1 : i32, i32, i32
  }
  func.func @transform_7(%arg0: i32) -> (i32, i32, i32) {
    %c0_i32 = arith.constant 0 : i32
    %c0_i32_0 = arith.constant 0 : i32
    %c0_i32_1 = arith.constant 0 : i32
    %c0_i32_2 = arith.constant 0 : i32
    return %c0_i32, %c0_i32_0, %c0_i32_1 : i32, i32, i32
  }
  func.func @transform_8(%arg0: i32) -> (i32, i32, i32) {
    %c0_i32 = arith.constant 0 : i32
    %c0_i32_0 = arith.constant 0 : i32
    %c0_i32_1 = arith.constant 0 : i32
    %c0_i32_2 = arith.constant 0 : i32
    return %c0_i32, %c0_i32_0, %c0_i32_1 : i32, i32, i32
  }
  func.func @transform_9(%arg0: i32) -> (i32, i32, i32) {
    %c0_i32 = arith.constant 0 : i32
    %c0_i32_0 = arith.constant 0 : i32
    %c0_i32_1 = arith.constant 0 : i32
    %c0_i32_2 = arith.constant 0 : i32
    return %c0_i32, %c0_i32_0, %c0_i32_1 : i32, i32, i32
  }
  func.func @transform_10(%arg0: i32) -> (i32, i32, i32) {
    %c0_i32 = arith.constant 0 : i32
    %c0_i32_0 = arith.constant 0 : i32
    %c0_i32_1 = arith.constant 0 : i32
    %c0_i32_2 = arith.constant 0 : i32
    return %c0_i32, %c0_i32_0, %c0_i32_1 : i32, i32, i32
  }
  func.func @transform_11(%arg0: i32) -> (i32, i32, i32) {
    %c0_i32 = arith.constant 0 : i32
    %c0_i32_0 = arith.constant 0 : i32
    %c0_i32_1 = arith.constant 0 : i32
    %c0_i32_2 = arith.constant 0 : i32
    return %c0_i32, %c0_i32_0, %c0_i32_1 : i32, i32, i32
  }
  func.func @transform_12(%arg0: i32) -> (i32, i32, i32) {
    %c0_i32 = arith.constant 0 : i32
    %c0_i32_0 = arith.constant 0 : i32
    %c0_i32_1 = arith.constant 0 : i32
    %c0_i32_2 = arith.constant 0 : i32
    return %c0_i32, %c0_i32_0, %c0_i32_1 : i32, i32, i32
  }
  func.func @transform_13(%arg0: i32) -> (i32, i32, i32) {
    %c0_i32 = arith.constant 0 : i32
    %c0_i32_0 = arith.constant 0 : i32
    %c0_i32_1 = arith.constant 0 : i32
    %c0_i32_2 = arith.constant 0 : i32
    return %c0_i32, %c0_i32_0, %c0_i32_1 : i32, i32, i32
  }
  func.func @transform_14(%arg0: i32) -> (i32, i32, i32) {
    %c0_i32 = arith.constant 0 : i32
    %c0_i32_0 = arith.constant 0 : i32
    %c0_i32_1 = arith.constant 0 : i32
    %c0_i32_2 = arith.constant 0 : i32
    return %c0_i32, %c0_i32_0, %c0_i32_1 : i32, i32, i32
  }
  func.func @transform_15(%arg0: i32) -> (i32, i32, i32) {
    %c0_i32 = arith.constant 0 : i32
    %c0_i32_0 = arith.constant 0 : i32
    %c0_i32_1 = arith.constant 0 : i32
    %c0_i32_2 = arith.constant 0 : i32
    return %c0_i32, %c0_i32_0, %c0_i32_1 : i32, i32, i32
  }
  func.func @transform_16(%arg0: i32) -> (i32, i32, i32) {
    %c0_i32 = arith.constant 0 : i32
    %c0_i32_0 = arith.constant 0 : i32
    %c0_i32_1 = arith.constant 0 : i32
    %c0_i32_2 = arith.constant 0 : i32
    return %c0_i32, %c0_i32_0, %c0_i32_1 : i32, i32, i32
  }
  func.func @transform_17(%arg0: i32) -> (i32, i32) {
    %c0_i32 = arith.constant 0 : i32
    %c0_i32_0 = arith.constant 0 : i32
    %c0_i32_1 = arith.constant 0 : i32
    return %c0_i32, %c0_i32_0 : i32, i32
  }
  func.func @transform_18(%arg0: i32) -> (i32, i32) {
    %c0_i32 = arith.constant 0 : i32
    %c0_i32_0 = arith.constant 0 : i32
    %c0_i32_1 = arith.constant 0 : i32
    return %c0_i32, %c0_i32_0 : i32, i32
  }
  func.func @transform_19(%arg0: i32) -> (i32, i32, i32) {
    %c0_i32 = arith.constant 0 : i32
    %c0_i32_0 = arith.constant 0 : i32
    %c0_i32_1 = arith.constant 0 : i32
    return %arg0, %c0_i32, %c0_i32_0 : i32, i32, i32
  }
}

</mosaic_0001>

<llo_original>
// kernel: tpu_custom_call.1
$region0: #{tpu_custom_call.1}
  #allocation0 [shape = 'u32[]', space=smem, size = 0x4, offset = 0x4, fixed_abs, tag = 'smem constant byte address 0x4 - core index']
  #allocation1 [shape = 'u32[144,128]{1,0:T(1,128)}', space=vmem, size = 0x12000, scoped, tag = 'internal scratch']
  %s0 = inlined_call_operand.hbm [shape: f32[2,8,24], index: 0, kind: input, shape index: {}]
  %s1 = inlined_call_operand.vmem [shape: f32[2,24,24], index: 1, kind: input, shape index: {}]
  %s2 = inlined_call_operand.vmem [shape: f32[2,24,24], index: 2, kind: input, shape index: {}]
  %s3 = inlined_call_operand.vmem [shape: f32[2,24,24], index: 3, kind: input, shape index: {}]
  %s4 = inlined_call_operand.hbm [shape: f32[2,1,24], index: 4, kind: input, shape index: {}]
  %s5 = inlined_call_operand.hbm [shape: f32[2,1,24], index: 5, kind: input, shape index: {}]
  %s6 = inlined_call_operand.vmem [shape: f32[2,1,24], index: 6, kind: input, shape index: {}]
  %s7 = inlined_call_operand.hbm [shape: f32[2,24,24], index: 7, kind: input, shape index: {}]
  %s8 = inlined_call_operand.vmem [shape: f32[2,1,24], index: 8, kind: input, shape index: {}]
  %s9 = inlined_call_operand.vmem [shape: f32[2,1,24], index: 9, kind: input, shape index: {}]
  %s10 = inlined_call_operand.vmem [shape: f32[2,1,24], index: 10, kind: input, shape index: {}]
  %s11 = inlined_call_operand.hbm [shape: f32[2,24,32], index: 11, kind: input, shape index: {}]
  %s12 = inlined_call_operand.vmem [shape: f32[2,1,32], index: 12, kind: input, shape index: {}]
  %s13 = inlined_call_operand.vmem [shape: f32[2,32,24], index: 13, kind: input, shape index: {}]
  %s14 = inlined_call_operand.vmem [shape: f32[2,1,24], index: 14, kind: input, shape index: {}]
  %s15 = inlined_call_operand.vmem [shape: f32[2,1,24], index: 15, kind: input, shape index: {}]
  %s16 = inlined_call_operand.vmem [shape: f32[2,1,24], index: 16, kind: input, shape index: {}]
  %s17 = inlined_call_operand.vmem [shape: f32[24,4], index: 17, kind: input, shape index: {}]
  %s18 = inlined_call_operand.vmem [shape: f32[1,4], index: 18, kind: input, shape index: {}]
  %s19 = inlined_call_operand.vmem [shape: f32[2,8,4], index: 19, kind: output, shape index: {}]
  %s20 = sld [smem:[#allocation0]]
  $region129: #{tpu_custom_call.1} parent=0
    _
  %s22 = ssub.s32 1, %s20
  %s23 = scalar_select 0, %s22, %s20
  $region1: #{tpu_custom_call.1} parent=0
    #allocation2 [shape = 'u8[8192]{0}', space=vmem, size = 0x2000, scoped, tag = 'input window, operand 0']
    #allocation3 [shape = 's32[2]{0}', space=sflag, size = 0x8, scoped, tag = 'scoped memory for tpu_custom_call.1']
    #allocation4 [shape = 'u8[1024]{0}', space=vmem, size = 0x400, scoped, tag = 'input window, operand 4, single buffered']
    #allocation5 [shape = 's32[1]{0}', space=sflag, size = 0x4, scoped, tag = 'scoped memory for tpu_custom_call.1']
    #allocation6 [shape = 'u8[1024]{0}', space=vmem, size = 0x400, scoped, tag = 'input window, operand 5, single buffered']
    #allocation7 [shape = 'u8[24576]{0}', space=vmem, size = 0x6000, scoped, tag = 'input window, operand 7, single buffered']
    #allocation8 [shape = 's32[1]{0}', space=sflag, size = 0x4, scoped, tag = 'scoped memory for tpu_custom_call.1']
    #allocation9 [shape = 'u8[24576]{0}', space=vmem, size = 0x6000, scoped, tag = 'input window, operand 11, single buffered']
    %24 = vsyncpa [#allocation3], 0
    %s25 = scalar_lea.sflag [#allocation3], 1
    %26 = vsyncpa %s25, 0
    %27 = vsyncpa [#allocation5], 0
    %28 = vsyncpa [#allocation8], 0
    loop: start=0, step=1, limit=4
    $region2: #{tpu_custom_call.1} parent=1 // loop_pre_header
      _
    $region3: #{tpu_custom_call.1} parent=1 // loop_header
      %s30 = sphi 0, %s34
      %p31 = scmp.ge.s32.totalorder %s30, 4
      %s40 = sphi 0, %s42
      %s43 = sphi 0, %s40
      %s44 = sphi 0, %s43
      %s60 = sphi 0, %s44
      %s64 = sphi 0, %s64
      %s66 = sphi 0, %s64
      %s67 = sphi 0, %s66
      %s81 = sphi 0, %s67
      %s85 = sphi 0, %s85
      %s87 = sphi 0, %s85
      %s88 = sphi 0, %s87
      %s102 = sphi 0, %s88
      %s106 = sphi 0, %s106
      %s108 = sphi 0, %s106
      %s109 = sphi 0, %s108
      %s123 = sphi 0, %s109
      %s127 = sphi 0, %s127
      %s129 = sphi 0, %s127
      %s130 = sphi 0, %s129
      %s144 = sphi 0, %s130
      %s148 = sphi 0, %s148
      %s150 = sphi 0, %s148
      %s151 = sphi 0, %s150
      %s165 = sphi 0, %s151
      %s169 = sphi 0, %s169
      %s171 = sphi 0, %s169
      %s172 = sphi 0, %s171
      %s186 = sphi 0, %s172
      %s190 = sphi 0, %s190
      %s192 = sphi 0, %s190
      %s193 = sphi 0, %s192
      %s207 = sphi 0, %s193
      %s211 = sphi 0, %s211
      %s213 = sphi 0, %s211
      %s214 = sphi 0, %s213
      %s228 = sphi 0, %s214
      %s232 = sphi 0, %s232
      %s234 = sphi 0, %s232
      %s235 = sphi 0, %s234
      %s249 = sphi 0, %s235
      %s253 = sphi 0, %s253
      %s255 = sphi 0, %s253
      %s256 = sphi 0, %s255
      %s270 = sphi 0, %s256
      %s274 = sphi 0, %s274
      %s276 = sphi 0, %s274
      %s277 = sphi 0, %s276
      %s291 = sphi 0, %s277
      %s295 = sphi 0, %s295
      %s297 = sphi 0, %s295
      %s298 = sphi 0, %s297
      %s312 = sphi 0, %s298
      %s316 = sphi 0, %s316
      %s318 = sphi 0, %s316
      %s319 = sphi 0, %s318
      %s333 = sphi 0, %s319
      %s337 = sphi 0, %s337
      %s339 = sphi 0, %s337
      %s340 = sphi 0, %s339
      %s354 = sphi 0, %s340
      %s358 = sphi 0, %s358
      %s360 = sphi 0, %s358
      %s361 = sphi 0, %s360
      %s375 = sphi 0, %s361
      %s379 = sphi 0, %s379
      %s381 = sphi 0, %s379
      %s382 = sphi 0, %s381
      %s396 = sphi 0, %s382
      %s400 = sphi 0, %s400
      %s402 = sphi 0, %s400
      %s403 = sphi 0, %s402
      %s417 = sphi 0, %s403
      %s421 = sphi 0, %s421
      %s423 = sphi 0, %s421
      %s424 = sphi 0, %s423
      %s438 = sphi 0, %s424
      %s444 = sphi 0, %s446
      %s447 = sphi 0, %s444
      %s448 = sphi 0, %s447
      %s464 = sphi 0, %s448
    $region4: #{tpu_custom_call.1} parent=1 // loop_header_branch
      %33 = sbr.rel (%p31) target = $region8
    $region5: #{tpu_custom_call.1} parent=1 // loop_body
      %s35 = ssub.s32 %s30, 1
      %s36 = ssub.s32 %s30, 2
      %s37 = sadd.s32 %s30, 1
      %s38 = ssub.s32 %s30, %s37
      %p39 = scmp.eq.s32.totalorder %s38, 0
      %s41 = sadd.s32 %s40, 1
      %s42 = scalar_select %p39, %s40, %s41
      %p45 = pneg %p39
      %p46 = scmp.eq.s32.totalorder %s30, 1
      %p47 = por %p45, %p46
      %p48 = scmp.ne.s32.totalorder %s40, %s43
      %p49 = scmp.eq.s32.totalorder %s30, 0
      %p50 = por %p48, %p49
      %p51 = scmp.ne.s32.totalorder %s40, %s43
      %p52 = scmp.eq.s32.totalorder %s35, 1
      %p53 = por %p51, %p52
      %p54 = scmp.ne.s32.totalorder %s43, %s44
      %p55 = scmp.eq.s32.totalorder %s35, 0
      %p56 = por %p54, %p55
      %p57 = scmp.ne.s32.totalorder %s43, %s44
      %p58 = scmp.eq.s32.totalorder %s36, 1
      %p59 = por %p57, %p58
      %p61 = scmp.ne.s32.totalorder %s44, %s60
      %p62 = scmp.eq.s32.totalorder %s36, 0
      %p63 = por %p61, %p62
      %s65 = sadd.s32 %s64, 1
      %p68 = scmp.eq.s32.totalorder %s30, 1
      %p69 = scmp.ne.s32.totalorder %s64, %s66
      %p70 = scmp.eq.s32.totalorder %s30, 0
      %p71 = por %p69, %p70
      %p72 = scmp.ne.s32.totalorder %s64, %s66
      %p73 = scmp.eq.s32.totalorder %s35, 1
      %p74 = por %p72, %p73
      %p75 = scmp.ne.s32.totalorder %s66, %s67
      %p76 = scmp.eq.s32.totalorder %s35, 0
      %p77 = por %p75, %p76
      %p78 = scmp.ne.s32.totalorder %s66, %s67
      %p79 = scmp.eq.s32.totalorder %s36, 1
      %p80 = por %p78, %p79
      %p82 = scmp.ne.s32.totalorder %s67, %s81
      %p83 = scmp.eq.s32.totalorder %s36, 0
      %p84 = por %p82, %p83
      %s86 = sadd.s32 %s85, 1
      %p89 = scmp.eq.s32.totalorder %s30, 1
      %p90 = scmp.ne.s32.totalorder %s85, %s87
      %p91 = scmp.eq.s32.totalorder %s30, 0
      %p92 = por %p90, %p91
      %p93 = scmp.ne.s32.totalorder %s85, %s87
      %p94 = scmp.eq.s32.totalorder %s35, 1
      %p95 = por %p93, %p94
      %p96 = scmp.ne.s32.totalorder %s87, %s88
      %p97 = scmp.eq.s32.totalorder %s35, 0
      %p98 = por %p96, %p97
      %p99 = scmp.ne.s32.totalorder %s87, %s88
      %p100 = scmp.eq.s32.totalorder %s36, 1
      %p101 = por %p99, %p100
      %p103 = scmp.ne.s32.totalorder %s88, %s102
      %p104 = scmp.eq.s32.totalorder %s36, 0
      %p105 = por %p103, %p104
      %s107 = sadd.s32 %s106, 1
      %p110 = scmp.eq.s32.totalorder %s30, 1
      %p111 = scmp.ne.s32.totalorder %s106, %s108
      %p112 = scmp.eq.s32.totalorder %s30, 0
      %p113 = por %p111, %p112
      %p114 = scmp.ne.s32.totalorder %s106, %s108
      %p115 = scmp.eq.s32.totalorder %s35, 1
      %p116 = por %p114, %p115
      %p117 = scmp.ne.s32.totalorder %s108, %s109
      %p118 = scmp.eq.s32.totalorder %s35, 0
      %p119 = por %p117, %p118
      %p120 = scmp.ne.s32.totalorder %s108, %s109
      %p121 = scmp.eq.s32.totalorder %s36, 1
      %p122 = por %p120, %p121
      %p124 = scmp.ne.s32.totalorder %s109, %s123
      %p125 = scmp.eq.s32.totalorder %s36, 0
      %p126 = por %p124, %p125
      %s128 = sadd.s32 %s127, 1
      %p131 = scmp.eq.s32.totalorder %s30, 1
      %p132 = scmp.ne.s32.totalorder %s127, %s129
      %p133 = scmp.eq.s32.totalorder %s30, 0
      %p134 = por %p132, %p133
      %p135 = scmp.ne.s32.totalorder %s127, %s129
      %p136 = scmp.eq.s32.totalorder %s35, 1
      %p137 = por %p135, %p136
      %p138 = scmp.ne.s32.totalorder %s129, %s130
      %p139 = scmp.eq.s32.totalorder %s35, 0
      %p140 = por %p138, %p139
      %p141 = scmp.ne.s32.totalorder %s129, %s130
      %p142 = scmp.eq.s32.totalorder %s36, 1
      %p143 = por %p141, %p142
      %p145 = scmp.ne.s32.totalorder %s130, %s144
      %p146 = scmp.eq.s32.totalorder %s36, 0
      %p147 = por %p145, %p146
      %s149 = sadd.s32 %s148, 1
      %p152 = scmp.eq.s32.totalorder %s30, 1
      %p153 = scmp.ne.s32.totalorder %s148, %s150
      %p154 = scmp.eq.s32.totalorder %s30, 0
      %p155 = por %p153, %p154
      %p156 = scmp.ne.s32.totalorder %s148, %s150
      %p157 = scmp.eq.s32.totalorder %s35, 1
      %p158 = por %p156, %p157
      %p159 = scmp.ne.s32.totalorder %s150, %s151
      %p160 = scmp.eq.s32.totalorder %s35, 0
      %p161 = por %p159, %p160
      %p162 = scmp.ne.s32.totalorder %s150, %s151
      %p163 = scmp.eq.s32.totalorder %s36, 1
      %p164 = por %p162, %p163
      %p166 = scmp.ne.s32.totalorder %s151, %s165
      %p167 = scmp.eq.s32.totalorder %s36, 0
      %p168 = por %p166, %p167
      %s170 = sadd.s32 %s169, 1
      %p173 = scmp.eq.s32.totalorder %s30, 1
      %p174 = scmp.ne.s32.totalorder %s169, %s171
      %p175 = scmp.eq.s32.totalorder %s30, 0
      %p176 = por %p174, %p175
      %p177 = scmp.ne.s32.totalorder %s169, %s171
      %p178 = scmp.eq.s32.totalorder %s35, 1
      %p179 = por %p177, %p178
      %p180 = scmp.ne.s32.totalorder %s171, %s172
      %p181 = scmp.eq.s32.totalorder %s35, 0
      %p182 = por %p180, %p181
      %p183 = scmp.ne.s32.totalorder %s171, %s172
      %p184 = scmp.eq.s32.totalorder %s36, 1
      %p185 = por %p183, %p184
      %p187 = scmp.ne.s32.totalorder %s172, %s186
      %p188 = scmp.eq.s32.totalorder %s36, 0
      %p189 = por %p187, %p188
      %s191 = sadd.s32 %s190, 1
      %p194 = scmp.eq.s32.totalorder %s30, 1
      %p195 = scmp.ne.s32.totalorder %s190, %s192
      %p196 = scmp.eq.s32.totalorder %s30, 0
      %p197 = por %p195, %p196
      %p198 = scmp.ne.s32.totalorder %s190, %s192
      %p199 = scmp.eq.s32.totalorder %s35, 1
      %p200 = por %p198, %p199
      %p201 = scmp.ne.s32.totalorder %s192, %s193
      %p202 = scmp.eq.s32.totalorder %s35, 0
      %p203 = por %p201, %p202
      %p204 = scmp.ne.s32.totalorder %s192, %s193
      %p205 = scmp.eq.s32.totalorder %s36, 1
      %p206 = por %p204, %p205
      %p208 = scmp.ne.s32.totalorder %s193, %s207
      %p209 = scmp.eq.s32.totalorder %s36, 0
      %p210 = por %p208, %p209
      %s212 = sadd.s32 %s211, 1
      %p215 = scmp.eq.s32.totalorder %s30, 1
      %p216 = scmp.ne.s32.totalorder %s211, %s213
      %p217 = scmp.eq.s32.totalorder %s30, 0
      %p218 = por %p216, %p217
      %p219 = scmp.ne.s32.totalorder %s211, %s213
      %p220 = scmp.eq.s32.totalorder %s35, 1
      %p221 = por %p219, %p220
      %p222 = scmp.ne.s32.totalorder %s213, %s214
      %p223 = scmp.eq.s32.totalorder %s35, 0
      %p224 = por %p222, %p223
      %p225 = scmp.ne.s32.totalorder %s213, %s214
      %p226 = scmp.eq.s32.totalorder %s36, 1
      %p227 = por %p225, %p226
      %p229 = scmp.ne.s32.totalorder %s214, %s228
      %p230 = scmp.eq.s32.totalorder %s36, 0
      %p231 = por %p229, %p230
      %s233 = sadd.s32 %s232, 1
      %p236 = scmp.eq.s32.totalorder %s30, 1
      %p237 = scmp.ne.s32.totalorder %s232, %s234
      %p238 = scmp.eq.s32.totalorder %s30, 0
      %p239 = por %p237, %p238
      %p240 = scmp.ne.s32.totalorder %s232, %s234
      %p241 = scmp.eq.s32.totalorder %s35, 1
      %p242 = por %p240, %p241
      %p243 = scmp.ne.s32.totalorder %s234, %s235
      %p244 = scmp.eq.s32.totalorder %s35, 0
      %p245 = por %p243, %p244
      %p246 = scmp.ne.s32.totalorder %s234, %s235
      %p247 = scmp.eq.s32.totalorder %s36, 1
      %p248 = por %p246, %p247
      %p250 = scmp.ne.s32.totalorder %s235, %s249
      %p251 = scmp.eq.s32.totalorder %s36, 0
      %p252 = por %p250, %p251
      %s254 = sadd.s32 %s253, 1
      %p257 = scmp.eq.s32.totalorder %s30, 1
      %p258 = scmp.ne.s32.totalorder %s253, %s255
      %p259 = scmp.eq.s32.totalorder %s30, 0
      %p260 = por %p258, %p259
      %p261 = scmp.ne.s32.totalorder %s253, %s255
      %p262 = scmp.eq.s32.totalorder %s35, 1
      %p263 = por %p261, %p262
      %p264 = scmp.ne.s32.totalorder %s255, %s256
      %p265 = scmp.eq.s32.totalorder %s35, 0
      %p266 = por %p264, %p265
      %p267 = scmp.ne.s32.totalorder %s255, %s256
      %p268 = scmp.eq.s32.totalorder %s36, 1
      %p269 = por %p267, %p268
      %p271 = scmp.ne.s32.totalorder %s256, %s270
      %p272 = scmp.eq.s32.totalorder %s36, 0
      %p273 = por %p271, %p272
      %s275 = sadd.s32 %s274, 1
      %p278 = scmp.eq.s32.totalorder %s30, 1
      %p279 = scmp.ne.s32.totalorder %s274, %s276
      %p280 = scmp.eq.s32.totalorder %s30, 0
      %p281 = por %p279, %p280
      %p282 = scmp.ne.s32.totalorder %s274, %s276
      %p283 = scmp.eq.s32.totalorder %s35, 1
      %p284 = por %p282, %p283
      %p285 = scmp.ne.s32.totalorder %s276, %s277
      %p286 = scmp.eq.s32.totalorder %s35, 0
      %p287 = por %p285, %p286
      %p288 = scmp.ne.s32.totalorder %s276, %s277
      %p289 = scmp.eq.s32.totalorder %s36, 1
      %p290 = por %p288, %p289
      %p292 = scmp.ne.s32.totalorder %s277, %s291
      %p293 = scmp.eq.s32.totalorder %s36, 0
      %p294 = por %p292, %p293
      %s296 = sadd.s32 %s295, 1
      %p299 = scmp.eq.s32.totalorder %s30, 1
      %p300 = scmp.ne.s32.totalorder %s295, %s297
      %p301 = scmp.eq.s32.totalorder %s30, 0
      %p302 = por %p300, %p301
      %p303 = scmp.ne.s32.totalorder %s295, %s297
      %p304 = scmp.eq.s32.totalorder %s35, 1
      %p305 = por %p303, %p304
      %p306 = scmp.ne.s32.totalorder %s297, %s298
      %p307 = scmp.eq.s32.totalorder %s35, 0
      %p308 = por %p306, %p307
      %p309 = scmp.ne.s32.totalorder %s297, %s298
      %p310 = scmp.eq.s32.totalorder %s36, 1
      %p311 = por %p309, %p310
      %p313 = scmp.ne.s32.totalorder %s298, %s312
      %p314 = scmp.eq.s32.totalorder %s36, 0
      %p315 = por %p313, %p314
      %s317 = sadd.s32 %s316, 1
      %p320 = scmp.eq.s32.totalorder %s30, 1
      %p321 = scmp.ne.s32.totalorder %s316, %s318
      %p322 = scmp.eq.s32.totalorder %s30, 0
      %p323 = por %p321, %p322
      %p324 = scmp.ne.s32.totalorder %s316, %s318
      %p325 = scmp.eq.s32.totalorder %s35, 1
      %p326 = por %p324, %p325
      %p327 = scmp.ne.s32.totalorder %s318, %s319
      %p328 = scmp.eq.s32.totalorder %s35, 0
      %p329 = por %p327, %p328
      %p330 = scmp.ne.s32.totalorder %s318, %s319
      %p331 = scmp.eq.s32.totalorder %s36, 1
      %p332 = por %p330, %p331
      %p334 = scmp.ne.s32.totalorder %s319, %s333
      %p335 = scmp.eq.s32.totalorder %s36, 0
      %p336 = por %p334, %p335
      %s338 = sadd.s32 %s337, 1
      %p341 = scmp.eq.s32.totalorder %s30, 1
      %p342 = scmp.ne.s32.totalorder %s337, %s339
      %p343 = scmp.eq.s32.totalorder %s30, 0
      %p344 = por %p342, %p343
      %p345 = scmp.ne.s32.totalorder %s337, %s339
      %p346 = scmp.eq.s32.totalorder %s35, 1
      %p347 = por %p345, %p346
      %p348 = scmp.ne.s32.totalorder %s339, %s340
      %p349 = scmp.eq.s32.totalorder %s35, 0
      %p350 = por %p348, %p349
      %p351 = scmp.ne.s32.totalorder %s339, %s340
      %p352 = scmp.eq.s32.totalorder %s36, 1
      %p353 = por %p351, %p352
      %p355 = scmp.ne.s32.totalorder %s340, %s354
      %p356 = scmp.eq.s32.totalorder %s36, 0
      %p357 = por %p355, %p356
      %s359 = sadd.s32 %s358, 1
      %p362 = scmp.eq.s32.totalorder %s30, 1
      %p363 = scmp.ne.s32.totalorder %s358, %s360
      %p364 = scmp.eq.s32.totalorder %s30, 0
      %p365 = por %p363, %p364
      %p366 = scmp.ne.s32.totalorder %s358, %s360
      %p367 = scmp.eq.s32.totalorder %s35, 1
      %p368 = por %p366, %p367
      %p369 = scmp.ne.s32.totalorder %s360, %s361
      %p370 = scmp.eq.s32.totalorder %s35, 0
      %p371 = por %p369, %p370
      %p372 = scmp.ne.s32.totalorder %s360, %s361
      %p373 = scmp.eq.s32.totalorder %s36, 1
      %p374 = por %p372, %p373
      %p376 = scmp.ne.s32.totalorder %s361, %s375
      %p377 = scmp.eq.s32.totalorder %s36, 0
      %p378 = por %p376, %p377
      %s380 = sadd.s32 %s379, 1
      %p383 = scmp.eq.s32.totalorder %s30, 1
      %p384 = scmp.ne.s32.totalorder %s379, %s381
      %p385 = scmp.eq.s32.totalorder %s30, 0
      %p386 = por %p384, %p385
      %p387 = scmp.ne.s32.totalorder %s379, %s381
      %p388 = scmp.eq.s32.totalorder %s35, 1
      %p389 = por %p387, %p388
      %p390 = scmp.ne.s32.totalorder %s381, %s382
      %p391 = scmp.eq.s32.totalorder %s35, 0
      %p392 = por %p390, %p391
      %p393 = scmp.ne.s32.totalorder %s381, %s382
      %p394 = scmp.eq.s32.totalorder %s36, 1
      %p395 = por %p393, %p394
      %p397 = scmp.ne.s32.totalorder %s382, %s396
      %p398 = scmp.eq.s32.totalorder %s36, 0
      %p399 = por %p397, %p398
      %s401 = sadd.s32 %s400, 1
      %p404 = scmp.eq.s32.totalorder %s30, 1
      %p405 = scmp.ne.s32.totalorder %s400, %s402
      %p406 = scmp.eq.s32.totalorder %s30, 0
      %p407 = por %p405, %p406
      %p408 = scmp.ne.s32.totalorder %s400, %s402
      %p409 = scmp.eq.s32.totalorder %s35, 1
      %p410 = por %p408, %p409
      %p411 = scmp.ne.s32.totalorder %s402, %s403
      %p412 = scmp.eq.s32.totalorder %s35, 0
      %p413 = por %p411, %p412
      %p414 = scmp.ne.s32.totalorder %s402, %s403
      %p415 = scmp.eq.s32.totalorder %s36, 1
      %p416 = por %p414, %p415
      %p418 = scmp.ne.s32.totalorder %s403, %s417
      %p419 = scmp.eq.s32.totalorder %s36, 0
      %p420 = por %p418, %p419
      %s422 = sadd.s32 %s421, 1
      %p425 = scmp.eq.s32.totalorder %s30, 1
      %p426 = scmp.ne.s32.totalorder %s421, %s423
      %p427 = scmp.eq.s32.totalorder %s30, 0
      %p428 = por %p426, %p427
      %p429 = scmp.ne.s32.totalorder %s421, %s423
      %p430 = scmp.eq.s32.totalorder %s35, 1
      %p431 = por %p429, %p430
      %p432 = scmp.ne.s32.totalorder %s423, %s424
      %p433 = scmp.eq.s32.totalorder %s35, 0
      %p434 = por %p432, %p433
      %p435 = scmp.ne.s32.totalorder %s423, %s424
      %p436 = scmp.eq.s32.totalorder %s36, 1
      %p437 = por %p435, %p436
      %p439 = scmp.ne.s32.totalorder %s424, %s438
      %p440 = scmp.eq.s32.totalorder %s36, 0
      %p441 = por %p439, %p440
      %s442 = ssub.s32 %s30, %s37
      %p443 = scmp.eq.s32.totalorder %s442, 0
      %s445 = sadd.s32 %s444, 1
      %s446 = scalar_select %p443, %s444, %s445
      %p449 = pneg %p443
      %p450 = scmp.eq.s32.totalorder %s30, 1
      %p451 = por %p449, %p450
      %p452 = scmp.ne.s32.totalorder %s444, %s447
      %p453 = scmp.eq.s32.totalorder %s30, 0
      %p454 = por %p452, %p453
      %p455 = scmp.ne.s32.totalorder %s444, %s447
      %p456 = scmp.eq.s32.totalorder %s35, 1
      %p457 = por %p455, %p456
      %p458 = scmp.ne.s32.totalorder %s447, %s448
      %p459 = scmp.eq.s32.totalorder %s35, 0
      %p460 = por %p458, %p459
      %p461 = scmp.ne.s32.totalorder %s447, %s448
      %p462 = scmp.eq.s32.totalorder %s36, 1
      %p463 = por %p461, %p462
      %p465 = scmp.ne.s32.totalorder %s448, %s464
      %p466 = scmp.eq.s32.totalorder %s36, 0
      %p467 = por %p465, %p466
      %p468 = scmp.le.s32.totalorder 1, %s30
      %p469 = scmp.lt.s32.totalorder %s30, 3
      %p470 = pnand %p468, %p469
      %p471 = pneg %p470
      // Predicated region
      $region9: #{tpu_custom_call.1} parent=5 // pred_check
        _
      $region10: #{tpu_custom_call.1} parent=5 // pred_check_branch
        %473 = sbr.rel (%p470) target = $region12
      $region11: #{tpu_custom_call.1} parent=5 // pred_region
        %s474 = ssub.s32 %s30, 1
        // Predicated region
        $region13: #{tpu_custom_call.1} parent=11 // pred_check
          %p475 = pneg %p77
        $region14: #{tpu_custom_call.1} parent=11 // pred_check_branch
          %477 = sbr.rel (%p475) target = $region16
        $region15: #{tpu_custom_call.1} parent=11 // pred_region
          _
        $region16: #{tpu_custom_call.1} parent=11 // pred_fallthru
          _
        // Predicated region
        $region17: #{tpu_custom_call.1} parent=11 // pred_check
          %p478 = pneg %p98
        $region18: #{tpu_custom_call.1} parent=11 // pred_check_branch
          %480 = sbr.rel (%p478) target = $region20
        $region19: #{tpu_custom_call.1} parent=11 // pred_region
          _
        $region20: #{tpu_custom_call.1} parent=11 // pred_fallthru
          _
        // Predicated region
        $region21: #{tpu_custom_call.1} parent=11 // pred_check
          %p481 = pneg %p119
        $region22: #{tpu_custom_call.1} parent=11 // pred_check_branch
          %483 = sbr.rel (%p481) target = $region24
        $region23: #{tpu_custom_call.1} parent=11 // pred_region
          _
        $region24: #{tpu_custom_call.1} parent=11 // pred_fallthru
          _
        // Predicated region
        $region25: #{tpu_custom_call.1} parent=11 // pred_check
          %p484 = pneg %p140
        $region26: #{tpu_custom_call.1} parent=11 // pred_check_branch
          %486 = sbr.rel (%p484) target = $region28
        $region27: #{tpu_custom_call.1} parent=11 // pred_region
          %s488 = ssub.s32 32, 32
          %489 = vsyncadd [#allocation5], %s488
          %s490 = sshll.u32 [#allocation4], 4
          %s491 = int_to_ptr.vmem [resolvable:$true] %s490
          %496 = dma.hbm_to_vmem [thread:$0]  %s4, 32, %s491, [#allocation5], 16, 16, 1
        $region28: #{tpu_custom_call.1} parent=11 // pred_fallthru
          _
        // Predicated region
        $region29: #{tpu_custom_call.1} parent=11 // pred_check
          %p497 = pneg %p161
        $region30: #{tpu_custom_call.1} parent=11 // pred_check_branch
          %499 = sbr.rel (%p497) target = $region32
        $region31: #{tpu_custom_call.1} parent=11 // pred_region
          %s501 = ssub.s32 32, 32
          %502 = vsyncadd [#allocation5], %s501
          %s503 = sshll.u32 [#allocation6], 4
          %s504 = int_to_ptr.vmem [resolvable:$true] %s503
          %509 = dma.hbm_to_vmem [thread:$0]  %s5, 32, %s504, [#allocation5], 16, 16, 1
        $region32: #{tpu_custom_call.1} parent=11 // pred_fallthru
          _
        // Predicated region
        $region33: #{tpu_custom_call.1} parent=11 // pred_check
          %p510 = pneg %p182
        $region34: #{tpu_custom_call.1} parent=11 // pred_check_branch
          %512 = sbr.rel (%p510) target = $region36
        $region35: #{tpu_custom_call.1} parent=11 // pred_region
          _
        $region36: #{tpu_custom_call.1} parent=11 // pred_fallthru
          _
        // Predicated region
        $region37: #{tpu_custom_call.1} parent=11 // pred_check
          %p513 = pneg %p203
        $region38: #{tpu_custom_call.1} parent=11 // pred_check_branch
          %515 = sbr.rel (%p513) target = $region40
        $region39: #{tpu_custom_call.1} parent=11 // pred_region
          %s517 = ssub.s32 768, 768
          %518 = vsyncadd [#allocation8], %s517
          %s519 = sshll.u32 [#allocation7], 4
          %s520 = int_to_ptr.vmem [resolvable:$true] %s519
          %525 = dma.hbm_to_vmem [thread:$0]  %s7, 768, %s520, [#allocation8], 128, 128, 8
        $region40: #{tpu_custom_call.1} parent=11 // pred_fallthru
          _
        // Predicated region
        $region41: #{tpu_custom_call.1} parent=11 // pred_check
          %p526 = pneg %p224
        $region42: #{tpu_custom_call.1} parent=11 // pred_check_branch
          %528 = sbr.rel (%p526) target = $region44
        $region43: #{tpu_custom_call.1} parent=11 // pred_region
          _
        $region44: #{tpu_custom_call.1} parent=11 // pred_fallthru
          _
        // Predicated region
        $region45: #{tpu_custom_call.1} parent=11 // pred_check
          %p529 = pneg %p245
        $region46: #{tpu_custom_call.1} parent=11 // pred_check_branch
          %531 = sbr.rel (%p529) target = $region48
        $region47: #{tpu_custom_call.1} parent=11 // pred_region
          _
        $region48: #{tpu_custom_call.1} parent=11 // pred_fallthru
          _
        // Predicated region
        $region49: #{tpu_custom_call.1} parent=11 // pred_check
          %p532 = pneg %p266
        $region50: #{tpu_custom_call.1} parent=11 // pred_check_branch
          %534 = sbr.rel (%p532) target = $region52
        $region51: #{tpu_custom_call.1} parent=11 // pred_region
          _
        $region52: #{tpu_custom_call.1} parent=11 // pred_fallthru
          _
        // Predicated region
        $region53: #{tpu_custom_call.1} parent=11 // pred_check
          %p535 = pneg %p287
        $region54: #{tpu_custom_call.1} parent=11 // pred_check_branch
          %537 = sbr.rel (%p535) target = $region56
        $region55: #{tpu_custom_call.1} parent=11 // pred_region
          %s539 = ssub.s32 768, 768
          %540 = vsyncadd [#allocation8], %s539
          %s541 = sshll.u32 [#allocation9], 4
          %s542 = int_to_ptr.vmem [resolvable:$true] %s541
          %547 = dma.hbm_to_vmem [thread:$0]  %s11, 768, %s542, [#allocation8], 128, 128, 8
        $region56: #{tpu_custom_call.1} parent=11 // pred_fallthru
          _
        // Predicated region
        $region57: #{tpu_custom_call.1} parent=11 // pred_check
          %p548 = pneg %p308
        $region58: #{tpu_custom_call.1} parent=11 // pred_check_branch
          %550 = sbr.rel (%p548) target = $region60
        $region59: #{tpu_custom_call.1} parent=11 // pred_region
          _
        $region60: #{tpu_custom_call.1} parent=11 // pred_fallthru
          _
        // Predicated region
        $region61: #{tpu_custom_call.1} parent=11 // pred_check
          %p551 = pneg %p329
        $region62: #{tpu_custom_call.1} parent=11 // pred_check_branch
          %553 = sbr.rel (%p551) target = $region64
        $region63: #{tpu_custom_call.1} parent=11 // pred_region
          _
        $region64: #{tpu_custom_call.1} parent=11 // pred_fallthru
          _
        // Predicated region
        $region65: #{tpu_custom_call.1} parent=11 // pred_check
          %p554 = pneg %p350
        $region66: #{tpu_custom_call.1} parent=11 // pred_check_branch
          %556 = sbr.rel (%p554) target = $region68
        $region67: #{tpu_custom_call.1} parent=11 // pred_region
          _
        $region68: #{tpu_custom_call.1} parent=11 // pred_fallthru
          _
        // Predicated region
        $region69: #{tpu_custom_call.1} parent=11 // pred_check
          %p557 = pneg %p371
        $region70: #{tpu_custom_call.1} parent=11 // pred_check_branch
          %559 = sbr.rel (%p557) target = $region72
        $region71: #{tpu_custom_call.1} parent=11 // pred_region
          _
        $region72: #{tpu_custom_call.1} parent=11 // pred_fallthru
          _
        // Predicated region
        $region73: #{tpu_custom_call.1} parent=11 // pred_check
          %p560 = pneg %p392
        $region74: #{tpu_custom_call.1} parent=11 // pred_check_branch
          %562 = sbr.rel (%p560) target = $region76
        $region75: #{tpu_custom_call.1} parent=11 // pred_region
          _
        $region76: #{tpu_custom_call.1} parent=11 // pred_fallthru
          _
        // Predicated region
        $region77: #{tpu_custom_call.1} parent=11 // pred_check
          %p563 = pneg %p413
        $region78: #{tpu_custom_call.1} parent=11 // pred_check_branch
          %565 = sbr.rel (%p563) target = $region80
        $region79: #{tpu_custom_call.1} parent=11 // pred_region
          _
        $region80: #{tpu_custom_call.1} parent=11 // pred_fallthru
          _
        // Predicated region
        $region81: #{tpu_custom_call.1} parent=11 // pred_check
          %p566 = pneg %p434
        $region82: #{tpu_custom_call.1} parent=11 // pred_check_branch
          %568 = sbr.rel (%p566) target = $region84
        $region83: #{tpu_custom_call.1} parent=11 // pred_region
          _
        $region84: #{tpu_custom_call.1} parent=11 // pred_fallthru
          _
      $region12: #{tpu_custom_call.1} parent=5 // pred_fallthru
        _
      %p569 = scmp.lt.s32.totalorder %s30, 2
      // Predicated region
      $region85: #{tpu_custom_call.1} parent=5 // pred_check
        %p570 = pneg %p569
      $region86: #{tpu_custom_call.1} parent=5 // pred_check_branch
        %572 = sbr.rel (%p570) target = $region88
      $region87: #{tpu_custom_call.1} parent=5 // pred_region
        // Predicated region
        $region89: #{tpu_custom_call.1} parent=87 // pred_check
          %p573 = pneg %p50
        $region90: #{tpu_custom_call.1} parent=87 // pred_check_branch
          %575 = sbr.rel (%p573) target = $region92
        $region91: #{tpu_custom_call.1} parent=87 // pred_region
          %s576 = sand.u32 %s40, 1
          %s577 = scalar_lea.sflag [#allocation3], %s576
          %s578 = sand.u32 %s40, 1
          %s579 = smul.addr %s578, 8
          %s580 = scalar_lea.vmem [#allocation2], %s579
          %s582 = ssub.s32 128, 128
          %583 = vsyncadd %s577, %s582
          %s584 = smul.addr %s30, 128
          %s585 = scalar_lea.hbm %s0, %s584
          %s587 = sshll.u32 %s580, 4
          %s588 = int_to_ptr.vmem [resolvable:$true] %s587
          %590 = dma.hbm_to_vmem [thread:$0]  %s585, 128, %s588, %s577
        $region92: #{tpu_custom_call.1} parent=87 // pred_fallthru
          _
      $region88: #{tpu_custom_call.1} parent=5 // pred_fallthru
        _
      %p591 = scmp.le.s32.totalorder 1, %s30
      %p592 = scmp.lt.s32.totalorder %s30, 3
      %p593 = pnand %p591, %p592
      %p594 = pneg %p593
      // Predicated region
      $region93: #{tpu_custom_call.1} parent=5 // pred_check
        _
      $region94: #{tpu_custom_call.1} parent=5 // pred_check_branch
        %596 = sbr.rel (%p593) target = $region96
      $region95: #{tpu_custom_call.1} parent=5 // pred_region
        %s597 = ssub.s32 %s30, 1
        %s598 = sand.u32 %s43, 1
        %s599 = scalar_lea.sflag [#allocation3], %s598
        %s600 = sand.u32 %s43, 1
        %s601 = smul.addr %s600, 8
        %s602 = scalar_lea.vmem [#allocation2], %s601
        // Predicated region
        $region97: #{tpu_custom_call.1} parent=95 // pred_check
          %p603 = pneg %p56
        $region98: #{tpu_custom_call.1} parent=95 // pred_check_branch
          %605 = sbr.rel (%p603) target = $region100
        $region99: #{tpu_custom_call.1} parent=95 // pred_region
          %606 = dma.done %s599, 128
        $region100: #{tpu_custom_call.1} parent=95 // pred_fallthru
          _
        // Predicated region
        $region101: #{tpu_custom_call.1} parent=95 // pred_check
          %p607 = pneg %p140
        $region102: #{tpu_custom_call.1} parent=95 // pred_check_branch
          %609 = sbr.rel (%p607) target = $region104
        $region103: #{tpu_custom_call.1} parent=95 // pred_region
          %610 = dma.done [#allocation5], 32
        $region104: #{tpu_custom_call.1} parent=95 // pred_fallthru
          _
        // Predicated region
        $region105: #{tpu_custom_call.1} parent=95 // pred_check
          %p611 = pneg %p161
        $region106: #{tpu_custom_call.1} parent=95 // pred_check_branch
          %613 = sbr.rel (%p611) target = $region108
        $region107: #{tpu_custom_call.1} parent=95 // pred_region
          %614 = dma.done [#allocation5], 32
        $region108: #{tpu_custom_call.1} parent=95 // pred_fallthru
          _
        // Predicated region
        $region109: #{tpu_custom_call.1} parent=95 // pred_check
          %p615 = pneg %p203
        $region110: #{tpu_custom_call.1} parent=95 // pred_check_branch
          %617 = sbr.rel (%p615) target = $region112
        $region111: #{tpu_custom_call.1} parent=95 // pred_region
          %618 = dma.done [#allocation8], 768
        $region112: #{tpu_custom_call.1} parent=95 // pred_fallthru
          _
        // Predicated region
        $region113: #{tpu_custom_call.1} parent=95 // pred_check
          %p619 = pneg %p287
        $region114: #{tpu_custom_call.1} parent=95 // pred_check_branch
          %621 = sbr.rel (%p619) target = $region116
        $region115: #{tpu_custom_call.1} parent=95 // pred_region
          %622 = dma.done [#allocation8], 768
        $region116: #{tpu_custom_call.1} parent=95 // pred_fallthru
          _
        %s623 = sand.u32 %s43, 1
        %s624 = scalar_lea.sflag [#allocation3], %s623
        %s625 = sand.u32 %s43, 1
        %s626 = smul.addr %s625, 8
        %s627 = scalar_lea.vmem [#allocation2], %s626
        %p628 = pneg %p56
        %p629 = pneg %p53
        %p630 = pneg %p77
        %p631 = pneg %p74
        %p632 = pneg %p98
        %p633 = pneg %p95
        %p634 = pneg %p119
        %p635 = pneg %p116
        %p636 = pneg %p140
        %p637 = pneg %p137
        %p638 = pneg %p161
        %p639 = pneg %p158
        %p640 = pneg %p182
        %p641 = pneg %p179
        %p642 = pneg %p203
        %p643 = pneg %p200
        %p644 = pneg %p224
        %p645 = pneg %p221
        %p646 = pneg %p245
        %p647 = pneg %p242
        %p648 = pneg %p266
        %p649 = pneg %p263
        %p650 = pneg %p287
        %p651 = pneg %p284
        %p652 = pneg %p308
        %p653 = pneg %p305
        %p654 = pneg %p329
        %p655 = pneg %p326
        %p656 = pneg %p350
        %p657 = pneg %p347
        %p658 = pneg %p371
        %p659 = pneg %p368
        %p660 = pneg %p392
        %p661 = pneg %p389
        %p662 = pneg %p413
        %p663 = pneg %p410
        %p664 = pneg %p434
        %p665 = pneg %p431
        %p666 = pneg %p460
        %p667 = pneg %p457
        %p668 = scmp.lt.s32.totalorder %s35, 1
        %s669 = scalar_select %p668, %s35, 1
        %s670 = smul.addr %s669, 8
        %s671 = scalar_lea.vmem %s19, %s670
        %p672 = scmp.lt.s32.totalorder %s35, 1
        %s673 = scalar_select %p672, %s35, 1
        %s674 = smul.addr %s673, 8
        %s675 = scalar_lea.vmem %s19, %s674
        %v676 = vld [vmem:[%s602] sm:$0xff]
        %v677 = vld [vmem:[%s1] sm:$0xff]
        %v678 = vld [vmem:[%s1 + $0x8] sm:$0xff]
        %v679 = vld [vmem:[%s1 + $0x10] sm:$0xff]
        %v680 = vld [vmem:[#allocation4] sm:$0x1]
        %v682 = vlaneseq
        %v683 = vshrl.u32 %v682, 7
        %v684 = vsub.s32 0, %v683
        %v685 = vrot.slane %v680, %v684
        %vm687 = vcmask 195584
        %v689 = vsel %vm687, %v676, 0
        %691 = vmatprep.subr.mxu0 0.0
        %692 = vmatpush1.msra.mxu0 0.0
        %693 = vmatprep.subr.mxu0 0.0
        %694 = vmatpush1.msra.mxu0 0.0
        %695 = vmatprep.subr.mxu0 0.0
        %696 = vmatpush1.msra.mxu0 0.0
        %697 = vmatprep.subr.mxu0 0.0
        %698 = vmatpush1.msra.mxu0 0.0
        %699 = vmatprep.subr.mxu0 0.0
        %700 = vmatpush1.msra.mxu0 0.0
        %701 = vmatprep.subr.mxu0 0.0
        %702 = vmatpush1.msra.mxu0 0.0
        %703 = vmatprep.subr.mxu0 0.0
        %704 = vmatpush1.msra.mxu0 0.0
        %705 = vmatprep.subr.mxu0 0.0
        %706 = vmatpush1.msra.mxu0 0.0
        %707 = vmatprep.subr.mxu0 0.0
        %708 = vmatpush1.msra.mxu0 0.0
        %709 = vmatprep.subr.mxu0 0.0
        %710 = vmatpush1.msra.mxu0 0.0
        %711 = vmatprep.subr.mxu0 0.0
        %712 = vmatpush1.msra.mxu0 0.0
        %713 = vmatprep.subr.mxu0 0.0
        %714 = vmatpush1.msra.mxu0 0.0
        %715 = vmatprep.subr.mxu0 0.0
        %716 = vmatpush1.msra.mxu0 0.0
        %717 = vmatprep.subr.mxu0 0.0
        %718 = vmatpush1.msra.mxu0 %v679
        %719 = vmatprep.subr.mxu0 0.0
        %720 = vmatpush1.msra.mxu0 %v678
        %721 = vmatprep.subr.mxu0 0.0
        %722 = vmatpush1.msra.mxu0 %v677
        %723 = vmatprep.subr.mxu0 0.0
        %724 = vmatpush2.msra.mxu0 0.0
        %725 = vmatprep.subr.mxu0 0.0
        %726 = vmatpush2.msra.mxu0 0.0
        %727 = vmatprep.subr.mxu0 0.0
        %728 = vmatpush2.msra.mxu0 0.0
        %729 = vmatprep.subr.mxu0 0.0
        %730 = vmatpush2.msra.mxu0 0.0
        %731 = vmatprep.subr.mxu0 0.0
        %732 = vmatpush2.msra.mxu0 0.0
        %733 = vmatprep.subr.mxu0 0.0
        %734 = vmatpush2.msra.mxu0 0.0
        %735 = vmatprep.subr.mxu0 0.0
        %736 = vmatpush2.msra.mxu0 0.0
        %737 = vmatprep.subr.mxu0 0.0
        %738 = vmatpush2.msra.mxu0 0.0
        %739 = vmatprep.subr.mxu0 0.0
        %740 = vmatpush2.msra.mxu0 0.0
        %741 = vmatprep.subr.mxu0 0.0
        %742 = vmatpush2.msra.mxu0 0.0
        %743 = vmatprep.subr.mxu0 0.0
        %744 = vmatpush2.msra.mxu0 0.0
        %745 = vmatprep.subr.mxu0 0.0
        %746 = vmatpush2.msra.mxu0 0.0
        %747 = vmatprep.subr.mxu0 0.0
        %748 = vmatpush2.msra.mxu0 0.0
        %749 = vmatprep.subr.mxu0 0.0
        %750 = vmatpush2.msra.mxu0 0.0
        %751 = vmatprep.subr.mxu0 0.0
        %752 = vmatpush2.msra.mxu0 0.0
        %753 = vmatprep.subr.mxu0 0.0
        %754 = vmatpush2.msra.mxu0 0.0
        %755 = vmatprep.mubr.f32.mxu0 0.0
        %756 = vmatmul.mubr.f32.gmra.mxu0 %v689
        %v757 = vpop.f32.mrf.mxu0
        %v758 = vadd.f32 %v685, %v757
        %v759 = vpop.f32.mrf.mxu0
        %760 = vdwg.mxu0
        %v761 = vld [vmem:[%s2] sm:$0xff]
        %v762 = vld [vmem:[%s2 + $0x8] sm:$0xff]
        %v763 = vld [vmem:[%s2 + $0x10] sm:$0xff]
        %v764 = vld [vmem:[#allocation6] sm:$0x1]
        %v766 = vlaneseq
        %v767 = vshrl.u32 %v766, 7
        %v768 = vsub.s32 0, %v767
        %v769 = vrot.slane %v764, %v768
        %771 = vmatprep.subr.mxu0 0.0
        %772 = vmatpush1.msra.mxu0 0.0
        %773 = vmatprep.subr.mxu0 0.0
        %774 = vmatpush1.msra.mxu0 0.0
        %775 = vmatprep.subr.mxu0 0.0
        %776 = vmatpush1.msra.mxu0 0.0
        %777 = vmatprep.subr.mxu0 0.0
        %778 = vmatpush1.msra.mxu0 0.0
        %779 = vmatprep.subr.mxu0 0.0
        %780 = vmatpush1.msra.mxu0 0.0
        %781 = vmatprep.subr.mxu0 0.0
        %782 = vmatpush1.msra.mxu0 0.0
        %783 = vmatprep.subr.mxu0 0.0
        %784 = vmatpush1.msra.mxu0 0.0
        %785 = vmatprep.subr.mxu0 0.0
        %786 = vmatpush1.msra.mxu0 0.0
        %787 = vmatprep.subr.mxu0 0.0
        %788 = vmatpush1.msra.mxu0 0.0
        %789 = vmatprep.subr.mxu0 0.0
        %790 = vmatpush1.msra.mxu0 0.0
        %791 = vmatprep.subr.mxu0 0.0
        %792 = vmatpush1.msra.mxu0 0.0
        %793 = vmatprep.subr.mxu0 0.0
        %794 = vmatpush1.msra.mxu0 0.0
        %795 = vmatprep.subr.mxu0 0.0
        %796 = vmatpush1.msra.mxu0 0.0
        %797 = vmatprep.subr.mxu0 0.0
        %798 = vmatpush1.msra.mxu0 %v763
        %799 = vmatprep.subr.mxu0 0.0
        %800 = vmatpush1.msra.mxu0 %v762
        %801 = vmatprep.subr.mxu0 0.0
        %802 = vmatpush1.msra.mxu0 %v761
        %803 = vmatprep.subr.mxu0 0.0
        %804 = vmatpush2.msra.mxu0 0.0
        %805 = vmatprep.subr.mxu0 0.0
        %806 = vmatpush2.msra.mxu0 0.0
        %807 = vmatprep.subr.mxu0 0.0
        %808 = vmatpush2.msra.mxu0 0.0
        %809 = vmatprep.subr.mxu0 0.0
        %810 = vmatpush2.msra.mxu0 0.0
        %811 = vmatprep.subr.mxu0 0.0
        %812 = vmatpush2.msra.mxu0 0.0
        %813 = vmatprep.subr.mxu0 0.0
        %814 = vmatpush2.msra.mxu0 0.0
        %815 = vmatprep.subr.mxu0 0.0
        %816 = vmatpush2.msra.mxu0 0.0
        %817 = vmatprep.subr.mxu0 0.0
        %818 = vmatpush2.msra.mxu0 0.0
        %819 = vmatprep.subr.mxu0 0.0
        %820 = vmatpush2.msra.mxu0 0.0
        %821 = vmatprep.subr.mxu0 0.0
        %822 = vmatpush2.msra.mxu0 0.0
        %823 = vmatprep.subr.mxu0 0.0
        %824 = vmatpush2.msra.mxu0 0.0
        %825 = vmatprep.subr.mxu0 0.0
        %826 = vmatpush2.msra.mxu0 0.0
        %827 = vmatprep.subr.mxu0 0.0
        %828 = vmatpush2.msra.mxu0 0.0
        %829 = vmatprep.subr.mxu0 0.0
        %830 = vmatpush2.msra.mxu0 0.0
        %831 = vmatprep.subr.mxu0 0.0
        %832 = vmatpush2.msra.mxu0 0.0
        %833 = vmatprep.subr.mxu0 0.0
        %834 = vmatpush2.msra.mxu0 0.0
        %835 = vmatprep.mubr.f32.mxu0 0.0
        %836 = vmatmul.mubr.f32.gmra.mxu0 %v689
        %v837 = vpop.f32.mrf.mxu0
        %v838 = vadd.f32 %v769, %v837
        %v839 = vpop.f32.mrf.mxu0
        %840 = vdwg.mxu0
        %v841 = vld [vmem:[%s3] sm:$0xff]
        %v842 = vld [vmem:[%s3 + $0x8] sm:$0xff]
        %v843 = vld [vmem:[%s3 + $0x10] sm:$0xff]
        %v844 = vld [vmem:[%s6] sm:$0x1]
        %v846 = vlaneseq
        %v847 = vshrl.u32 %v846, 7
        %v848 = vsub.s32 0, %v847
        %v849 = vrot.slane %v844, %v848
        %851 = vmatprep.subr.mxu0 0.0
        %852 = vmatpush1.msra.mxu0 0.0
        %853 = vmatprep.subr.mxu0 0.0
        %854 = vmatpush1.msra.mxu0 0.0
        %855 = vmatprep.subr.mxu0 0.0
        %856 = vmatpush1.msra.mxu0 0.0
        %857 = vmatprep.subr.mxu0 0.0
        %858 = vmatpush1.msra.mxu0 0.0
        %859 = vmatprep.subr.mxu0 0.0
        %860 = vmatpush1.msra.mxu0 0.0
        %861 = vmatprep.subr.mxu0 0.0
        %862 = vmatpush1.msra.mxu0 0.0
        %863 = vmatprep.subr.mxu0 0.0
        %864 = vmatpush1.msra.mxu0 0.0
        %865 = vmatprep.subr.mxu0 0.0
        %866 = vmatpush1.msra.mxu0 0.0
        %867 = vmatprep.subr.mxu0 0.0
        %868 = vmatpush1.msra.mxu0 0.0
        %869 = vmatprep.subr.mxu0 0.0
        %870 = vmatpush1.msra.mxu0 0.0
        %871 = vmatprep.subr.mxu0 0.0
        %872 = vmatpush1.msra.mxu0 0.0
        %873 = vmatprep.subr.mxu0 0.0
        %874 = vmatpush1.msra.mxu0 0.0
        %875 = vmatprep.subr.mxu0 0.0
        %876 = vmatpush1.msra.mxu0 0.0
        %877 = vmatprep.subr.mxu0 0.0
        %878 = vmatpush1.msra.mxu0 %v843
        %879 = vmatprep.subr.mxu0 0.0
        %880 = vmatpush1.msra.mxu0 %v842
        %881 = vmatprep.subr.mxu0 0.0
        %882 = vmatpush1.msra.mxu0 %v841
        %883 = vmatprep.subr.mxu0 0.0
        %884 = vmatpush2.msra.mxu0 0.0
        %885 = vmatprep.subr.mxu0 0.0
        %886 = vmatpush2.msra.mxu0 0.0
        %887 = vmatprep.subr.mxu0 0.0
        %888 = vmatpush2.msra.mxu0 0.0
        %889 = vmatprep.subr.mxu0 0.0
        %890 = vmatpush2.msra.mxu0 0.0
        %891 = vmatprep.subr.mxu0 0.0
        %892 = vmatpush2.msra.mxu0 0.0
        %893 = vmatprep.subr.mxu0 0.0
        %894 = vmatpush2.msra.mxu0 0.0
        %895 = vmatprep.subr.mxu0 0.0
        %896 = vmatpush2.msra.mxu0 0.0
        %897 = vmatprep.subr.mxu0 0.0
        %898 = vmatpush2.msra.mxu0 0.0
        %899 = vmatprep.subr.mxu0 0.0
        %900 = vmatpush2.msra.mxu0 0.0
        %901 = vmatprep.subr.mxu0 0.0
        %902 = vmatpush2.msra.mxu0 0.0
        %903 = vmatprep.subr.mxu0 0.0
        %904 = vmatpush2.msra.mxu0 0.0
        %905 = vmatprep.subr.mxu0 0.0
        %906 = vmatpush2.msra.mxu0 0.0
        %907 = vmatprep.subr.mxu0 0.0
        %908 = vmatpush2.msra.mxu0 0.0
        %909 = vmatprep.subr.mxu0 0.0
        %910 = vmatpush2.msra.mxu0 0.0
        %911 = vmatprep.subr.mxu0 0.0
        %912 = vmatpush2.msra.mxu0 0.0
        %913 = vmatprep.subr.mxu0 0.0
        %914 = vmatpush2.msra.mxu0 0.0
        %915 = vmatprep.mubr.f32.mxu0 0.0
        %916 = vmatmul.mubr.f32.gmra.mxu0 %v689
        %v917 = vpop.f32.mrf.mxu0
        %v918 = vadd.f32 %v849, %v917
        %v919 = vpop.f32.mrf.mxu0
        %920 = vdwg.mxu0
        %v921 = vmul.f32 %v758, 0.35355338
        %vm922 = vcmask 64512
        %v924 = vsel %vm922, %v921, 0
        %v927 = vsel %vm922, %v838, 0
        %929 = vmatprep.subr.mxu0 0.0
        %930 = vmatpush1.xpose.msra.mxu0 0.0
        %931 = vmatprep.subr.mxu0 0.0
        %932 = vmatpush1.xpose.msra.mxu0 0.0
        %933 = vmatprep.subr.mxu0 0.0
        %934 = vmatpush1.xpose.msra.mxu0 0.0
        %935 = vmatprep.subr.mxu0 0.0
        %936 = vmatpush1.xpose.msra.mxu0 0.0
        %937 = vmatprep.subr.mxu0 0.0
        %938 = vmatpush1.xpose.msra.mxu0 0.0
        %939 = vmatprep.subr.mxu0 0.0
        %940 = vmatpush1.xpose.msra.mxu0 0.0
        %941 = vmatprep.subr.mxu0 0.0
        %942 = vmatpush1.xpose.msra.mxu0 0.0
        %943 = vmatprep.subr.mxu0 0.0
        %944 = vmatpush1.xpose.msra.mxu0 0.0
        %945 = vmatprep.subr.mxu0 0.0
        %946 = vmatpush1.xpose.msra.mxu0 0.0
        %947 = vmatprep.subr.mxu0 0.0
        %948 = vmatpush1.xpose.msra.mxu0 0.0
        %949 = vmatprep.subr.mxu0 0.0
        %950 = vmatpush1.xpose.msra.mxu0 0.0
        %951 = vmatprep.subr.mxu0 0.0
        %952 = vmatpush1.xpose.msra.mxu0 0.0
        %953 = vmatprep.subr.mxu0 0.0
        %954 = vmatpush1.xpose.msra.mxu0 0.0
        %955 = vmatprep.subr.mxu0 0.0
        %956 = vmatpush1.xpose.msra.mxu0 0.0
        %957 = vmatprep.subr.mxu0 0.0
        %958 = vmatpush1.xpose.msra.mxu0 0.0
        %959 = vmatprep.subr.mxu0 0.0
        %960 = vmatpush1.xpose.msra.mxu0 %v927
        %961 = vmatprep.subr.mxu0 0.0
        %962 = vmatpush2.xpose.msra.mxu0 0.0
        %963 = vmatprep.subr.mxu0 0.0
        %964 = vmatpush2.xpose.msra.mxu0 0.0
        %965 = vmatprep.subr.mxu0 0.0
        %966 = vmatpush2.xpose.msra.mxu0 0.0
        %967 = vmatprep.subr.mxu0 0.0
        %968 = vmatpush2.xpose.msra.mxu0 0.0
        %969 = vmatprep.subr.mxu0 0.0
        %970 = vmatpush2.xpose.msra.mxu0 0.0
        %971 = vmatprep.subr.mxu0 0.0
        %972 = vmatpush2.xpose.msra.mxu0 0.0
        %973 = vmatprep.subr.mxu0 0.0
        %974 = vmatpush2.xpose.msra.mxu0 0.0
        %975 = vmatprep.subr.mxu0 0.0
        %976 = vmatpush2.xpose.msra.mxu0 0.0
        %977 = vmatprep.subr.mxu0 0.0
        %978 = vmatpush2.xpose.msra.mxu0 0.0
        %979 = vmatprep.subr.mxu0 0.0
        %980 = vmatpush2.xpose.msra.mxu0 0.0
        %981 = vmatprep.subr.mxu0 0.0
        %982 = vmatpush2.xpose.msra.mxu0 0.0
        %983 = vmatprep.subr.mxu0 0.0
        %984 = vmatpush2.xpose.msra.mxu0 0.0
        %985 = vmatprep.subr.mxu0 0.0
        %986 = vmatpush2.xpose.msra.mxu0 0.0
        %987 = vmatprep.subr.mxu0 0.0
        %988 = vmatpush2.xpose.msra.mxu0 0.0
        %989 = vmatprep.subr.mxu0 0.0
        %990 = vmatpush2.xpose.msra.mxu0 0.0
        %991 = vmatprep.subr.mxu0 0.0
        %992 = vmatpush2.xpose.msra.mxu0 0.0
        %993 = vmatprep.mubr.f32.mxu0 0.0
        %994 = vmatmul.mubr.f32.gmra.mxu0 %v924
        %v995 = vpop.f32.mrf.mxu0
        %v996 = vadd.f32 0.0, %v995
        %v997 = vpop.f32.mrf.mxu0
        %998 = vdwg.mxu0
        %v999 = vsel %vm922, %v996, -inf
        %1000 = vmax.xlane.f32.xlu0 %v999
        %v1001 = vpop.xlane.xlu0 %1000
        %v1002 = vsub.f32 %v996, %v1001
        %v1003 = vmul.f32 %v1002, 1.442695
        %v1004 = vpow.pop %v1003
        %v1005 = vsel %vm922, %v1004, 0.0
        %1006 = vadd.xlane.f32.xlu0 %v1005
        %v1007 = vpop.xlane.xlu0 %1006
        %v1008 = vrcp.pop %v1007
        %v1009 = vmul.f32 %v1004, %v1008
        %v1011 = vsel %vm922, %v1009, 0
        %1013 = vmatprep.subr.mxu0 0.0
        %1014 = vmatpush1.msra.mxu0 0.0
        %1015 = vmatprep.subr.mxu0 0.0
        %1016 = vmatpush1.msra.mxu0 0.0
        %1017 = vmatprep.subr.mxu0 0.0
        %1018 = vmatpush1.msra.mxu0 0.0
        %1019 = vmatprep.subr.mxu0 0.0
        %1020 = vmatpush1.msra.mxu0 0.0
        %1021 = vmatprep.subr.mxu0 0.0
        %1022 = vmatpush1.msra.mxu0 0.0
        %1023 = vmatprep.subr.mxu0 0.0
        %1024 = vmatpush1.msra.mxu0 0.0
        %1025 = vmatprep.subr.mxu0 0.0
        %1026 = vmatpush1.msra.mxu0 0.0
        %1027 = vmatprep.subr.mxu0 0.0
        %1028 = vmatpush1.msra.mxu0 0.0
        %1029 = vmatprep.subr.mxu0 0.0
        %1030 = vmatpush1.msra.mxu0 0.0
        %1031 = vmatprep.subr.mxu0 0.0
        %1032 = vmatpush1.msra.mxu0 0.0
        %1033 = vmatprep.subr.mxu0 0.0
        %1034 = vmatpush1.msra.mxu0 0.0
        %1035 = vmatprep.subr.mxu0 0.0
        %1036 = vmatpush1.msra.mxu0 0.0
        %1037 = vmatprep.subr.mxu0 0.0
        %1038 = vmatpush1.msra.mxu0 0.0
        %1039 = vmatprep.subr.mxu0 0.0
        %1040 = vmatpush1.msra.mxu0 0.0
        %1041 = vmatprep.subr.mxu0 0.0
        %1042 = vmatpush1.msra.mxu0 0.0
        %1043 = vmatprep.subr.mxu0 0.0
        %1044 = vmatpush1.msra.mxu0 %v918
        %1045 = vmatprep.subr.mxu0 0.0
        %1046 = vmatpush2.msra.mxu0 0.0
        %1047 = vmatprep.subr.mxu0 0.0
        %1048 = vmatpush2.msra.mxu0 0.0
        %1049 = vmatprep.subr.mxu0 0.0
        %1050 = vmatpush2.msra.mxu0 0.0
        %1051 = vmatprep.subr.mxu0 0.0
        %1052 = vmatpush2.msra.mxu0 0.0
        %1053 = vmatprep.subr.mxu0 0.0
        %1054 = vmatpush2.msra.mxu0 0.0
        %1055 = vmatprep.subr.mxu0 0.0
        %1056 = vmatpush2.msra.mxu0 0.0
        %1057 = vmatprep.subr.mxu0 0.0
        %1058 = vmatpush2.msra.mxu0 0.0
        %1059 = vmatprep.subr.mxu0 0.0
        %1060 = vmatpush2.msra.mxu0 0.0
        %1061 = vmatprep.subr.mxu0 0.0
        %1062 = vmatpush2.msra.mxu0 0.0
        %1063 = vmatprep.subr.mxu0 0.0
        %1064 = vmatpush2.msra.mxu0 0.0
        %1065 = vmatprep.subr.mxu0 0.0
        %1066 = vmatpush2.msra.mxu0 0.0
        %1067 = vmatprep.subr.mxu0 0.0
        %1068 = vmatpush2.msra.mxu0 0.0
        %1069 = vmatprep.subr.mxu0 0.0
        %1070 = vmatpush2.msra.mxu0 0.0
        %1071 = vmatprep.subr.mxu0 0.0
        %1072 = vmatpush2.msra.mxu0 0.0
        %1073 = vmatprep.subr.mxu0 0.0
        %1074 = vmatpush2.msra.mxu0 0.0
        %1075 = vmatprep.subr.mxu0 0.0
        %1076 = vmatpush2.msra.mxu0 0.0
        %1077 = vmatprep.mubr.f32.mxu0 0.0
        %1078 = vmatmul.mubr.f32.gmra.mxu0 %v1011
        %v1079 = vpop.f32.mrf.mxu0
        %v1080 = vadd.f32 0.0, %v1079
        %v1081 = vpop.f32.mrf.mxu0
        %1082 = vdwg.mxu0
        %1083 = vrot.lane.b32.xlu0 %v921, 120
        %v1084 = vpop.permute.xlu0 %1083
        %1085 = vrot.lane.b32.xlu0 %v838, 120
        %v1086 = vpop.permute.xlu0 %1085
        %v1087 = vsel %vm922, %v1084, 0
        %v1089 = vsel %vm922, %v1086, 0
        %1091 = vmatprep.subr.mxu0 0.0
        %1092 = vmatpush1.xpose.msra.mxu0 0.0
        %1093 = vmatprep.subr.mxu0 0.0
        %1094 = vmatpush1.xpose.msra.mxu0 0.0
        %1095 = vmatprep.subr.mxu0 0.0
        %1096 = vmatpush1.xpose.msra.mxu0 0.0
        %1097 = vmatprep.subr.mxu0 0.0
        %1098 = vmatpush1.xpose.msra.mxu0 0.0
        %1099 = vmatprep.subr.mxu0 0.0
        %1100 = vmatpush1.xpose.msra.mxu0 0.0
        %1101 = vmatprep.subr.mxu0 0.0
        %1102 = vmatpush1.xpose.msra.mxu0 0.0
        %1103 = vmatprep.subr.mxu0 0.0
        %1104 = vmatpush1.xpose.msra.mxu0 0.0
        %1105 = vmatprep.subr.mxu0 0.0
        %1106 = vmatpush1.xpose.msra.mxu0 0.0
        %1107 = vmatprep.subr.mxu0 0.0
        %1108 = vmatpush1.xpose.msra.mxu0 0.0
        %1109 = vmatprep.subr.mxu0 0.0
        %1110 = vmatpush1.xpose.msra.mxu0 0.0
        %1111 = vmatprep.subr.mxu0 0.0
        %1112 = vmatpush1.xpose.msra.mxu0 0.0
        %1113 = vmatprep.subr.mxu0 0.0
        %1114 = vmatpush1.xpose.msra.mxu0 0.0
        %1115 = vmatprep.subr.mxu0 0.0
        %1116 = vmatpush1.xpose.msra.mxu0 0.0
        %1117 = vmatprep.subr.mxu0 0.0
        %1118 = vmatpush1.xpose.msra.mxu0 0.0
        %1119 = vmatprep.subr.mxu0 0.0
        %1120 = vmatpush1.xpose.msra.mxu0 0.0
        %1121 = vmatprep.subr.mxu0 0.0
        %1122 = vmatpush1.xpose.msra.mxu0 %v1089
        %1123 = vmatprep.subr.mxu0 0.0
        %1124 = vmatpush2.xpose.msra.mxu0 0.0
        %1125 = vmatprep.subr.mxu0 0.0
        %1126 = vmatpush2.xpose.msra.mxu0 0.0
        %1127 = vmatprep.subr.mxu0 0.0
        %1128 = vmatpush2.xpose.msra.mxu0 0.0
        %1129 = vmatprep.subr.mxu0 0.0
        %1130 = vmatpush2.xpose.msra.mxu0 0.0
        %1131 = vmatprep.subr.mxu0 0.0
        %1132 = vmatpush2.xpose.msra.mxu0 0.0
        %1133 = vmatprep.subr.mxu0 0.0
        %1134 = vmatpush2.xpose.msra.mxu0 0.0
        %1135 = vmatprep.subr.mxu0 0.0
        %1136 = vmatpush2.xpose.msra.mxu0 0.0
        %1137 = vmatprep.subr.mxu0 0.0
        %1138 = vmatpush2.xpose.msra.mxu0 0.0
        %1139 = vmatprep.subr.mxu0 0.0
        %1140 = vmatpush2.xpose.msra.mxu0 0.0
        %1141 = vmatprep.subr.mxu0 0.0
        %1142 = vmatpush2.xpose.msra.mxu0 0.0
        %1143 = vmatprep.subr.mxu0 0.0
        %1144 = vmatpush2.xpose.msra.mxu0 0.0
        %1145 = vmatprep.subr.mxu0 0.0
        %1146 = vmatpush2.xpose.msra.mxu0 0.0
        %1147 = vmatprep.subr.mxu0 0.0
        %1148 = vmatpush2.xpose.msra.mxu0 0.0
        %1149 = vmatprep.subr.mxu0 0.0
        %1150 = vmatpush2.xpose.msra.mxu0 0.0
        %1151 = vmatprep.subr.mxu0 0.0
        %1152 = vmatpush2.xpose.msra.mxu0 0.0
        %1153 = vmatprep.subr.mxu0 0.0
        %1154 = vmatpush2.xpose.msra.mxu0 0.0
        %1155 = vmatprep.mubr.f32.mxu0 0.0
        %1156 = vmatmul.mubr.f32.gmra.mxu0 %v1087
        %v1157 = vpop.f32.mrf.mxu0
        %v1158 = vadd.f32 0.0, %v1157
        %v1159 = vpop.f32.mrf.mxu0
        %1160 = vdwg.mxu0
        %v1161 = vsel %vm922, %v1158, -inf
        %1162 = vmax.xlane.f32.xlu0 %v1161
        %v1163 = vpop.xlane.xlu0 %1162
        %v1164 = vsub.f32 %v1158, %v1163
        %v1165 = vmul.f32 %v1164, 1.442695
        %v1166 = vpow.pop %v1165
        %v1167 = vsel %vm922, %v1166, 0.0
        %1168 = vadd.xlane.f32.xlu0 %v1167
        %v1169 = vpop.xlane.xlu0 %1168
        %v1170 = vrcp.pop %v1169
        %v1171 = vmul.f32 %v1166, %v1170
        %1173 = vrot.lane.b32.xlu0 %v918, 120
        %v1174 = vpop.permute.xlu0 %1173
        %v1177 = vsel %vm922, %v1171, 0
        %1179 = vmatprep.subr.mxu0 0.0
        %1180 = vmatpush1.msra.mxu0 0.0
        %1181 = vmatprep.subr.mxu0 0.0
        %1182 = vmatpush1.msra.mxu0 0.0
        %1183 = vmatprep.subr.mxu0 0.0
        %1184 = vmatpush1.msra.mxu0 0.0
        %1185 = vmatprep.subr.mxu0 0.0
        %1186 = vmatpush1.msra.mxu0 0.0
        %1187 = vmatprep.subr.mxu0 0.0
        %1188 = vmatpush1.msra.mxu0 0.0
        %1189 = vmatprep.subr.mxu0 0.0
        %1190 = vmatpush1.msra.mxu0 0.0
        %1191 = vmatprep.subr.mxu0 0.0
        %1192 = vmatpush1.msra.mxu0 0.0
        %1193 = vmatprep.subr.mxu0 0.0
        %1194 = vmatpush1.msra.mxu0 0.0
        %1195 = vmatprep.subr.mxu0 0.0
        %1196 = vmatpush1.msra.mxu0 0.0
        %1197 = vmatprep.subr.mxu0 0.0
        %1198 = vmatpush1.msra.mxu0 0.0
        %1199 = vmatprep.subr.mxu0 0.0
        %1200 = vmatpush1.msra.mxu0 0.0
        %1201 = vmatprep.subr.mxu0 0.0
        %1202 = vmatpush1.msra.mxu0 0.0
        %1203 = vmatprep.subr.mxu0 0.0
        %1204 = vmatpush1.msra.mxu0 0.0
        %1205 = vmatprep.subr.mxu0 0.0
        %1206 = vmatpush1.msra.mxu0 0.0
        %1207 = vmatprep.subr.mxu0 0.0
        %1208 = vmatpush1.msra.mxu0 0.0
        %1209 = vmatprep.subr.mxu0 0.0
        %1210 = vmatpush1.msra.mxu0 %v1174
        %1211 = vmatprep.subr.mxu0 0.0
        %1212 = vmatpush2.msra.mxu0 0.0
        %1213 = vmatprep.subr.mxu0 0.0
        %1214 = vmatpush2.msra.mxu0 0.0
        %1215 = vmatprep.subr.mxu0 0.0
        %1216 = vmatpush2.msra.mxu0 0.0
        %1217 = vmatprep.subr.mxu0 0.0
        %1218 = vmatpush2.msra.mxu0 0.0
        %1219 = vmatprep.subr.mxu0 0.0
        %1220 = vmatpush2.msra.mxu0 0.0
        %1221 = vmatprep.subr.mxu0 0.0
        %1222 = vmatpush2.msra.mxu0 0.0
        %1223 = vmatprep.subr.mxu0 0.0
        %1224 = vmatpush2.msra.mxu0 0.0
        %1225 = vmatprep.subr.mxu0 0.0
        %1226 = vmatpush2.msra.mxu0 0.0
        %1227 = vmatprep.subr.mxu0 0.0
        %1228 = vmatpush2.msra.mxu0 0.0
        %1229 = vmatprep.subr.mxu0 0.0
        %1230 = vmatpush2.msra.mxu0 0.0
        %1231 = vmatprep.subr.mxu0 0.0
        %1232 = vmatpush2.msra.mxu0 0.0
        %1233 = vmatprep.subr.mxu0 0.0
        %1234 = vmatpush2.msra.mxu0 0.0
        %1235 = vmatprep.subr.mxu0 0.0
        %1236 = vmatpush2.msra.mxu0 0.0
        %1237 = vmatprep.subr.mxu0 0.0
        %1238 = vmatpush2.msra.mxu0 0.0
        %1239 = vmatprep.subr.mxu0 0.0
        %1240 = vmatpush2.msra.mxu0 0.0
        %1241 = vmatprep.subr.mxu0 0.0
        %1242 = vmatpush2.msra.mxu0 0.0
        %1243 = vmatprep.mubr.f32.mxu0 0.0
        %1244 = vmatmul.mubr.f32.gmra.mxu0 %v1177
        %v1245 = vpop.f32.mrf.mxu0
        %v1246 = vadd.f32 0.0, %v1245
        %v1247 = vpop.f32.mrf.mxu0
        %1248 = vdwg.mxu0
        %1249 = vrot.lane.b32.xlu0 %v921, 112
        %v1250 = vpop.permute.xlu0 %1249
        %1251 = vrot.lane.b32.xlu0 %v838, 112
        %v1252 = vpop.permute.xlu0 %1251
        %v1253 = vsel %vm922, %v1250, 0
        %v1255 = vsel %vm922, %v1252, 0
        %1257 = vmatprep.subr.mxu0 0.0
        %1258 = vmatpush1.xpose.msra.mxu0 0.0
        %1259 = vmatprep.subr.mxu0 0.0
        %1260 = vmatpush1.xpose.msra.mxu0 0.0
        %1261 = vmatprep.subr.mxu0 0.0
        %1262 = vmatpush1.xpose.msra.mxu0 0.0
        %1263 = vmatprep.subr.mxu0 0.0
        %1264 = vmatpush1.xpose.msra.mxu0 0.0
        %1265 = vmatprep.subr.mxu0 0.0
        %1266 = vmatpush1.xpose.msra.mxu0 0.0
        %1267 = vmatprep.subr.mxu0 0.0
        %1268 = vmatpush1.xpose.msra.mxu0 0.0
        %1269 = vmatprep.subr.mxu0 0.0
        %1270 = vmatpush1.xpose.msra.mxu0 0.0
        %1271 = vmatprep.subr.mxu0 0.0
        %1272 = vmatpush1.xpose.msra.mxu0 0.0
        %1273 = vmatprep.subr.mxu0 0.0
        %1274 = vmatpush1.xpose.msra.mxu0 0.0
        %1275 = vmatprep.subr.mxu0 0.0
        %1276 = vmatpush1.xpose.msra.mxu0 0.0
        %1277 = vmatprep.subr.mxu0 0.0
        %1278 = vmatpush1.xpose.msra.mxu0 0.0
        %1279 = vmatprep.subr.mxu0 0.0
        %1280 = vmatpush1.xpose.msra.mxu0 0.0
        %1281 = vmatprep.subr.mxu0 0.0
        %1282 = vmatpush1.xpose.msra.mxu0 0.0
        %1283 = vmatprep.subr.mxu0 0.0
        %1284 = vmatpush1.xpose.msra.mxu0 0.0
        %1285 = vmatprep.subr.mxu0 0.0
        %1286 = vmatpush1.xpose.msra.mxu0 0.0
        %1287 = vmatprep.subr.mxu0 0.0
        %1288 = vmatpush1.xpose.msra.mxu0 %v1255
        %1289 = vmatprep.subr.mxu0 0.0
        %1290 = vmatpush2.xpose.msra.mxu0 0.0
        %1291 = vmatprep.subr.mxu0 0.0
        %1292 = vmatpush2.xpose.msra.mxu0 0.0
        %1293 = vmatprep.subr.mxu0 0.0
        %1294 = vmatpush2.xpose.msra.mxu0 0.0
        %1295 = vmatprep.subr.mxu0 0.0
        %1296 = vmatpush2.xpose.msra.mxu0 0.0
        %1297 = vmatprep.subr.mxu0 0.0
        %1298 = vmatpush2.xpose.msra.mxu0 0.0
        %1299 = vmatprep.subr.mxu0 0.0
        %1300 = vmatpush2.xpose.msra.mxu0 0.0
        %1301 = vmatprep.subr.mxu0 0.0
        %1302 = vmatpush2.xpose.msra.mxu0 0.0
        %1303 = vmatprep.subr.mxu0 0.0
        %1304 = vmatpush2.xpose.msra.mxu0 0.0
        %1305 = vmatprep.subr.mxu0 0.0
        %1306 = vmatpush2.xpose.msra.mxu0 0.0
        %1307 = vmatprep.subr.mxu0 0.0
        %1308 = vmatpush2.xpose.msra.mxu0 0.0
        %1309 = vmatprep.subr.mxu0 0.0
        %1310 = vmatpush2.xpose.msra.mxu0 0.0
        %1311 = vmatprep.subr.mxu0 0.0
        %1312 = vmatpush2.xpose.msra.mxu0 0.0
        %1313 = vmatprep.subr.mxu0 0.0
        %1314 = vmatpush2.xpose.msra.mxu0 0.0
        %1315 = vmatprep.subr.mxu0 0.0
        %1316 = vmatpush2.xpose.msra.mxu0 0.0
        %1317 = vmatprep.subr.mxu0 0.0
        %1318 = vmatpush2.xpose.msra.mxu0 0.0
        %1319 = vmatprep.subr.mxu0 0.0
        %1320 = vmatpush2.xpose.msra.mxu0 0.0
        %1321 = vmatprep.mubr.f32.mxu0 0.0
        %1322 = vmatmul.mubr.f32.gmra.mxu0 %v1253
        %v1323 = vpop.f32.mrf.mxu0
        %v1324 = vadd.f32 0.0, %v1323
        %v1325 = vpop.f32.mrf.mxu0
        %1326 = vdwg.mxu0
        %v1327 = vsel %vm922, %v1324, -inf
        %1328 = vmax.xlane.f32.xlu0 %v1327
        %v1329 = vpop.xlane.xlu0 %1328
        %v1330 = vsub.f32 %v1324, %v1329
        %v1331 = vmul.f32 %v1330, 1.442695
        %v1332 = vpow.pop %v1331
        %v1333 = vsel %vm922, %v1332, 0.0
        %1334 = vadd.xlane.f32.xlu0 %v1333
        %v1335 = vpop.xlane.xlu0 %1334
        %v1336 = vrcp.pop %v1335
        %v1337 = vmul.f32 %v1332, %v1336
        %1338 = vrot.lane.b32.xlu0 %v918, 112
        %v1339 = vpop.permute.xlu0 %1338
        %v1342 = vsel %vm922, %v1337, 0
        %1344 = vmatprep.subr.mxu0 0.0
        %1345 = vmatpush1.msra.mxu0 0.0
        %1346 = vmatprep.subr.mxu0 0.0
        %1347 = vmatpush1.msra.mxu0 0.0
        %1348 = vmatprep.subr.mxu0 0.0
        %1349 = vmatpush1.msra.mxu0 0.0
        %1350 = vmatprep.subr.mxu0 0.0
        %1351 = vmatpush1.msra.mxu0 0.0
        %1352 = vmatprep.subr.mxu0 0.0
        %1353 = vmatpush1.msra.mxu0 0.0
        %1354 = vmatprep.subr.mxu0 0.0
        %1355 = vmatpush1.msra.mxu0 0.0
        %1356 = vmatprep.subr.mxu0 0.0
        %1357 = vmatpush1.msra.mxu0 0.0
        %1358 = vmatprep.subr.mxu0 0.0
        %1359 = vmatpush1.msra.mxu0 0.0
        %1360 = vmatprep.subr.mxu0 0.0
        %1361 = vmatpush1.msra.mxu0 0.0
        %1362 = vmatprep.subr.mxu0 0.0
        %1363 = vmatpush1.msra.mxu0 0.0
        %1364 = vmatprep.subr.mxu0 0.0
        %1365 = vmatpush1.msra.mxu0 0.0
        %1366 = vmatprep.subr.mxu0 0.0
        %1367 = vmatpush1.msra.mxu0 0.0
        %1368 = vmatprep.subr.mxu0 0.0
        %1369 = vmatpush1.msra.mxu0 0.0
        %1370 = vmatprep.subr.mxu0 0.0
        %1371 = vmatpush1.msra.mxu0 0.0
        %1372 = vmatprep.subr.mxu0 0.0
        %1373 = vmatpush1.msra.mxu0 0.0
        %1374 = vmatprep.subr.mxu0 0.0
        %1375 = vmatpush1.msra.mxu0 %v1339
        %1376 = vmatprep.subr.mxu0 0.0
        %1377 = vmatpush2.msra.mxu0 0.0
        %1378 = vmatprep.subr.mxu0 0.0
        %1379 = vmatpush2.msra.mxu0 0.0
        %1380 = vmatprep.subr.mxu0 0.0
        %1381 = vmatpush2.msra.mxu0 0.0
        %1382 = vmatprep.subr.mxu0 0.0
        %1383 = vmatpush2.msra.mxu0 0.0
        %1384 = vmatprep.subr.mxu0 0.0
        %1385 = vmatpush2.msra.mxu0 0.0
        %1386 = vmatprep.subr.mxu0 0.0
        %1387 = vmatpush2.msra.mxu0 0.0
        %1388 = vmatprep.subr.mxu0 0.0
        %1389 = vmatpush2.msra.mxu0 0.0
        %1390 = vmatprep.subr.mxu0 0.0
        %1391 = vmatpush2.msra.mxu0 0.0
        %1392 = vmatprep.subr.mxu0 0.0
        %1393 = vmatpush2.msra.mxu0 0.0
        %1394 = vmatprep.subr.mxu0 0.0
        %1395 = vmatpush2.msra.mxu0 0.0
        %1396 = vmatprep.subr.mxu0 0.0
        %1397 = vmatpush2.msra.mxu0 0.0
        %1398 = vmatprep.subr.mxu0 0.0
        %1399 = vmatpush2.msra.mxu0 0.0
        %1400 = vmatprep.subr.mxu0 0.0
        %1401 = vmatpush2.msra.mxu0 0.0
        %1402 = vmatprep.subr.mxu0 0.0
        %1403 = vmatpush2.msra.mxu0 0.0
        %1404 = vmatprep.subr.mxu0 0.0
        %1405 = vmatpush2.msra.mxu0 0.0
        %1406 = vmatprep.subr.mxu0 0.0
        %1407 = vmatpush2.msra.mxu0 0.0
        %1408 = vmatprep.mubr.f32.mxu0 0.0
        %1409 = vmatmul.mubr.f32.gmra.mxu0 %v1342
        %v1410 = vpop.f32.mrf.mxu0
        %v1411 = vadd.f32 0.0, %v1410
        %v1412 = vpop.f32.mrf.mxu0
        %1413 = vdwg.mxu0
        %1415 = vrot.lane.b32.xlu0 %v1246, 8
        %v1416 = vpop.permute.xlu0 %1415
        %1419 = vrot.lane.b32.xlu0 %v1411, 16
        %v1420 = vpop.permute.xlu0 %1419
        %v1422 = vsel %vm922, %v1080, %v1416
        %vm1423 = vcmask 130048
        %v1424 = vsel %vm1423, %v1422, %v1420
        %v1425 = vld [vmem:[#allocation7] sm:$0xff]
        %v1426 = vld [vmem:[#allocation7 + $0x8] sm:$0xff]
        %v1427 = vld [vmem:[#allocation7 + $0x10] sm:$0xff]
        %v1428 = vld [vmem:[%s8] sm:$0x1]
        %v1430 = vlaneseq
        %v1431 = vshrl.u32 %v1430, 7
        %v1432 = vsub.s32 0, %v1431
        %v1433 = vrot.slane %v1428, %v1432
        %v1436 = vsel %vm687, %v1424, 0
        %1438 = vmatprep.subr.mxu0 0.0
        %1439 = vmatpush1.msra.mxu0 0.0
        %1440 = vmatprep.subr.mxu0 0.0
        %1441 = vmatpush1.msra.mxu0 0.0
        %1442 = vmatprep.subr.mxu0 0.0
        %1443 = vmatpush1.msra.mxu0 0.0
        %1444 = vmatprep.subr.mxu0 0.0
        %1445 = vmatpush1.msra.mxu0 0.0
        %1446 = vmatprep.subr.mxu0 0.0
        %1447 = vmatpush1.msra.mxu0 0.0
        %1448 = vmatprep.subr.mxu0 0.0
        %1449 = vmatpush1.msra.mxu0 0.0
        %1450 = vmatprep.subr.mxu0 0.0
        %1451 = vmatpush1.msra.mxu0 0.0
        %1452 = vmatprep.subr.mxu0 0.0
        %1453 = vmatpush1.msra.mxu0 0.0
        %1454 = vmatprep.subr.mxu0 0.0
        %1455 = vmatpush1.msra.mxu0 0.0
        %1456 = vmatprep.subr.mxu0 0.0
        %1457 = vmatpush1.msra.mxu0 0.0
        %1458 = vmatprep.subr.mxu0 0.0
        %1459 = vmatpush1.msra.mxu0 0.0
        %1460 = vmatprep.subr.mxu0 0.0
        %1461 = vmatpush1.msra.mxu0 0.0
        %1462 = vmatprep.subr.mxu0 0.0
        %1463 = vmatpush1.msra.mxu0 0.0
        %1464 = vmatprep.subr.mxu0 0.0
        %1465 = vmatpush1.msra.mxu0 %v1427
        %1466 = vmatprep.subr.mxu0 0.0
        %1467 = vmatpush1.msra.mxu0 %v1426
        %1468 = vmatprep.subr.mxu0 0.0
        %1469 = vmatpush1.msra.mxu0 %v1425
        %1470 = vmatprep.subr.mxu0 0.0
        %1471 = vmatpush2.msra.mxu0 0.0
        %1472 = vmatprep.subr.mxu0 0.0
        %1473 = vmatpush2.msra.mxu0 0.0
        %1474 = vmatprep.subr.mxu0 0.0
        %1475 = vmatpush2.msra.mxu0 0.0
        %1476 = vmatprep.subr.mxu0 0.0
        %1477 = vmatpush2.msra.mxu0 0.0
        %1478 = vmatprep.subr.mxu0 0.0
        %1479 = vmatpush2.msra.mxu0 0.0
        %1480 = vmatprep.subr.mxu0 0.0
        %1481 = vmatpush2.msra.mxu0 0.0
        %1482 = vmatprep.subr.mxu0 0.0
        %1483 = vmatpush2.msra.mxu0 0.0
        %1484 = vmatprep.subr.mxu0 0.0
        %1485 = vmatpush2.msra.mxu0 0.0
        %1486 = vmatprep.subr.mxu0 0.0
        %1487 = vmatpush2.msra.mxu0 0.0
        %1488 = vmatprep.subr.mxu0 0.0
        %1489 = vmatpush2.msra.mxu0 0.0
        %1490 = vmatprep.subr.mxu0 0.0
        %1491 = vmatpush2.msra.mxu0 0.0
        %1492 = vmatprep.subr.mxu0 0.0
        %1493 = vmatpush2.msra.mxu0 0.0
        %1494 = vmatprep.subr.mxu0 0.0
        %1495 = vmatpush2.msra.mxu0 0.0
        %1496 = vmatprep.subr.mxu0 0.0
        %1497 = vmatpush2.msra.mxu0 0.0
        %1498 = vmatprep.subr.mxu0 0.0
        %1499 = vmatpush2.msra.mxu0 0.0
        %1500 = vmatprep.subr.mxu0 0.0
        %1501 = vmatpush2.msra.mxu0 0.0
        %1502 = vmatprep.mubr.f32.mxu0 0.0
        %1503 = vmatmul.mubr.f32.gmra.mxu0 %v1436
        %v1504 = vpop.f32.mrf.mxu0
        %v1505 = vadd.f32 %v1433, %v1504
        %v1506 = vpop.f32.mrf.mxu0
        %1507 = vdwg.mxu0
        %v1508 = vadd.f32 %v676, %v1505
        %v1509 = vld [vmem:[%s9] sm:$0x1]
        %v1510 = vld [vmem:[%s10] sm:$0x1]
        %v1511 = vsel %vm687, %v1508, 0.0
        %1512 = vadd.xlane.f32.xlu0 %v1511
        %v1513 = vpop.xlane.xlu0 %1512
        %v1514 = vrcp.pop 24.0
        %v1515 = vmul.f32 %v1513, %v1514
        %v1516 = vsub.f32 %v1508, %v1515
        %v1517 = vmul.f32 %v1516, %v1516
        %v1518 = vsel %vm687, %v1517, 0.0
        %1519 = vadd.xlane.f32.xlu0 %v1518
        %v1520 = vpop.xlane.xlu0 %1519
        %v1521 = vmul.f32 %v1520, %v1514
        %v1522 = vadd.f32 %v1521, 1e-05
        %v1523 = vrsqrt.pop %v1522
        %v1524 = vmul.f32 %v1516, %v1523
        %v1526 = vlaneseq
        %v1527 = vshrl.u32 %v1526, 7
        %v1528 = vsub.s32 0, %v1527
        %v1529 = vrot.slane %v1509, %v1528
        %v1531 = vmul.f32 %v1524, %v1529
        %v1533 = vlaneseq
        %v1534 = vshrl.u32 %v1533, 7
        %v1535 = vsub.s32 0, %v1534
        %v1536 = vrot.slane %v1510, %v1535
        %v1538 = vadd.f32 %v1531, %v1536
        %v1539 = vld [vmem:[#allocation9] sm:$0xff]
        %v1540 = vld [vmem:[#allocation9 + $0x8] sm:$0xff]
        %v1541 = vld [vmem:[#allocation9 + $0x10] sm:$0xff]
        %v1542 = vld [vmem:[%s12] sm:$0x1]
        %v1544 = vlaneseq
        %v1545 = vshrl.u32 %v1544, 7
        %v1546 = vsub.s32 0, %v1545
        %v1547 = vrot.slane %v1542, %v1546
        %v1550 = vsel %vm687, %v1538, 0
        %1552 = vmatprep.subr.mxu0 0.0
        %1553 = vmatpush1.msra.mxu0 0.0
        %1554 = vmatprep.subr.mxu0 0.0
        %1555 = vmatpush1.msra.mxu0 0.0
        %1556 = vmatprep.subr.mxu0 0.0
        %1557 = vmatpush1.msra.mxu0 0.0
        %1558 = vmatprep.subr.mxu0 0.0
        %1559 = vmatpush1.msra.mxu0 0.0
        %1560 = vmatprep.subr.mxu0 0.0
        %1561 = vmatpush1.msra.mxu0 0.0
        %1562 = vmatprep.subr.mxu0 0.0
        %1563 = vmatpush1.msra.mxu0 0.0
        %1564 = vmatprep.subr.mxu0 0.0
        %1565 = vmatpush1.msra.mxu0 0.0
        %1566 = vmatprep.subr.mxu0 0.0
        %1567 = vmatpush1.msra.mxu0 0.0
        %1568 = vmatprep.subr.mxu0 0.0
        %1569 = vmatpush1.msra.mxu0 0.0
        %1570 = vmatprep.subr.mxu0 0.0
        %1571 = vmatpush1.msra.mxu0 0.0
        %1572 = vmatprep.subr.mxu0 0.0
        %1573 = vmatpush1.msra.mxu0 0.0
        %1574 = vmatprep.subr.mxu0 0.0
        %1575 = vmatpush1.msra.mxu0 0.0
        %1576 = vmatprep.subr.mxu0 0.0
        %1577 = vmatpush1.msra.mxu0 0.0
        %1578 = vmatprep.subr.mxu0 0.0
        %1579 = vmatpush1.msra.mxu0 %v1541
        %1580 = vmatprep.subr.mxu0 0.0
        %1581 = vmatpush1.msra.mxu0 %v1540
        %1582 = vmatprep.subr.mxu0 0.0
        %1583 = vmatpush1.msra.mxu0 %v1539
        %1584 = vmatprep.subr.mxu0 0.0
        %1585 = vmatpush2.msra.mxu0 0.0
        %1586 = vmatprep.subr.mxu0 0.0
        %1587 = vmatpush2.msra.mxu0 0.0
        %1588 = vmatprep.subr.mxu0 0.0
        %1589 = vmatpush2.msra.mxu0 0.0
        %1590 = vmatprep.subr.mxu0 0.0
        %1591 = vmatpush2.msra.mxu0 0.0
        %1592 = vmatprep.subr.mxu0 0.0
        %1593 = vmatpush2.msra.mxu0 0.0
        %1594 = vmatprep.subr.mxu0 0.0
        %1595 = vmatpush2.msra.mxu0 0.0
        %1596 = vmatprep.subr.mxu0 0.0
        %1597 = vmatpush2.msra.mxu0 0.0
        %1598 = vmatprep.subr.mxu0 0.0
        %1599 = vmatpush2.msra.mxu0 0.0
        %1600 = vmatprep.subr.mxu0 0.0
        %1601 = vmatpush2.msra.mxu0 0.0
        %1602 = vmatprep.subr.mxu0 0.0
        %1603 = vmatpush2.msra.mxu0 0.0
        %1604 = vmatprep.subr.mxu0 0.0
        %1605 = vmatpush2.msra.mxu0 0.0
        %1606 = vmatprep.subr.mxu0 0.0
        %1607 = vmatpush2.msra.mxu0 0.0
        %1608 = vmatprep.subr.mxu0 0.0
        %1609 = vmatpush2.msra.mxu0 0.0
        %1610 = vmatprep.subr.mxu0 0.0
        %1611 = vmatpush2.msra.mxu0 0.0
        %1612 = vmatprep.subr.mxu0 0.0
        %1613 = vmatpush2.msra.mxu0 0.0
        %1614 = vmatprep.subr.mxu0 0.0
        %1615 = vmatpush2.msra.mxu0 0.0
        %1616 = vmatprep.mubr.f32.mxu0 0.0
        %1617 = vmatmul.mubr.f32.gmra.mxu0 %v1550
        %v1618 = vpop.f32.mrf.mxu0
        %v1619 = vadd.f32 %v1547, %v1618
        %v1620 = vpop.f32.mrf.mxu0
        %1621 = vdwg.mxu0
        %v1622 = vmax.f32 %v1619, 0.0
        %v1623 = vld [vmem:[%s13] sm:$0xff]
        %v1624 = vld [vmem:[%s13 + $0x8] sm:$0xff]
        %v1625 = vld [vmem:[%s13 + $0x10] sm:$0xff]
        %v1626 = vld [vmem:[%s13 + $0x18] sm:$0xff]
        %v1627 = vld [vmem:[%s14] sm:$0x1]
        %v1629 = vlaneseq
        %v1630 = vshrl.u32 %v1629, 7
        %v1631 = vsub.s32 0, %v1630
        %v1632 = vrot.slane %v1627, %v1631
        %vm1634 = vcmask 261120
        %v1636 = vsel %vm1634, %v1622, 0
        %1638 = vmatprep.subr.mxu0 0.0
        %1639 = vmatpush1.msra.mxu0 0.0
        %1640 = vmatprep.subr.mxu0 0.0
        %1641 = vmatpush1.msra.mxu0 0.0
        %1642 = vmatprep.subr.mxu0 0.0
        %1643 = vmatpush1.msra.mxu0 0.0
        %1644 = vmatprep.subr.mxu0 0.0
        %1645 = vmatpush1.msra.mxu0 0.0
        %1646 = vmatprep.subr.mxu0 0.0
        %1647 = vmatpush1.msra.mxu0 0.0
        %1648 = vmatprep.subr.mxu0 0.0
        %1649 = vmatpush1.msra.mxu0 0.0
        %1650 = vmatprep.subr.mxu0 0.0
        %1651 = vmatpush1.msra.mxu0 0.0
        %1652 = vmatprep.subr.mxu0 0.0
        %1653 = vmatpush1.msra.mxu0 0.0
        %1654 = vmatprep.subr.mxu0 0.0
        %1655 = vmatpush1.msra.mxu0 0.0
        %1656 = vmatprep.subr.mxu0 0.0
        %1657 = vmatpush1.msra.mxu0 0.0
        %1658 = vmatprep.subr.mxu0 0.0
        %1659 = vmatpush1.msra.mxu0 0.0
        %1660 = vmatprep.subr.mxu0 0.0
        %1661 = vmatpush1.msra.mxu0 0.0
        %1662 = vmatprep.subr.mxu0 0.0
        %1663 = vmatpush1.msra.mxu0 %v1626
        %1664 = vmatprep.subr.mxu0 0.0
        %1665 = vmatpush1.msra.mxu0 %v1625
        %1666 = vmatprep.subr.mxu0 0.0
        %1667 = vmatpush1.msra.mxu0 %v1624
        %1668 = vmatprep.subr.mxu0 0.0
        %1669 = vmatpush1.msra.mxu0 %v1623
        %1670 = vmatprep.subr.mxu0 0.0
        %1671 = vmatpush2.msra.mxu0 0.0
        %1672 = vmatprep.subr.mxu0 0.0
        %1673 = vmatpush2.msra.mxu0 0.0
        %1674 = vmatprep.subr.mxu0 0.0
        %1675 = vmatpush2.msra.mxu0 0.0
        %1676 = vmatprep.subr.mxu0 0.0
        %1677 = vmatpush2.msra.mxu0 0.0
        %1678 = vmatprep.subr.mxu0 0.0
        %1679 = vmatpush2.msra.mxu0 0.0
        %1680 = vmatprep.subr.mxu0 0.0
        %1681 = vmatpush2.msra.mxu0 0.0
        %1682 = vmatprep.subr.mxu0 0.0
        %1683 = vmatpush2.msra.mxu0 0.0
        %1684 = vmatprep.subr.mxu0 0.0
        %1685 = vmatpush2.msra.mxu0 0.0
        %1686 = vmatprep.subr.mxu0 0.0
        %1687 = vmatpush2.msra.mxu0 0.0
        %1688 = vmatprep.subr.mxu0 0.0
        %1689 = vmatpush2.msra.mxu0 0.0
        %1690 = vmatprep.subr.mxu0 0.0
        %1691 = vmatpush2.msra.mxu0 0.0
        %1692 = vmatprep.subr.mxu0 0.0
        %1693 = vmatpush2.msra.mxu0 0.0
        %1694 = vmatprep.subr.mxu0 0.0
        %1695 = vmatpush2.msra.mxu0 0.0
        %1696 = vmatprep.subr.mxu0 0.0
        %1697 = vmatpush2.msra.mxu0 0.0
        %1698 = vmatprep.subr.mxu0 0.0
        %1699 = vmatpush2.msra.mxu0 0.0
        %1700 = vmatprep.subr.mxu0 0.0
        %1701 = vmatpush2.msra.mxu0 0.0
        %1702 = vmatprep.mubr.f32.mxu0 0.0
        %1703 = vmatmul.mubr.f32.gmra.mxu0 %v1636
        %v1704 = vpop.f32.mrf.mxu0
        %v1705 = vadd.f32 %v1632, %v1704
        %v1706 = vpop.f32.mrf.mxu0
        %1707 = vdwg.mxu0
        %v1708 = vadd.f32 %v1538, %v1705
        %v1709 = vld [vmem:[%s15] sm:$0x1]
        %v1710 = vld [vmem:[%s16] sm:$0x1]
        %v1711 = vsel %vm687, %v1708, 0.0
        %1712 = vadd.xlane.f32.xlu0 %v1711
        %v1713 = vpop.xlane.xlu0 %1712
        %v1714 = vmul.f32 %v1713, %v1514
        %v1715 = vsub.f32 %v1708, %v1714
        %v1716 = vmul.f32 %v1715, %v1715
        %v1717 = vsel %vm687, %v1716, 0.0
        %1718 = vadd.xlane.f32.xlu0 %v1717
        %v1719 = vpop.xlane.xlu0 %1718
        %v1720 = vmul.f32 %v1719, %v1514
        %v1721 = vadd.f32 %v1720, 1e-05
        %v1722 = vrsqrt.pop %v1721
        %v1723 = vmul.f32 %v1715, %v1722
        %v1725 = vlaneseq
        %v1726 = vshrl.u32 %v1725, 7
        %v1727 = vsub.s32 0, %v1726
        %v1728 = vrot.slane %v1709, %v1727
        %v1730 = vmul.f32 %v1723, %v1728
        %v1732 = vlaneseq
        %v1733 = vshrl.u32 %v1732, 7
        %v1734 = vsub.s32 0, %v1733
        %v1735 = vrot.slane %v1710, %v1734
        %v1737 = vadd.f32 %v1730, %v1735
        %s1738 = scalar_lea.vmem %s1, 24
        %v1739 = vld [vmem:[%s1738] sm:$0xff]
        %v1740 = vld [vmem:[%s1738 + $0x8] sm:$0xff]
        %v1741 = vld [vmem:[%s1738 + $0x10] sm:$0xff]
        %s1742 = scalar_lea.vmem [#allocation4], 1
        %v1743 = vld [vmem:[%s1742] sm:$0x1]
        %v1745 = vlaneseq
        %v1746 = vshrl.u32 %v1745, 7
        %v1747 = vsub.s32 0, %v1746
        %v1748 = vrot.slane %v1743, %v1747
        %v1751 = vsel %vm687, %v1737, 0
        %1753 = vmatprep.subr.mxu0 0.0
        %1754 = vmatpush1.msra.mxu0 0.0
        %1755 = vmatprep.subr.mxu0 0.0
        %1756 = vmatpush1.msra.mxu0 0.0
        %1757 = vmatprep.subr.mxu0 0.0
        %1758 = vmatpush1.msra.mxu0 0.0
        %1759 = vmatprep.subr.mxu0 0.0
        %1760 = vmatpush1.msra.mxu0 0.0
        %1761 = vmatprep.subr.mxu0 0.0
        %1762 = vmatpush1.msra.mxu0 0.0
        %1763 = vmatprep.subr.mxu0 0.0
        %1764 = vmatpush1.msra.mxu0 0.0
        %1765 = vmatprep.subr.mxu0 0.0
        %1766 = vmatpush1.msra.mxu0 0.0
        %1767 = vmatprep.subr.mxu0 0.0
        %1768 = vmatpush1.msra.mxu0 0.0
        %1769 = vmatprep.subr.mxu0 0.0
        %1770 = vmatpush1.msra.mxu0 0.0
        %1771 = vmatprep.subr.mxu0 0.0
        %1772 = vmatpush1.msra.mxu0 0.0
        %1773 = vmatprep.subr.mxu0 0.0
        %1774 = vmatpush1.msra.mxu0 0.0
        %1775 = vmatprep.subr.mxu0 0.0
        %1776 = vmatpush1.msra.mxu0 0.0
        %1777 = vmatprep.subr.mxu0 0.0
        %1778 = vmatpush1.msra.mxu0 0.0
        %1779 = vmatprep.subr.mxu0 0.0
        %1780 = vmatpush1.msra.mxu0 %v1741
        %1781 = vmatprep.subr.mxu0 0.0
        %1782 = vmatpush1.msra.mxu0 %v1740
        %1783 = vmatprep.subr.mxu0 0.0
        %1784 = vmatpush1.msra.mxu0 %v1739
        %1785 = vmatprep.subr.mxu0 0.0
        %1786 = vmatpush2.msra.mxu0 0.0
        %1787 = vmatprep.subr.mxu0 0.0
        %1788 = vmatpush2.msra.mxu0 0.0
        %1789 = vmatprep.subr.mxu0 0.0
        %1790 = vmatpush2.msra.mxu0 0.0
        %1791 = vmatprep.subr.mxu0 0.0
        %1792 = vmatpush2.msra.mxu0 0.0
        %1793 = vmatprep.subr.mxu0 0.0
        %1794 = vmatpush2.msra.mxu0 0.0
        %1795 = vmatprep.subr.mxu0 0.0
        %1796 = vmatpush2.msra.mxu0 0.0
        %1797 = vmatprep.subr.mxu0 0.0
        %1798 = vmatpush2.msra.mxu0 0.0
        %1799 = vmatprep.subr.mxu0 0.0
        %1800 = vmatpush2.msra.mxu0 0.0
        %1801 = vmatprep.subr.mxu0 0.0
        %1802 = vmatpush2.msra.mxu0 0.0
        %1803 = vmatprep.subr.mxu0 0.0
        %1804 = vmatpush2.msra.mxu0 0.0
        %1805 = vmatprep.subr.mxu0 0.0
        %1806 = vmatpush2.msra.mxu0 0.0
        %1807 = vmatprep.subr.mxu0 0.0
        %1808 = vmatpush2.msra.mxu0 0.0
        %1809 = vmatprep.subr.mxu0 0.0
        %1810 = vmatpush2.msra.mxu0 0.0
        %1811 = vmatprep.subr.mxu0 0.0
        %1812 = vmatpush2.msra.mxu0 0.0
        %1813 = vmatprep.subr.mxu0 0.0
        %1814 = vmatpush2.msra.mxu0 0.0
        %1815 = vmatprep.subr.mxu0 0.0
        %1816 = vmatpush2.msra.mxu0 0.0
        %1817 = vmatprep.mubr.f32.mxu0 0.0
        %1818 = vmatmul.mubr.f32.gmra.mxu0 %v1751
        %v1819 = vpop.f32.mrf.mxu0
        %v1820 = vadd.f32 %v1748, %v1819
        %v1821 = vpop.f32.mrf.mxu0
        %1822 = vdwg.mxu0
        %s1823 = scalar_lea.vmem %s2, 24
        %v1824 = vld [vmem:[%s1823] sm:$0xff]
        %v1825 = vld [vmem:[%s1823 + $0x8] sm:$0xff]
        %v1826 = vld [vmem:[%s1823 + $0x10] sm:$0xff]
        %s1827 = scalar_lea.vmem [#allocation6], 1
        %v1828 = vld [vmem:[%s1827] sm:$0x1]
        %v1830 = vlaneseq
        %v1831 = vshrl.u32 %v1830, 7
        %v1832 = vsub.s32 0, %v1831
        %v1833 = vrot.slane %v1828, %v1832
        %1835 = vmatprep.subr.mxu0 0.0
        %1836 = vmatpush1.msra.mxu0 0.0
        %1837 = vmatprep.subr.mxu0 0.0
        %1838 = vmatpush1.msra.mxu0 0.0
        %1839 = vmatprep.subr.mxu0 0.0
        %1840 = vmatpush1.msra.mxu0 0.0
        %1841 = vmatprep.subr.mxu0 0.0
        %1842 = vmatpush1.msra.mxu0 0.0
        %1843 = vmatprep.subr.mxu0 0.0
        %1844 = vmatpush1.msra.mxu0 0.0
        %1845 = vmatprep.subr.mxu0 0.0
        %1846 = vmatpush1.msra.mxu0 0.0
        %1847 = vmatprep.subr.mxu0 0.0
        %1848 = vmatpush1.msra.mxu0 0.0
        %1849 = vmatprep.subr.mxu0 0.0
        %1850 = vmatpush1.msra.mxu0 0.0
        %1851 = vmatprep.subr.mxu0 0.0
        %1852 = vmatpush1.msra.mxu0 0.0
        %1853 = vmatprep.subr.mxu0 0.0
        %1854 = vmatpush1.msra.mxu0 0.0
        %1855 = vmatprep.subr.mxu0 0.0
        %1856 = vmatpush1.msra.mxu0 0.0
        %1857 = vmatprep.subr.mxu0 0.0
        %1858 = vmatpush1.msra.mxu0 0.0
        %1859 = vmatprep.subr.mxu0 0.0
        %1860 = vmatpush1.msra.mxu0 0.0
        %1861 = vmatprep.subr.mxu0 0.0
        %1862 = vmatpush1.msra.mxu0 %v1826
        %1863 = vmatprep.subr.mxu0 0.0
        %1864 = vmatpush1.msra.mxu0 %v1825
        %1865 = vmatprep.subr.mxu0 0.0
        %1866 = vmatpush1.msra.mxu0 %v1824
        %1867 = vmatprep.subr.mxu0 0.0
        %1868 = vmatpush2.msra.mxu0 0.0
        %1869 = vmatprep.subr.mxu0 0.0
        %1870 = vmatpush2.msra.mxu0 0.0
        %1871 = vmatprep.subr.mxu0 0.0
        %1872 = vmatpush2.msra.mxu0 0.0
        %1873 = vmatprep.subr.mxu0 0.0
        %1874 = vmatpush2.msra.mxu0 0.0
        %1875 = vmatprep.subr.mxu0 0.0
        %1876 = vmatpush2.msra.mxu0 0.0
        %1877 = vmatprep.subr.mxu0 0.0
        %1878 = vmatpush2.msra.mxu0 0.0
        %1879 = vmatprep.subr.mxu0 0.0
        %1880 = vmatpush2.msra.mxu0 0.0
        %1881 = vmatprep.subr.mxu0 0.0
        %1882 = vmatpush2.msra.mxu0 0.0
        %1883 = vmatprep.subr.mxu0 0.0
        %1884 = vmatpush2.msra.mxu0 0.0
        %1885 = vmatprep.subr.mxu0 0.0
        %1886 = vmatpush2.msra.mxu0 0.0
        %1887 = vmatprep.subr.mxu0 0.0
        %1888 = vmatpush2.msra.mxu0 0.0
        %1889 = vmatprep.subr.mxu0 0.0
        %1890 = vmatpush2.msra.mxu0 0.0
        %1891 = vmatprep.subr.mxu0 0.0
        %1892 = vmatpush2.msra.mxu0 0.0
        %1893 = vmatprep.subr.mxu0 0.0
        %1894 = vmatpush2.msra.mxu0 0.0
        %1895 = vmatprep.subr.mxu0 0.0
        %1896 = vmatpush2.msra.mxu0 0.0
        %1897 = vmatprep.subr.mxu0 0.0
        %1898 = vmatpush2.msra.mxu0 0.0
        %1899 = vmatprep.mubr.f32.mxu0 0.0
        %1900 = vmatmul.mubr.f32.gmra.mxu0 %v1751
        %v1901 = vpop.f32.mrf.mxu0
        %v1902 = vadd.f32 %v1833, %v1901
        %v1903 = vpop.f32.mrf.mxu0
        %1904 = vdwg.mxu0
        %s1905 = scalar_lea.vmem %s3, 24
        %v1906 = vld [vmem:[%s1905] sm:$0xff]
        %v1907 = vld [vmem:[%s1905 + $0x8] sm:$0xff]
        %v1908 = vld [vmem:[%s1905 + $0x10] sm:$0xff]
        %s1909 = scalar_lea.vmem %s6, 1
        %v1910 = vld [vmem:[%s1909] sm:$0x1]
        %v1912 = vlaneseq
        %v1913 = vshrl.u32 %v1912, 7
        %v1914 = vsub.s32 0, %v1913
        %v1915 = vrot.slane %v1910, %v1914
        %1917 = vmatprep.subr.mxu0 0.0
        %1918 = vmatpush1.msra.mxu0 0.0
        %1919 = vmatprep.subr.mxu0 0.0
        %1920 = vmatpush1.msra.mxu0 0.0
        %1921 = vmatprep.subr.mxu0 0.0
        %1922 = vmatpush1.msra.mxu0 0.0
        %1923 = vmatprep.subr.mxu0 0.0
        %1924 = vmatpush1.msra.mxu0 0.0
        %1925 = vmatprep.subr.mxu0 0.0
        %1926 = vmatpush1.msra.mxu0 0.0
        %1927 = vmatprep.subr.mxu0 0.0
        %1928 = vmatpush1.msra.mxu0 0.0
        %1929 = vmatprep.subr.mxu0 0.0
        %1930 = vmatpush1.msra.mxu0 0.0
        %1931 = vmatprep.subr.mxu0 0.0
        %1932 = vmatpush1.msra.mxu0 0.0
        %1933 = vmatprep.subr.mxu0 0.0
        %1934 = vmatpush1.msra.mxu0 0.0
        %1935 = vmatprep.subr.mxu0 0.0
        %1936 = vmatpush1.msra.mxu0 0.0
        %1937 = vmatprep.subr.mxu0 0.0
        %1938 = vmatpush1.msra.mxu0 0.0
        %1939 = vmatprep.subr.mxu0 0.0
        %1940 = vmatpush1.msra.mxu0 0.0
        %1941 = vmatprep.subr.mxu0 0.0
        %1942 = vmatpush1.msra.mxu0 0.0
        %1943 = vmatprep.subr.mxu0 0.0
        %1944 = vmatpush1.msra.mxu0 %v1908
        %1945 = vmatprep.subr.mxu0 0.0
        %1946 = vmatpush1.msra.mxu0 %v1907
        %1947 = vmatprep.subr.mxu0 0.0
        %1948 = vmatpush1.msra.mxu0 %v1906
        %1949 = vmatprep.subr.mxu0 0.0
        %1950 = vmatpush2.msra.mxu0 0.0
        %1951 = vmatprep.subr.mxu0 0.0
        %1952 = vmatpush2.msra.mxu0 0.0
        %1953 = vmatprep.subr.mxu0 0.0
        %1954 = vmatpush2.msra.mxu0 0.0
        %1955 = vmatprep.subr.mxu0 0.0
        %1956 = vmatpush2.msra.mxu0 0.0
        %1957 = vmatprep.subr.mxu0 0.0
        %1958 = vmatpush2.msra.mxu0 0.0
        %1959 = vmatprep.subr.mxu0 0.0
        %1960 = vmatpush2.msra.mxu0 0.0
        %1961 = vmatprep.subr.mxu0 0.0
        %1962 = vmatpush2.msra.mxu0 0.0
        %1963 = vmatprep.subr.mxu0 0.0
        %1964 = vmatpush2.msra.mxu0 0.0
        %1965 = vmatprep.subr.mxu0 0.0
        %1966 = vmatpush2.msra.mxu0 0.0
        %1967 = vmatprep.subr.mxu0 0.0
        %1968 = vmatpush2.msra.mxu0 0.0
        %1969 = vmatprep.subr.mxu0 0.0
        %1970 = vmatpush2.msra.mxu0 0.0
        %1971 = vmatprep.subr.mxu0 0.0
        %1972 = vmatpush2.msra.mxu0 0.0
        %1973 = vmatprep.subr.mxu0 0.0
        %1974 = vmatpush2.msra.mxu0 0.0
        %1975 = vmatprep.subr.mxu0 0.0
        %1976 = vmatpush2.msra.mxu0 0.0
        %1977 = vmatprep.subr.mxu0 0.0
        %1978 = vmatpush2.msra.mxu0 0.0
        %1979 = vmatprep.subr.mxu0 0.0
        %1980 = vmatpush2.msra.mxu0 0.0
        %1981 = vmatprep.mubr.f32.mxu0 0.0
        %1982 = vmatmul.mubr.f32.gmra.mxu0 %v1751
        %v1983 = vpop.f32.mrf.mxu0
        %v1984 = vadd.f32 %v1915, %v1983
        %v1985 = vpop.f32.mrf.mxu0
        %1986 = vdwg.mxu0
        %v1987 = vmul.f32 %v1820, 0.35355338
        %v1989 = vsel %vm922, %v1987, 0
        %v1992 = vsel %vm922, %v1902, 0
        %1994 = vmatprep.subr.mxu0 0.0
        %1995 = vmatpush1.xpose.msra.mxu0 0.0
        %1996 = vmatprep.subr.mxu0 0.0
        %1997 = vmatpush1.xpose.msra.mxu0 0.0
        %1998 = vmatprep.subr.mxu0 0.0
        %1999 = vmatpush1.xpose.msra.mxu0 0.0
        %2000 = vmatprep.subr.mxu0 0.0
        %2001 = vmatpush1.xpose.msra.mxu0 0.0
        %2002 = vmatprep.subr.mxu0 0.0
        %2003 = vmatpush1.xpose.msra.mxu0 0.0
        %2004 = vmatprep.subr.mxu0 0.0
        %2005 = vmatpush1.xpose.msra.mxu0 0.0
        %2006 = vmatprep.subr.mxu0 0.0
        %2007 = vmatpush1.xpose.msra.mxu0 0.0
        %2008 = vmatprep.subr.mxu0 0.0
        %2009 = vmatpush1.xpose.msra.mxu0 0.0
        %2010 = vmatprep.subr.mxu0 0.0
        %2011 = vmatpush1.xpose.msra.mxu0 0.0
        %2012 = vmatprep.subr.mxu0 0.0
        %2013 = vmatpush1.xpose.msra.mxu0 0.0
        %2014 = vmatprep.subr.mxu0 0.0
        %2015 = vmatpush1.xpose.msra.mxu0 0.0
        %2016 = vmatprep.subr.mxu0 0.0
        %2017 = vmatpush1.xpose.msra.mxu0 0.0
        %2018 = vmatprep.subr.mxu0 0.0
        %2019 = vmatpush1.xpose.msra.mxu0 0.0
        %2020 = vmatprep.subr.mxu0 0.0
        %2021 = vmatpush1.xpose.msra.mxu0 0.0
        %2022 = vmatprep.subr.mxu0 0.0
        %2023 = vmatpush1.xpose.msra.mxu0 0.0
        %2024 = vmatprep.subr.mxu0 0.0
        %2025 = vmatpush1.xpose.msra.mxu0 %v1992
        %2026 = vmatprep.subr.mxu0 0.0
        %2027 = vmatpush2.xpose.msra.mxu0 0.0
        %2028 = vmatprep.subr.mxu0 0.0
        %2029 = vmatpush2.xpose.msra.mxu0 0.0
        %2030 = vmatprep.subr.mxu0 0.0
        %2031 = vmatpush2.xpose.msra.mxu0 0.0
        %2032 = vmatprep.subr.mxu0 0.0
        %2033 = vmatpush2.xpose.msra.mxu0 0.0
        %2034 = vmatprep.subr.mxu0 0.0
        %2035 = vmatpush2.xpose.msra.mxu0 0.0
        %2036 = vmatprep.subr.mxu0 0.0
        %2037 = vmatpush2.xpose.msra.mxu0 0.0
        %2038 = vmatprep.subr.mxu0 0.0
        %2039 = vmatpush2.xpose.msra.mxu0 0.0
        %2040 = vmatprep.subr.mxu0 0.0
        %2041 = vmatpush2.xpose.msra.mxu0 0.0
        %2042 = vmatprep.subr.mxu0 0.0
        %2043 = vmatpush2.xpose.msra.mxu0 0.0
        %2044 = vmatprep.subr.mxu0 0.0
        %2045 = vmatpush2.xpose.msra.mxu0 0.0
        %2046 = vmatprep.subr.mxu0 0.0
        %2047 = vmatpush2.xpose.msra.mxu0 0.0
        %2048 = vmatprep.subr.mxu0 0.0
        %2049 = vmatpush2.xpose.msra.mxu0 0.0
        %2050 = vmatprep.subr.mxu0 0.0
        %2051 = vmatpush2.xpose.msra.mxu0 0.0
        %2052 = vmatprep.subr.mxu0 0.0
        %2053 = vmatpush2.xpose.msra.mxu0 0.0
        %2054 = vmatprep.subr.mxu0 0.0
        %2055 = vmatpush2.xpose.msra.mxu0 0.0
        %2056 = vmatprep.subr.mxu0 0.0
        %2057 = vmatpush2.xpose.msra.mxu0 0.0
        %2058 = vmatprep.mubr.f32.mxu0 0.0
        %2059 = vmatmul.mubr.f32.gmra.mxu0 %v1989
        %v2060 = vpop.f32.mrf.mxu0
        %v2061 = vadd.f32 0.0, %v2060
        %v2062 = vpop.f32.mrf.mxu0
        %2063 = vdwg.mxu0
        %v2064 = vsel %vm922, %v2061, -inf
        %2065 = vmax.xlane.f32.xlu0 %v2064
        %v2066 = vpop.xlane.xlu0 %2065
        %v2067 = vsub.f32 %v2061, %v2066
        %v2068 = vmul.f32 %v2067, 1.442695
        %v2069 = vpow.pop %v2068
        %v2070 = vsel %vm922, %v2069, 0.0
        %2071 = vadd.xlane.f32.xlu0 %v2070
        %v2072 = vpop.xlane.xlu0 %2071
        %v2073 = vrcp.pop %v2072
        %v2074 = vmul.f32 %v2069, %v2073
        %v2076 = vsel %vm922, %v2074, 0
        %2078 = vmatprep.subr.mxu0 0.0
        %2079 = vmatpush1.msra.mxu0 0.0
        %2080 = vmatprep.subr.mxu0 0.0
        %2081 = vmatpush1.msra.mxu0 0.0
        %2082 = vmatprep.subr.mxu0 0.0
        %2083 = vmatpush1.msra.mxu0 0.0
        %2084 = vmatprep.subr.mxu0 0.0
        %2085 = vmatpush1.msra.mxu0 0.0
        %2086 = vmatprep.subr.mxu0 0.0
        %2087 = vmatpush1.msra.mxu0 0.0
        %2088 = vmatprep.subr.mxu0 0.0
        %2089 = vmatpush1.msra.mxu0 0.0
        %2090 = vmatprep.subr.mxu0 0.0
        %2091 = vmatpush1.msra.mxu0 0.0
        %2092 = vmatprep.subr.mxu0 0.0
        %2093 = vmatpush1.msra.mxu0 0.0
        %2094 = vmatprep.subr.mxu0 0.0
        %2095 = vmatpush1.msra.mxu0 0.0
        %2096 = vmatprep.subr.mxu0 0.0
        %2097 = vmatpush1.msra.mxu0 0.0
        %2098 = vmatprep.subr.mxu0 0.0
        %2099 = vmatpush1.msra.mxu0 0.0
        %2100 = vmatprep.subr.mxu0 0.0
        %2101 = vmatpush1.msra.mxu0 0.0
        %2102 = vmatprep.subr.mxu0 0.0
        %2103 = vmatpush1.msra.mxu0 0.0
        %2104 = vmatprep.subr.mxu0 0.0
        %2105 = vmatpush1.msra.mxu0 0.0
        %2106 = vmatprep.subr.mxu0 0.0
        %2107 = vmatpush1.msra.mxu0 0.0
        %2108 = vmatprep.subr.mxu0 0.0
        %2109 = vmatpush1.msra.mxu0 %v1984
        %2110 = vmatprep.subr.mxu0 0.0
        %2111 = vmatpush2.msra.mxu0 0.0
        %2112 = vmatprep.subr.mxu0 0.0
        %2113 = vmatpush2.msra.mxu0 0.0
        %2114 = vmatprep.subr.mxu0 0.0
        %2115 = vmatpush2.msra.mxu0 0.0
        %2116 = vmatprep.subr.mxu0 0.0
        %2117 = vmatpush2.msra.mxu0 0.0
        %2118 = vmatprep.subr.mxu0 0.0
        %2119 = vmatpush2.msra.mxu0 0.0
        %2120 = vmatprep.subr.mxu0 0.0
        %2121 = vmatpush2.msra.mxu0 0.0
        %2122 = vmatprep.subr.mxu0 0.0
        %2123 = vmatpush2.msra.mxu0 0.0
        %2124 = vmatprep.subr.mxu0 0.0
        %2125 = vmatpush2.msra.mxu0 0.0
        %2126 = vmatprep.subr.mxu0 0.0
        %2127 = vmatpush2.msra.mxu0 0.0
        %2128 = vmatprep.subr.mxu0 0.0
        %2129 = vmatpush2.msra.mxu0 0.0
        %2130 = vmatprep.subr.mxu0 0.0
        %2131 = vmatpush2.msra.mxu0 0.0
        %2132 = vmatprep.subr.mxu0 0.0
        %2133 = vmatpush2.msra.mxu0 0.0
        %2134 = vmatprep.subr.mxu0 0.0
        %2135 = vmatpush2.msra.mxu0 0.0
        %2136 = vmatprep.subr.mxu0 0.0
        %2137 = vmatpush2.msra.mxu0 0.0
        %2138 = vmatprep.subr.mxu0 0.0
        %2139 = vmatpush2.msra.mxu0 0.0
        %2140 = vmatprep.subr.mxu0 0.0
        %2141 = vmatpush2.msra.mxu0 0.0
        %2142 = vmatprep.mubr.f32.mxu0 0.0
        %2143 = vmatmul.mubr.f32.gmra.mxu0 %v2076
        %v2144 = vpop.f32.mrf.mxu0
        %v2145 = vadd.f32 0.0, %v2144
        %v2146 = vpop.f32.mrf.mxu0
        %2147 = vdwg.mxu0
        %2148 = vrot.lane.b32.xlu0 %v1987, 120
        %v2149 = vpop.permute.xlu0 %2148
        %2150 = vrot.lane.b32.xlu0 %v1902, 120
        %v2151 = vpop.permute.xlu0 %2150
        %v2152 = vsel %vm922, %v2149, 0
        %v2154 = vsel %vm922, %v2151, 0
        %2156 = vmatprep.subr.mxu0 0.0
        %2157 = vmatpush1.xpose.msra.mxu0 0.0
        %2158 = vmatprep.subr.mxu0 0.0
        %2159 = vmatpush1.xpose.msra.mxu0 0.0
        %2160 = vmatprep.subr.mxu0 0.0
        %2161 = vmatpush1.xpose.msra.mxu0 0.0
        %2162 = vmatprep.subr.mxu0 0.0
        %2163 = vmatpush1.xpose.msra.mxu0 0.0
        %2164 = vmatprep.subr.mxu0 0.0
        %2165 = vmatpush1.xpose.msra.mxu0 0.0
        %2166 = vmatprep.subr.mxu0 0.0
        %2167 = vmatpush1.xpose.msra.mxu0 0.0
        %2168 = vmatprep.subr.mxu0 0.0
        %2169 = vmatpush1.xpose.msra.mxu0 0.0
        %2170 = vmatprep.subr.mxu0 0.0
        %2171 = vmatpush1.xpose.msra.mxu0 0.0
        %2172 = vmatprep.subr.mxu0 0.0
        %2173 = vmatpush1.xpose.msra.mxu0 0.0
        %2174 = vmatprep.subr.mxu0 0.0
        %2175 = vmatpush1.xpose.msra.mxu0 0.0
        %2176 = vmatprep.subr.mxu0 0.0
        %2177 = vmatpush1.xpose.msra.mxu0 0.0
        %2178 = vmatprep.subr.mxu0 0.0
        %2179 = vmatpush1.xpose.msra.mxu0 0.0
        %2180 = vmatprep.subr.mxu0 0.0
        %2181 = vmatpush1.xpose.msra.mxu0 0.0
        %2182 = vmatprep.subr.mxu0 0.0
        %2183 = vmatpush1.xpose.msra.mxu0 0.0
        %2184 = vmatprep.subr.mxu0 0.0
        %2185 = vmatpush1.xpose.msra.mxu0 0.0
        %2186 = vmatprep.subr.mxu0 0.0
        %2187 = vmatpush1.xpose.msra.mxu0 %v2154
        %2188 = vmatprep.subr.mxu0 0.0
        %2189 = vmatpush2.xpose.msra.mxu0 0.0
        %2190 = vmatprep.subr.mxu0 0.0
        %2191 = vmatpush2.xpose.msra.mxu0 0.0
        %2192 = vmatprep.subr.mxu0 0.0
        %2193 = vmatpush2.xpose.msra.mxu0 0.0
        %2194 = vmatprep.subr.mxu0 0.0
        %2195 = vmatpush2.xpose.msra.mxu0 0.0
        %2196 = vmatprep.subr.mxu0 0.0
        %2197 = vmatpush2.xpose.msra.mxu0 0.0
        %2198 = vmatprep.subr.mxu0 0.0
        %2199 = vmatpush2.xpose.msra.mxu0 0.0
        %2200 = vmatprep.subr.mxu0 0.0
        %2201 = vmatpush2.xpose.msra.mxu0 0.0
        %2202 = vmatprep.subr.mxu0 0.0
        %2203 = vmatpush2.xpose.msra.mxu0 0.0
        %2204 = vmatprep.subr.mxu0 0.0
        %2205 = vmatpush2.xpose.msra.mxu0 0.0
        %2206 = vmatprep.subr.mxu0 0.0
        %2207 = vmatpush2.xpose.msra.mxu0 0.0
        %2208 = vmatprep.subr.mxu0 0.0
        %2209 = vmatpush2.xpose.msra.mxu0 0.0
        %2210 = vmatprep.subr.mxu0 0.0
        %2211 = vmatpush2.xpose.msra.mxu0 0.0
        %2212 = vmatprep.subr.mxu0 0.0
        %2213 = vmatpush2.xpose.msra.mxu0 0.0
        %2214 = vmatprep.subr.mxu0 0.0
        %2215 = vmatpush2.xpose.msra.mxu0 0.0
        %2216 = vmatprep.subr.mxu0 0.0
        %2217 = vmatpush2.xpose.msra.mxu0 0.0
        %2218 = vmatprep.subr.mxu0 0.0
        %2219 = vmatpush2.xpose.msra.mxu0 0.0
        %2220 = vmatprep.mubr.f32.mxu0 0.0
        %2221 = vmatmul.mubr.f32.gmra.mxu0 %v2152
        %v2222 = vpop.f32.mrf.mxu0
        %v2223 = vadd.f32 0.0, %v2222
        %v2224 = vpop.f32.mrf.mxu0
        %2225 = vdwg.mxu0
        %v2226 = vsel %vm922, %v2223, -inf
        %2227 = vmax.xlane.f32.xlu0 %v2226
        %v2228 = vpop.xlane.xlu0 %2227
        %v2229 = vsub.f32 %v2223, %v2228
        %v2230 = vmul.f32 %v2229, 1.442695
        %v2231 = vpow.pop %v2230
        %v2232 = vsel %vm922, %v2231, 0.0
        %2233 = vadd.xlane.f32.xlu0 %v2232
        %v2234 = vpop.xlane.xlu0 %2233
        %v2235 = vrcp.pop %v2234
        %v2236 = vmul.f32 %v2231, %v2235
        %2238 = vrot.lane.b32.xlu0 %v1984, 120
        %v2239 = vpop.permute.xlu0 %2238
        %v2242 = vsel %vm922, %v2236, 0
        %2244 = vmatprep.subr.mxu0 0.0
        %2245 = vmatpush1.msra.mxu0 0.0
        %2246 = vmatprep.subr.mxu0 0.0
        %2247 = vmatpush1.msra.mxu0 0.0
        %2248 = vmatprep.subr.mxu0 0.0
        %2249 = vmatpush1.msra.mxu0 0.0
        %2250 = vmatprep.subr.mxu0 0.0
        %2251 = vmatpush1.msra.mxu0 0.0
        %2252 = vmatprep.subr.mxu0 0.0
        %2253 = vmatpush1.msra.mxu0 0.0
        %2254 = vmatprep.subr.mxu0 0.0
        %2255 = vmatpush1.msra.mxu0 0.0
        %2256 = vmatprep.subr.mxu0 0.0
        %2257 = vmatpush1.msra.mxu0 0.0
        %2258 = vmatprep.subr.mxu0 0.0
        %2259 = vmatpush1.msra.mxu0 0.0
        %2260 = vmatprep.subr.mxu0 0.0
        %2261 = vmatpush1.msra.mxu0 0.0
        %2262 = vmatprep.subr.mxu0 0.0
        %2263 = vmatpush1.msra.mxu0 0.0
        %2264 = vmatprep.subr.mxu0 0.0
        %2265 = vmatpush1.msra.mxu0 0.0
        %2266 = vmatprep.subr.mxu0 0.0
        %2267 = vmatpush1.msra.mxu0 0.0
        %2268 = vmatprep.subr.mxu0 0.0
        %2269 = vmatpush1.msra.mxu0 0.0
        %2270 = vmatprep.subr.mxu0 0.0
        %2271 = vmatpush1.msra.mxu0 0.0
        %2272 = vmatprep.subr.mxu0 0.0
        %2273 = vmatpush1.msra.mxu0 0.0
        %2274 = vmatprep.subr.mxu0 0.0
        %2275 = vmatpush1.msra.mxu0 %v2239
        %2276 = vmatprep.subr.mxu0 0.0
        %2277 = vmatpush2.msra.mxu0 0.0
        %2278 = vmatprep.subr.mxu0 0.0
        %2279 = vmatpush2.msra.mxu0 0.0
        %2280 = vmatprep.subr.mxu0 0.0
        %2281 = vmatpush2.msra.mxu0 0.0
        %2282 = vmatprep.subr.mxu0 0.0
        %2283 = vmatpush2.msra.mxu0 0.0
        %2284 = vmatprep.subr.mxu0 0.0
        %2285 = vmatpush2.msra.mxu0 0.0
        %2286 = vmatprep.subr.mxu0 0.0
        %2287 = vmatpush2.msra.mxu0 0.0
        %2288 = vmatprep.subr.mxu0 0.0
        %2289 = vmatpush2.msra.mxu0 0.0
        %2290 = vmatprep.subr.mxu0 0.0
        %2291 = vmatpush2.msra.mxu0 0.0
        %2292 = vmatprep.subr.mxu0 0.0
        %2293 = vmatpush2.msra.mxu0 0.0
        %2294 = vmatprep.subr.mxu0 0.0
        %2295 = vmatpush2.msra.mxu0 0.0
        %2296 = vmatprep.subr.mxu0 0.0
        %2297 = vmatpush2.msra.mxu0 0.0
        %2298 = vmatprep.subr.mxu0 0.0
        %2299 = vmatpush2.msra.mxu0 0.0
        %2300 = vmatprep.subr.mxu0 0.0
        %2301 = vmatpush2.msra.mxu0 0.0
        %2302 = vmatprep.subr.mxu0 0.0
        %2303 = vmatpush2.msra.mxu0 0.0
        %2304 = vmatprep.subr.mxu0 0.0
        %2305 = vmatpush2.msra.mxu0 0.0
        %2306 = vmatprep.subr.mxu0 0.0
        %2307 = vmatpush2.msra.mxu0 0.0
        %2308 = vmatprep.mubr.f32.mxu0 0.0
        %2309 = vmatmul.mubr.f32.gmra.mxu0 %v2242
        %v2310 = vpop.f32.mrf.mxu0
        %v2311 = vadd.f32 0.0, %v2310
        %v2312 = vpop.f32.mrf.mxu0
        %2313 = vdwg.mxu0
        %2314 = vrot.lane.b32.xlu0 %v1987, 112
        %v2315 = vpop.permute.xlu0 %2314
        %2316 = vrot.lane.b32.xlu0 %v1902, 112
        %v2317 = vpop.permute.xlu0 %2316
        %v2318 = vsel %vm922, %v2315, 0
        %v2320 = vsel %vm922, %v2317, 0
        %2322 = vmatprep.subr.mxu0 0.0
        %2323 = vmatpush1.xpose.msra.mxu0 0.0
        %2324 = vmatprep.subr.mxu0 0.0
        %2325 = vmatpush1.xpose.msra.mxu0 0.0
        %2326 = vmatprep.subr.mxu0 0.0
        %2327 = vmatpush1.xpose.msra.mxu0 0.0
        %2328 = vmatprep.subr.mxu0 0.0
        %2329 = vmatpush1.xpose.msra.mxu0 0.0
        %2330 = vmatprep.subr.mxu0 0.0
        %2331 = vmatpush1.xpose.msra.mxu0 0.0
        %2332 = vmatprep.subr.mxu0 0.0
        %2333 = vmatpush1.xpose.msra.mxu0 0.0
        %2334 = vmatprep.subr.mxu0 0.0
        %2335 = vmatpush1.xpose.msra.mxu0 0.0
        %2336 = vmatprep.subr.mxu0 0.0
        %2337 = vmatpush1.xpose.msra.mxu0 0.0
        %2338 = vmatprep.subr.mxu0 0.0
        %2339 = vmatpush1.xpose.msra.mxu0 0.0
        %2340 = vmatprep.subr.mxu0 0.0
        %2341 = vmatpush1.xpose.msra.mxu0 0.0
        %2342 = vmatprep.subr.mxu0 0.0
        %2343 = vmatpush1.xpose.msra.mxu0 0.0
        %2344 = vmatprep.subr.mxu0 0.0
        %2345 = vmatpush1.xpose.msra.mxu0 0.0
        %2346 = vmatprep.subr.mxu0 0.0
        %2347 = vmatpush1.xpose.msra.mxu0 0.0
        %2348 = vmatprep.subr.mxu0 0.0
        %2349 = vmatpush1.xpose.msra.mxu0 0.0
        %2350 = vmatprep.subr.mxu0 0.0
        %2351 = vmatpush1.xpose.msra.mxu0 0.0
        %2352 = vmatprep.subr.mxu0 0.0
        %2353 = vmatpush1.xpose.msra.mxu0 %v2320
        %2354 = vmatprep.subr.mxu0 0.0
        %2355 = vmatpush2.xpose.msra.mxu0 0.0
        %2356 = vmatprep.subr.mxu0 0.0
        %2357 = vmatpush2.xpose.msra.mxu0 0.0
        %2358 = vmatprep.subr.mxu0 0.0
        %2359 = vmatpush2.xpose.msra.mxu0 0.0
        %2360 = vmatprep.subr.mxu0 0.0
        %2361 = vmatpush2.xpose.msra.mxu0 0.0
        %2362 = vmatprep.subr.mxu0 0.0
        %2363 = vmatpush2.xpose.msra.mxu0 0.0
        %2364 = vmatprep.subr.mxu0 0.0
        %2365 = vmatpush2.xpose.msra.mxu0 0.0
        %2366 = vmatprep.subr.mxu0 0.0
        %2367 = vmatpush2.xpose.msra.mxu0 0.0
        %2368 = vmatprep.subr.mxu0 0.0
        %2369 = vmatpush2.xpose.msra.mxu0 0.0
        %2370 = vmatprep.subr.mxu0 0.0
        %2371 = vmatpush2.xpose.msra.mxu0 0.0
        %2372 = vmatprep.subr.mxu0 0.0
        %2373 = vmatpush2.xpose.msra.mxu0 0.0
        %2374 = vmatprep.subr.mxu0 0.0
        %2375 = vmatpush2.xpose.msra.mxu0 0.0
        %2376 = vmatprep.subr.mxu0 0.0
        %2377 = vmatpush2.xpose.msra.mxu0 0.0
        %2378 = vmatprep.subr.mxu0 0.0
        %2379 = vmatpush2.xpose.msra.mxu0 0.0
        %2380 = vmatprep.subr.mxu0 0.0
        %2381 = vmatpush2.xpose.msra.mxu0 0.0
        %2382 = vmatprep.subr.mxu0 0.0
        %2383 = vmatpush2.xpose.msra.mxu0 0.0
        %2384 = vmatprep.subr.mxu0 0.0
        %2385 = vmatpush2.xpose.msra.mxu0 0.0
        %2386 = vmatprep.mubr.f32.mxu0 0.0
        %2387 = vmatmul.mubr.f32.gmra.mxu0 %v2318
        %v2388 = vpop.f32.mrf.mxu0
        %v2389 = vadd.f32 0.0, %v2388
        %v2390 = vpop.f32.mrf.mxu0
        %2391 = vdwg.mxu0
        %v2392 = vsel %vm922, %v2389, -inf
        %2393 = vmax.xlane.f32.xlu0 %v2392
        %v2394 = vpop.xlane.xlu0 %2393
        %v2395 = vsub.f32 %v2389, %v2394
        %v2396 = vmul.f32 %v2395, 1.442695
        %v2397 = vpow.pop %v2396
        %v2398 = vsel %vm922, %v2397, 0.0
        %2399 = vadd.xlane.f32.xlu0 %v2398
        %v2400 = vpop.xlane.xlu0 %2399
        %v2401 = vrcp.pop %v2400
        %v2402 = vmul.f32 %v2397, %v2401
        %2403 = vrot.lane.b32.xlu0 %v1984, 112
        %v2404 = vpop.permute.xlu0 %2403
        %v2407 = vsel %vm922, %v2402, 0
        %2409 = vmatprep.subr.mxu0 0.0
        %2410 = vmatpush1.msra.mxu0 0.0
        %2411 = vmatprep.subr.mxu0 0.0
        %2412 = vmatpush1.msra.mxu0 0.0
        %2413 = vmatprep.subr.mxu0 0.0
        %2414 = vmatpush1.msra.mxu0 0.0
        %2415 = vmatprep.subr.mxu0 0.0
        %2416 = vmatpush1.msra.mxu0 0.0
        %2417 = vmatprep.subr.mxu0 0.0
        %2418 = vmatpush1.msra.mxu0 0.0
        %2419 = vmatprep.subr.mxu0 0.0
        %2420 = vmatpush1.msra.mxu0 0.0
        %2421 = vmatprep.subr.mxu0 0.0
        %2422 = vmatpush1.msra.mxu0 0.0
        %2423 = vmatprep.subr.mxu0 0.0
        %2424 = vmatpush1.msra.mxu0 0.0
        %2425 = vmatprep.subr.mxu0 0.0
        %2426 = vmatpush1.msra.mxu0 0.0
        %2427 = vmatprep.subr.mxu0 0.0
        %2428 = vmatpush1.msra.mxu0 0.0
        %2429 = vmatprep.subr.mxu0 0.0
        %2430 = vmatpush1.msra.mxu0 0.0
        %2431 = vmatprep.subr.mxu0 0.0
        %2432 = vmatpush1.msra.mxu0 0.0
        %2433 = vmatprep.subr.mxu0 0.0
        %2434 = vmatpush1.msra.mxu0 0.0
        %2435 = vmatprep.subr.mxu0 0.0
        %2436 = vmatpush1.msra.mxu0 0.0
        %2437 = vmatprep.subr.mxu0 0.0
        %2438 = vmatpush1.msra.mxu0 0.0
        %2439 = vmatprep.subr.mxu0 0.0
        %2440 = vmatpush1.msra.mxu0 %v2404
        %2441 = vmatprep.subr.mxu0 0.0
        %2442 = vmatpush2.msra.mxu0 0.0
        %2443 = vmatprep.subr.mxu0 0.0
        %2444 = vmatpush2.msra.mxu0 0.0
        %2445 = vmatprep.subr.mxu0 0.0
        %2446 = vmatpush2.msra.mxu0 0.0
        %2447 = vmatprep.subr.mxu0 0.0
        %2448 = vmatpush2.msra.mxu0 0.0
        %2449 = vmatprep.subr.mxu0 0.0
        %2450 = vmatpush2.msra.mxu0 0.0
        %2451 = vmatprep.subr.mxu0 0.0
        %2452 = vmatpush2.msra.mxu0 0.0
        %2453 = vmatprep.subr.mxu0 0.0
        %2454 = vmatpush2.msra.mxu0 0.0
        %2455 = vmatprep.subr.mxu0 0.0
        %2456 = vmatpush2.msra.mxu0 0.0
        %2457 = vmatprep.subr.mxu0 0.0
        %2458 = vmatpush2.msra.mxu0 0.0
        %2459 = vmatprep.subr.mxu0 0.0
        %2460 = vmatpush2.msra.mxu0 0.0
        %2461 = vmatprep.subr.mxu0 0.0
        %2462 = vmatpush2.msra.mxu0 0.0
        %2463 = vmatprep.subr.mxu0 0.0
        %2464 = vmatpush2.msra.mxu0 0.0
        %2465 = vmatprep.subr.mxu0 0.0
        %2466 = vmatpush2.msra.mxu0 0.0
        %2467 = vmatprep.subr.mxu0 0.0
        %2468 = vmatpush2.msra.mxu0 0.0
        %2469 = vmatprep.subr.mxu0 0.0
        %2470 = vmatpush2.msra.mxu0 0.0
        %2471 = vmatprep.subr.mxu0 0.0
        %2472 = vmatpush2.msra.mxu0 0.0
        %2473 = vmatprep.mubr.f32.mxu0 0.0
        %2474 = vmatmul.mubr.f32.gmra.mxu0 %v2407
        %v2475 = vpop.f32.mrf.mxu0
        %v2476 = vadd.f32 0.0, %v2475
        %v2477 = vpop.f32.mrf.mxu0
        %2478 = vdwg.mxu0
        %2480 = vrot.lane.b32.xlu0 %v2311, 8
        %v2481 = vpop.permute.xlu0 %2480
        %2484 = vrot.lane.b32.xlu0 %v2476, 16
        %v2485 = vpop.permute.xlu0 %2484
        %v2487 = vsel %vm922, %v2145, %v2481
        %v2488 = vsel %vm1423, %v2487, %v2485
        %s2489 = scalar_lea.vmem [#allocation7], 24
        %v2490 = vld [vmem:[%s2489] sm:$0xff]
        %v2491 = vld [vmem:[%s2489 + $0x8] sm:$0xff]
        %v2492 = vld [vmem:[%s2489 + $0x10] sm:$0xff]
        %s2493 = scalar_lea.vmem %s8, 1
        %v2494 = vld [vmem:[%s2493] sm:$0x1]
        %v2496 = vlaneseq
        %v2497 = vshrl.u32 %v2496, 7
        %v2498 = vsub.s32 0, %v2497
        %v2499 = vrot.slane %v2494, %v2498
        %v2502 = vsel %vm687, %v2488, 0
        %2504 = vmatprep.subr.mxu0 0.0
        %2505 = vmatpush1.msra.mxu0 0.0
        %2506 = vmatprep.subr.mxu0 0.0
        %2507 = vmatpush1.msra.mxu0 0.0
        %2508 = vmatprep.subr.mxu0 0.0
        %2509 = vmatpush1.msra.mxu0 0.0
        %2510 = vmatprep.subr.mxu0 0.0
        %2511 = vmatpush1.msra.mxu0 0.0
        %2512 = vmatprep.subr.mxu0 0.0
        %2513 = vmatpush1.msra.mxu0 0.0
        %2514 = vmatprep.subr.mxu0 0.0
        %2515 = vmatpush1.msra.mxu0 0.0
        %2516 = vmatprep.subr.mxu0 0.0
        %2517 = vmatpush1.msra.mxu0 0.0
        %2518 = vmatprep.subr.mxu0 0.0
        %2519 = vmatpush1.msra.mxu0 0.0
        %2520 = vmatprep.subr.mxu0 0.0
        %2521 = vmatpush1.msra.mxu0 0.0
        %2522 = vmatprep.subr.mxu0 0.0
        %2523 = vmatpush1.msra.mxu0 0.0
        %2524 = vmatprep.subr.mxu0 0.0
        %2525 = vmatpush1.msra.mxu0 0.0
        %2526 = vmatprep.subr.mxu0 0.0
        %2527 = vmatpush1.msra.mxu0 0.0
        %2528 = vmatprep.subr.mxu0 0.0
        %2529 = vmatpush1.msra.mxu0 0.0
        %2530 = vmatprep.subr.mxu0 0.0
        %2531 = vmatpush1.msra.mxu0 %v2492
        %2532 = vmatprep.subr.mxu0 0.0
        %2533 = vmatpush1.msra.mxu0 %v2491
        %2534 = vmatprep.subr.mxu0 0.0
        %2535 = vmatpush1.msra.mxu0 %v2490
        %2536 = vmatprep.subr.mxu0 0.0
        %2537 = vmatpush2.msra.mxu0 0.0
        %2538 = vmatprep.subr.mxu0 0.0
        %2539 = vmatpush2.msra.mxu0 0.0
        %2540 = vmatprep.subr.mxu0 0.0
        %2541 = vmatpush2.msra.mxu0 0.0
        %2542 = vmatprep.subr.mxu0 0.0
        %2543 = vmatpush2.msra.mxu0 0.0
        %2544 = vmatprep.subr.mxu0 0.0
        %2545 = vmatpush2.msra.mxu0 0.0
        %2546 = vmatprep.subr.mxu0 0.0
        %2547 = vmatpush2.msra.mxu0 0.0
        %2548 = vmatprep.subr.mxu0 0.0
        %2549 = vmatpush2.msra.mxu0 0.0
        %2550 = vmatprep.subr.mxu0 0.0
        %2551 = vmatpush2.msra.mxu0 0.0
        %2552 = vmatprep.subr.mxu0 0.0
        %2553 = vmatpush2.msra.mxu0 0.0
        %2554 = vmatprep.subr.mxu0 0.0
        %2555 = vmatpush2.msra.mxu0 0.0
        %2556 = vmatprep.subr.mxu0 0.0
        %2557 = vmatpush2.msra.mxu0 0.0
        %2558 = vmatprep.subr.mxu0 0.0
        %2559 = vmatpush2.msra.mxu0 0.0
        %2560 = vmatprep.subr.mxu0 0.0
        %2561 = vmatpush2.msra.mxu0 0.0
        %2562 = vmatprep.subr.mxu0 0.0
        %2563 = vmatpush2.msra.mxu0 0.0
        %2564 = vmatprep.subr.mxu0 0.0
        %2565 = vmatpush2.msra.mxu0 0.0
        %2566 = vmatprep.subr.mxu0 0.0
        %2567 = vmatpush2.msra.mxu0 0.0
        %2568 = vmatprep.mubr.f32.mxu0 0.0
        %2569 = vmatmul.mubr.f32.gmra.mxu0 %v2502
        %v2570 = vpop.f32.mrf.mxu0
        %v2571 = vadd.f32 %v2499, %v2570
        %v2572 = vpop.f32.mrf.mxu0
        %2573 = vdwg.mxu0
        %v2574 = vadd.f32 %v1737, %v2571
        %s2575 = scalar_lea.vmem %s9, 1
        %v2576 = vld [vmem:[%s2575] sm:$0x1]
        %s2577 = scalar_lea.vmem %s10, 1
        %v2578 = vld [vmem:[%s2577] sm:$0x1]
        %v2579 = vsel %vm687, %v2574, 0.0
        %2580 = vadd.xlane.f32.xlu0 %v2579
        %v2581 = vpop.xlane.xlu0 %2580
        %v2582 = vmul.f32 %v2581, %v1514
        %v2583 = vsub.f32 %v2574, %v2582
        %v2584 = vmul.f32 %v2583, %v2583
        %v2585 = vsel %vm687, %v2584, 0.0
        %2586 = vadd.xlane.f32.xlu0 %v2585
        %v2587 = vpop.xlane.xlu0 %2586
        %v2588 = vmul.f32 %v2587, %v1514
        %v2589 = vadd.f32 %v2588, 1e-05
        %v2590 = vrsqrt.pop %v2589
        %v2591 = vmul.f32 %v2583, %v2590
        %v2593 = vlaneseq
        %v2594 = vshrl.u32 %v2593, 7
        %v2595 = vsub.s32 0, %v2594
        %v2596 = vrot.slane %v2576, %v2595
        %v2598 = vmul.f32 %v2591, %v2596
        %v2600 = vlaneseq
        %v2601 = vshrl.u32 %v2600, 7
        %v2602 = vsub.s32 0, %v2601
        %v2603 = vrot.slane %v2578, %v2602
        %v2605 = vadd.f32 %v2598, %v2603
        %s2606 = scalar_lea.vmem [#allocation9], 24
        %v2607 = vld [vmem:[%s2606] sm:$0xff]
        %v2608 = vld [vmem:[%s2606 + $0x8] sm:$0xff]
        %v2609 = vld [vmem:[%s2606 + $0x10] sm:$0xff]
        %s2610 = scalar_lea.vmem %s12, 1
        %v2611 = vld [vmem:[%s2610] sm:$0x1]
        %v2613 = vlaneseq
        %v2614 = vshrl.u32 %v2613, 7
        %v2615 = vsub.s32 0, %v2614
        %v2616 = vrot.slane %v2611, %v2615
        %v2619 = vsel %vm687, %v2605, 0
        %2621 = vmatprep.subr.mxu0 0.0
        %2622 = vmatpush1.msra.mxu0 0.0
        %2623 = vmatprep.subr.mxu0 0.0
        %2624 = vmatpush1.msra.mxu0 0.0
        %2625 = vmatprep.subr.mxu0 0.0
        %2626 = vmatpush1.msra.mxu0 0.0
        %2627 = vmatprep.subr.mxu0 0.0
        %2628 = vmatpush1.msra.mxu0 0.0
        %2629 = vmatprep.subr.mxu0 0.0
        %2630 = vmatpush1.msra.mxu0 0.0
        %2631 = vmatprep.subr.mxu0 0.0
        %2632 = vmatpush1.msra.mxu0 0.0
        %2633 = vmatprep.subr.mxu0 0.0
        %2634 = vmatpush1.msra.mxu0 0.0
        %2635 = vmatprep.subr.mxu0 0.0
        %2636 = vmatpush1.msra.mxu0 0.0
        %2637 = vmatprep.subr.mxu0 0.0
        %2638 = vmatpush1.msra.mxu0 0.0
        %2639 = vmatprep.subr.mxu0 0.0
        %2640 = vmatpush1.msra.mxu0 0.0
        %2641 = vmatprep.subr.mxu0 0.0
        %2642 = vmatpush1.msra.mxu0 0.0
        %2643 = vmatprep.subr.mxu0 0.0
        %2644 = vmatpush1.msra.mxu0 0.0
        %2645 = vmatprep.subr.mxu0 0.0
        %2646 = vmatpush1.msra.mxu0 0.0
        %2647 = vmatprep.subr.mxu0 0.0
        %2648 = vmatpush1.msra.mxu0 %v2609
        %2649 = vmatprep.subr.mxu0 0.0
        %2650 = vmatpush1.msra.mxu0 %v2608
        %2651 = vmatprep.subr.mxu0 0.0
        %2652 = vmatpush1.msra.mxu0 %v2607
        %2653 = vmatprep.subr.mxu0 0.0
        %2654 = vmatpush2.msra.mxu0 0.0
        %2655 = vmatprep.subr.mxu0 0.0
        %2656 = vmatpush2.msra.mxu0 0.0
        %2657 = vmatprep.subr.mxu0 0.0
        %2658 = vmatpush2.msra.mxu0 0.0
        %2659 = vmatprep.subr.mxu0 0.0
        %2660 = vmatpush2.msra.mxu0 0.0
        %2661 = vmatprep.subr.mxu0 0.0
        %2662 = vmatpush2.msra.mxu0 0.0
        %2663 = vmatprep.subr.mxu0 0.0
        %2664 = vmatpush2.msra.mxu0 0.0
        %2665 = vmatprep.subr.mxu0 0.0
        %2666 = vmatpush2.msra.mxu0 0.0
        %2667 = vmatprep.subr.mxu0 0.0
        %2668 = vmatpush2.msra.mxu0 0.0
        %2669 = vmatprep.subr.mxu0 0.0
        %2670 = vmatpush2.msra.mxu0 0.0
        %2671 = vmatprep.subr.mxu0 0.0
        %2672 = vmatpush2.msra.mxu0 0.0
        %2673 = vmatprep.subr.mxu0 0.0
        %2674 = vmatpush2.msra.mxu0 0.0
        %2675 = vmatprep.subr.mxu0 0.0
        %2676 = vmatpush2.msra.mxu0 0.0
        %2677 = vmatprep.subr.mxu0 0.0
        %2678 = vmatpush2.msra.mxu0 0.0
        %2679 = vmatprep.subr.mxu0 0.0
        %2680 = vmatpush2.msra.mxu0 0.0
        %2681 = vmatprep.subr.mxu0 0.0
        %2682 = vmatpush2.msra.mxu0 0.0
        %2683 = vmatprep.subr.mxu0 0.0
        %2684 = vmatpush2.msra.mxu0 0.0
        %2685 = vmatprep.mubr.f32.mxu0 0.0
        %2686 = vmatmul.mubr.f32.gmra.mxu0 %v2619
        %v2687 = vpop.f32.mrf.mxu0
        %v2688 = vadd.f32 %v2616, %v2687
        %v2689 = vpop.f32.mrf.mxu0
        %2690 = vdwg.mxu0
        %v2691 = vmax.f32 %v2688, 0.0
        %s2692 = scalar_lea.vmem %s13, 32
        %v2693 = vld [vmem:[%s2692] sm:$0xff]
        %v2694 = vld [vmem:[%s2692 + $0x8] sm:$0xff]
        %v2695 = vld [vmem:[%s2692 + $0x10] sm:$0xff]
        %v2696 = vld [vmem:[%s2692 + $0x18] sm:$0xff]
        %s2697 = scalar_lea.vmem %s14, 1
        %v2698 = vld [vmem:[%s2697] sm:$0x1]
        %v2700 = vlaneseq
        %v2701 = vshrl.u32 %v2700, 7
        %v2702 = vsub.s32 0, %v2701
        %v2703 = vrot.slane %v2698, %v2702
        %v2706 = vsel %vm1634, %v2691, 0
        %2708 = vmatprep.subr.mxu0 0.0
        %2709 = vmatpush1.msra.mxu0 0.0
        %2710 = vmatprep.subr.mxu0 0.0
        %2711 = vmatpush1.msra.mxu0 0.0
        %2712 = vmatprep.subr.mxu0 0.0
        %2713 = vmatpush1.msra.mxu0 0.0
        %2714 = vmatprep.subr.mxu0 0.0
        %2715 = vmatpush1.msra.mxu0 0.0
        %2716 = vmatprep.subr.mxu0 0.0
        %2717 = vmatpush1.msra.mxu0 0.0
        %2718 = vmatprep.subr.mxu0 0.0
        %2719 = vmatpush1.msra.mxu0 0.0
        %2720 = vmatprep.subr.mxu0 0.0
        %2721 = vmatpush1.msra.mxu0 0.0
        %2722 = vmatprep.subr.mxu0 0.0
        %2723 = vmatpush1.msra.mxu0 0.0
        %2724 = vmatprep.subr.mxu0 0.0
        %2725 = vmatpush1.msra.mxu0 0.0
        %2726 = vmatprep.subr.mxu0 0.0
        %2727 = vmatpush1.msra.mxu0 0.0
        %2728 = vmatprep.subr.mxu0 0.0
        %2729 = vmatpush1.msra.mxu0 0.0
        %2730 = vmatprep.subr.mxu0 0.0
        %2731 = vmatpush1.msra.mxu0 0.0
        %2732 = vmatprep.subr.mxu0 0.0
        %2733 = vmatpush1.msra.mxu0 %v2696
        %2734 = vmatprep.subr.mxu0 0.0
        %2735 = vmatpush1.msra.mxu0 %v2695
        %2736 = vmatprep.subr.mxu0 0.0
        %2737 = vmatpush1.msra.mxu0 %v2694
        %2738 = vmatprep.subr.mxu0 0.0
        %2739 = vmatpush1.msra.mxu0 %v2693
        %2740 = vmatprep.subr.mxu0 0.0
        %2741 = vmatpush2.msra.mxu0 0.0
        %2742 = vmatprep.subr.mxu0 0.0
        %2743 = vmatpush2.msra.mxu0 0.0
        %2744 = vmatprep.subr.mxu0 0.0
        %2745 = vmatpush2.msra.mxu0 0.0
        %2746 = vmatprep.subr.mxu0 0.0
        %2747 = vmatpush2.msra.mxu0 0.0
        %2748 = vmatprep.subr.mxu0 0.0
        %2749 = vmatpush2.msra.mxu0 0.0
        %2750 = vmatprep.subr.mxu0 0.0
        %2751 = vmatpush2.msra.mxu0 0.0
        %2752 = vmatprep.subr.mxu0 0.0
        %2753 = vmatpush2.msra.mxu0 0.0
        %2754 = vmatprep.subr.mxu0 0.0
        %2755 = vmatpush2.msra.mxu0 0.0
        %2756 = vmatprep.subr.mxu0 0.0
        %2757 = vmatpush2.msra.mxu0 0.0
        %2758 = vmatprep.subr.mxu0 0.0
        %2759 = vmatpush2.msra.mxu0 0.0
        %2760 = vmatprep.subr.mxu0 0.0
        %2761 = vmatpush2.msra.mxu0 0.0
        %2762 = vmatprep.subr.mxu0 0.0
        %2763 = vmatpush2.msra.mxu0 0.0
        %2764 = vmatprep.subr.mxu0 0.0
        %2765 = vmatpush2.msra.mxu0 0.0
        %2766 = vmatprep.subr.mxu0 0.0
        %2767 = vmatpush2.msra.mxu0 0.0
        %2768 = vmatprep.subr.mxu0 0.0
        %2769 = vmatpush2.msra.mxu0 0.0
        %2770 = vmatprep.subr.mxu0 0.0
        %2771 = vmatpush2.msra.mxu0 0.0
        %2772 = vmatprep.mubr.f32.mxu0 0.0
        %2773 = vmatmul.mubr.f32.gmra.mxu0 %v2706
        %v2774 = vpop.f32.mrf.mxu0
        %v2775 = vadd.f32 %v2703, %v2774
        %v2776 = vpop.f32.mrf.mxu0
        %2777 = vdwg.mxu0
        %v2778 = vadd.f32 %v2605, %v2775
        %s2779 = scalar_lea.vmem %s15, 1
        %v2780 = vld [vmem:[%s2779] sm:$0x1]
        %s2781 = scalar_lea.vmem %s16, 1
        %v2782 = vld [vmem:[%s2781] sm:$0x1]
        %v2783 = vsel %vm687, %v2778, 0.0
        %2784 = vadd.xlane.f32.xlu0 %v2783
        %v2785 = vpop.xlane.xlu0 %2784
        %v2786 = vmul.f32 %v2785, %v1514
        %v2787 = vsub.f32 %v2778, %v2786
        %v2788 = vmul.f32 %v2787, %v2787
        %v2789 = vsel %vm687, %v2788, 0.0
        %2790 = vadd.xlane.f32.xlu0 %v2789
        %v2791 = vpop.xlane.xlu0 %2790
        %v2792 = vmul.f32 %v2791, %v1514
        %v2793 = vadd.f32 %v2792, 1e-05
        %v2794 = vrsqrt.pop %v2793
        %v2795 = vmul.f32 %v2787, %v2794
        %v2797 = vlaneseq
        %v2798 = vshrl.u32 %v2797, 7
        %v2799 = vsub.s32 0, %v2798
        %v2800 = vrot.slane %v2780, %v2799
        %v2802 = vmul.f32 %v2795, %v2800
        %v2804 = vlaneseq
        %v2805 = vshrl.u32 %v2804, 7
        %v2806 = vsub.s32 0, %v2805
        %v2807 = vrot.slane %v2782, %v2806
        %v2809 = vadd.f32 %v2802, %v2807
        %v2810 = vld [vmem:[%s17] sm:$0xff]
        %v2811 = vld [vmem:[%s17 + $0x8] sm:$0xff]
        %v2812 = vld [vmem:[%s17 + $0x10] sm:$0xff]
        %v2813 = vld [vmem:[%s18] sm:$0x1]
        %v2815 = vlaneseq
        %v2816 = vshrl.u32 %v2815, 7
        %v2817 = vsub.s32 0, %v2816
        %v2818 = vrot.slane %v2813, %v2817
        %v2821 = vsel %vm687, %v2809, 0
        %2823 = vmatprep.subr.mxu0 0.0
        %2824 = vmatpush1.msra.mxu0 0.0
        %2825 = vmatprep.subr.mxu0 0.0
        %2826 = vmatpush1.msra.mxu0 0.0
        %2827 = vmatprep.subr.mxu0 0.0
        %2828 = vmatpush1.msra.mxu0 0.0
        %2829 = vmatprep.subr.mxu0 0.0
        %2830 = vmatpush1.msra.mxu0 0.0
        %2831 = vmatprep.subr.mxu0 0.0
        %2832 = vmatpush1.msra.mxu0 0.0
        %2833 = vmatprep.subr.mxu0 0.0
        %2834 = vmatpush1.msra.mxu0 0.0
        %2835 = vmatprep.subr.mxu0 0.0
        %2836 = vmatpush1.msra.mxu0 0.0
        %2837 = vmatprep.subr.mxu0 0.0
        %2838 = vmatpush1.msra.mxu0 0.0
        %2839 = vmatprep.subr.mxu0 0.0
        %2840 = vmatpush1.msra.mxu0 0.0
        %2841 = vmatprep.subr.mxu0 0.0
        %2842 = vmatpush1.msra.mxu0 0.0
        %2843 = vmatprep.subr.mxu0 0.0
        %2844 = vmatpush1.msra.mxu0 0.0
        %2845 = vmatprep.subr.mxu0 0.0
        %2846 = vmatpush1.msra.mxu0 0.0
        %2847 = vmatprep.subr.mxu0 0.0
        %2848 = vmatpush1.msra.mxu0 0.0
        %2849 = vmatprep.subr.mxu0 0.0
        %2850 = vmatpush1.msra.mxu0 %v2812
        %2851 = vmatprep.subr.mxu0 0.0
        %2852 = vmatpush1.msra.mxu0 %v2811
        %2853 = vmatprep.subr.mxu0 0.0
        %2854 = vmatpush1.msra.mxu0 %v2810
        %2855 = vmatprep.subr.mxu0 0.0
        %2856 = vmatpush2.msra.mxu0 0.0
        %2857 = vmatprep.subr.mxu0 0.0
        %2858 = vmatpush2.msra.mxu0 0.0
        %2859 = vmatprep.subr.mxu0 0.0
        %2860 = vmatpush2.msra.mxu0 0.0
        %2861 = vmatprep.subr.mxu0 0.0
        %2862 = vmatpush2.msra.mxu0 0.0
        %2863 = vmatprep.subr.mxu0 0.0
        %2864 = vmatpush2.msra.mxu0 0.0
        %2865 = vmatprep.subr.mxu0 0.0
        %2866 = vmatpush2.msra.mxu0 0.0
        %2867 = vmatprep.subr.mxu0 0.0
        %2868 = vmatpush2.msra.mxu0 0.0
        %2869 = vmatprep.subr.mxu0 0.0
        %2870 = vmatpush2.msra.mxu0 0.0
        %2871 = vmatprep.subr.mxu0 0.0
        %2872 = vmatpush2.msra.mxu0 0.0
        %2873 = vmatprep.subr.mxu0 0.0
        %2874 = vmatpush2.msra.mxu0 0.0
        %2875 = vmatprep.subr.mxu0 0.0
        %2876 = vmatpush2.msra.mxu0 0.0
        %2877 = vmatprep.subr.mxu0 0.0
        %2878 = vmatpush2.msra.mxu0 0.0
        %2879 = vmatprep.subr.mxu0 0.0
        %2880 = vmatpush2.msra.mxu0 0.0
        %2881 = vmatprep.subr.mxu0 0.0
        %2882 = vmatpush2.msra.mxu0 0.0
        %2883 = vmatprep.subr.mxu0 0.0
        %2884 = vmatpush2.msra.mxu0 0.0
        %2885 = vmatprep.subr.mxu0 0.0
        %2886 = vmatpush2.msra.mxu0 0.0
        %2887 = vmatprep.mubr.f32.mxu0 0.0
        %2888 = vmatmul.mubr.f32.gmra.mxu0 %v2821
        %v2889 = vpop.f32.mrf.mxu0
        %v2890 = vadd.f32 %v2818, %v2889
        %v2891 = vpop.f32.mrf.mxu0
        %2892 = vdwg.mxu0
        %vm2893 = vcmask 31744
        %2894 = vst.msk [vmem:[%s675] sm:$0xff] %vm2893, %v2890
        %p2895 = scmp.lt.s32.totalorder %s35, 1
        %s2896 = scalar_select %p2895, %s35, 1
        %s2897 = smul.addr %s2896, 8
        %s2898 = scalar_lea.vmem %s19, %s2897
        // Predicated region
        $region117: #{tpu_custom_call.1} parent=95 // pred_check
          %p2899 = pneg %p457
        $region118: #{tpu_custom_call.1} parent=95 // pred_check_branch
          %2901 = sbr.rel (%p2899) target = $region120
        $region119: #{tpu_custom_call.1} parent=95 // pred_region
          _
        $region120: #{tpu_custom_call.1} parent=95 // pred_fallthru
          _
      $region96: #{tpu_custom_call.1} parent=5 // pred_fallthru
        _
      %p2902 = scmp.le.s32.totalorder 2, %s30
      // Predicated region
      $region121: #{tpu_custom_call.1} parent=5 // pred_check
        %p2903 = pneg %p2902
      $region122: #{tpu_custom_call.1} parent=5 // pred_check_branch
        %2905 = sbr.rel (%p2903) target = $region124
      $region123: #{tpu_custom_call.1} parent=5 // pred_region
        %s2906 = ssub.s32 %s30, 2
        // Predicated region
        $region125: #{tpu_custom_call.1} parent=123 // pred_check
          %p2907 = pneg %p463
        $region126: #{tpu_custom_call.1} parent=123 // pred_check_branch
          %2909 = sbr.rel (%p2907) target = $region128
        $region127: #{tpu_custom_call.1} parent=123 // pred_region
          %p2910 = scmp.lt.s32.totalorder %s36, 1
          %s2911 = scalar_select %p2910, %s36, 1
          %s2912 = smul.addr %s2911, 8
          %s2913 = scalar_lea.vmem %s19, %s2912
        $region128: #{tpu_custom_call.1} parent=123 // pred_fallthru
          _
      $region124: #{tpu_custom_call.1} parent=5 // pred_fallthru
        _
    $region6: #{tpu_custom_call.1} parent=1 // loop_footer
      %s34 = sadd.s32 1, %s30
    $region7: #{tpu_custom_call.1} parent=1 // loop_footer_branch
      %29 = sbr.rel target = $region3
    $region8: #{tpu_custom_call.1} parent=1 // loop_exit
      _
    %2914 = vsyncpa [#allocation3], 1
    %s2915 = scalar_lea.sflag [#allocation3], 1
    %2916 = vsyncpa %s2915, 1
    %2917 = vsyncpa [#allocation5], 1
    %2918 = vsyncpa [#allocation8], 1

</llo_original>
